<compile_context>
chip_gen: v7x
topology: tpu7x:2x2x1
jax: 0.10.0
libtpu: 0.0.40
codegen_flags: <defaults>
</compile_context>

<pallas_src>
import functools

import jax
import jax.numpy as jnp
from jax.experimental import pallas as pl
from jax.experimental.pallas import tpu as pltpu

HALO = 128                 # halo block width (lanes); covers any tap offset K-1 <= 127
ACT_DTYPE = jnp.bfloat16   # MXU-native operand dtype for weights & activations
ACT_BYTES = 2


def _round_up(x, m):
    return (x + m - 1) // m * m


# ---------------------------------------------------------------------------
# Runtime capability probes (cached, run eagerly once)
# ---------------------------------------------------------------------------
@functools.lru_cache(maxsize=None)
def _vmem_plan():
    """(tile-planning budget, explicit scoped-VMEM limit) for this TPU generation."""
    try:
        info = pltpu.get_tpu_info()
        total = int(getattr(info, "vmem_capacity_bytes", 0)) or 64 * 2 ** 20
    except Exception:
        total = 64 * 2 ** 20                      # conservative (v7x per-TC VMEM)
    # Leave headroom for Mosaic internal scratch / surrounding XLA ops:
    #   v5e/v6e (128 MiB) -> ~90 MiB limit, v7x (64 MiB/TC) -> ~45 MiB limit.
    limit = max(32 * 2 ** 20, min(int(total * 0.70), 100 * 2 ** 20))
    budget = limit - 6 * 2 ** 20
    return budget, limit


def _probe_copy_kernel(x_ref, o_ref):
    o_ref[...] = x_ref[...]


@functools.lru_cache(maxsize=None)
def _single_buffer_ok():
    """True if pl.Buffered(1) (single-buffered BlockSpec) works on this runtime."""
    try:
        spec = pl.BlockSpec((8, 128), lambda i: (0, 0),
                            pipeline_mode=pl.Buffered(1))
        y = pl.pallas_call(
            _probe_copy_kernel,
            out_shape=jax.ShapeDtypeStruct((8, 128), jnp.float32),
            grid=(1,),
            in_specs=[spec],
            out_specs=pl.BlockSpec((8, 128), lambda i: (0, 0)),
        )(jnp.zeros((8, 128), jnp.float32))
        jax.block_until_ready(y)
        return True
    except Exception:
        return False


def _weight_spec(block_shape, index_map):
    """Weight/bias specs: the block index only changes on the slowest grid axis,
    so double-buffering buys nothing -- single-buffer when supported."""
    if _single_buffer_ok():
        return pl.BlockSpec(block_shape, index_map, pipeline_mode=pl.Buffered(1))
    return pl.BlockSpec(block_shape, index_map)


# ---------------------------------------------------------------------------
# Pallas kernels
# ---------------------------------------------------------------------------
def _conv_tap_kernel(w_ref, b_ref, xm_ref, xh_ref, o_ref, x_scr, *, K,
                     negative_slope):
    """One (channel_block, batch, time_tile) grid point of a stride-1 conv.

    w_ref : (K, CoB, CiB)   packed bf16 (block-diagonal for grouped) weights
    b_ref : (CoB, 1)        f32 bias
    xm_ref: (CiB, TN)       main activation tile (time tile t), bf16
    xh_ref: (CiB, HALO)     halo: first 128 lanes of time tile t+1, bf16
    o_ref : (CoB, TN)       bf16 output tile
    x_scr : (CiB, TN+HALO)  VMEM staging scratch
    """
    TN = o_ref.shape[-1]
    # Stage main tile + halo once into a contiguous VMEM scratch (both stores are
    # 128-lane aligned); the tap loop reads shifted *ref* views of the scratch,
    # so no concatenated value copy / per-tap value-slice materialization.
    x_scr[:, :TN] = xm_ref[...]
    x_scr[:, TN:] = xh_ref[...]
    acc = jnp.dot(w_ref[0], x_scr[:, :TN], preferred_element_type=jnp.float32)
    for k in range(1, K):  # static unroll over taps
        acc = acc + jnp.dot(w_ref[k], x_scr[:, k:k + TN],
                            preferred_element_type=jnp.float32)
    acc = acc + b_ref[...]
    if negative_slope is not None:
        acc = jnp.where(acc >= 0, acc, negative_slope * acc)
    o_ref[...] = acc.astype(o_ref.dtype)


def _pool_kernel(xe_m, xo_m, xe_h, xo_h, o_ref, *, L):
    """AvgPool1d(4, stride=2, padding=1, count_include_pad=False), lane-tiled.

    xe/xo are the even/odd phases of the zero-padded signal; output element j is
    (xe[j] + xo[j] + xe[j+1] + xo[j+1]) / valid_count(j).
    """
    TNP = o_ref.shape[-1]
    t = pl.program_id(0)
    ev = jnp.concatenate([xe_m[...], xe_h[...]], axis=-1)  # (BC, TNP + HALO)
    ov = jnp.concatenate([xo_m[...], xo_h[...]], axis=-1)
    s = ev[:, :TNP] + ov[:, :TNP] + ev[:, 1:TNP + 1] + ov[:, 1:TNP + 1]
    j = t * TNP + jax.lax.broadcasted_iota(jnp.int32, s.shape, 1)
    lo = jnp.maximum(2 * j, 1)
    hi = jnp.minimum(2 * j + 4, L + 1)
    cnt = jnp.maximum(hi - lo, 1).astype(jnp.float32)
    o_ref[...] = s / cnt


# ---------------------------------------------------------------------------
# Tile-size selection (accurate VMEM model, per-generation budget)
# ---------------------------------------------------------------------------
def _conv_vmem_bytes(CiB, CoB, Kp, TN, w_bufs):
    """Conservative per-grid-step VMEM footprint model (bytes)."""
    fixed = (w_bufs * Kp * CoB * CiB * ACT_BYTES   # bf16 weight buffer(s)
             + w_bufs * CoB * 128 * 4              # f32 bias tile (lane padded)
             + 2 * CiB * HALO * ACT_BYTES          # double-buffered halo blocks
             + CiB * HALO * ACT_BYTES)             # halo part of staging scratch
    per_lane = (2 * CiB * ACT_BYTES                # double-buffered main input tile
                + CiB * ACT_BYTES                  # staging scratch (main part)
                + 2 * CoB * ACT_BYTES              # double-buffered output tile
                + CoB * 4)                         # f32 accumulator staging / spill
    return fixed + per_lane * TN


def _pick_tn(CiB, CoB, Kp, L_out, w_bufs, budget):
    cap = min(8192, _round_up(max(L_out, 1), 128))
    tn = 128
    while tn * 2 <= cap and _conv_vmem_bytes(CiB, CoB, Kp, tn * 2, w_bufs) <= budget:
        tn *= 2
    return tn


# ---------------------------------------------------------------------------
# Conv1d wrapper: stride-phase fold + one pad, then the tiled Pallas call
# ---------------------------------------------------------------------------
def conv1d_pallas(x, lp, L_true):
    """PyTorch-semantics Conv1d (NCW) + optional LeakyReLU.

    Returns (out, L_out) where out is bf16 [B, NB*CoB, T*TN]; only the first
    lp['cout'] channels and the first L_out columns are meaningful.
    """
    B = x.shape[0]
    cin, cout, K = lp["cin"], lp["cout"], lp["k"]
    stride, pad, pm = lp["stride"], lp["pad"], lp["pad_mode"]
    Kp, NB, CoB, CiB = lp["Kp"], lp["NB"], lp["CoB"], lp["CiB"]
    assert Kp <= HALO

    x = x[:, :cin, :L_true].astype(ACT_DTYPE)
    Lp = L_true + 2 * pad
    L_out = (Lp - K) // stride + 1
    assert L_out >= 1

    budget, vmem_limit = _vmem_plan()
    w_bufs = 1 if _single_buffer_ok() else 2
    TN = _pick_tn(CiB, CoB, Kp, L_out, w_bufs, budget)
    assert TN % HALO == 0
    T = pl.cdiv(L_out, TN)
    Lpad = T * TN + HALO  # main tiles + exactly one 128-lane halo block

    if pm == "reflect" and pad > 0:
        x = jnp.pad(x, ((0, 0), (0, 0), (pad, pad)), mode="reflect")
        left, cur = 0, Lp
    else:
        left, cur = pad, L_true

    if stride == 1:
        assert Lpad - cur - left >= 0
        xw = jnp.pad(x, ((0, 0), (0, 0), (left, Lpad - cur - left)))
    else:
        s = stride
        Lps = _round_up(Lp, s)
        xw = jnp.pad(x, ((0, 0), (0, 0), (left, Lps - cur - left)))
        # fold the s phases into the channel axis -> stride-1 conv with Kp taps
        xw = (xw.reshape(B, cin, Lps // s, s)
                .transpose(0, 1, 3, 2)
                .reshape(B, cin * s, Lps // s))
        assert Lpad >= Lps // s
        xw = jnp.pad(xw, ((0, 0), (0, 0), (0, Lpad - Lps // s)))

    ns = 0.2 if lp["lrelu"] else None
    if lp["grouped"]:
        x_main = lambda nb, b, t: (b, nb, t)
        x_halo = lambda nb, b, t: (b, nb, (t + 1) * (TN // HALO))
    else:
        x_main = lambda nb, b, t: (b, 0, t)
        x_halo = lambda nb, b, t: (b, 0, (t + 1) * (TN // HALO))

    out = pl.pallas_call(
        functools.partial(_conv_tap_kernel, K=Kp, negative_slope=ns),
        out_shape=jax.ShapeDtypeStruct((B, NB * CoB, T * TN), ACT_DTYPE),
        grid=(NB, B, T),
        in_specs=[
            _weight_spec((None, Kp, CoB, CiB), lambda nb, b, t: (nb, 0, 0, 0)),
            _weight_spec((None, CoB, 1), lambda nb, b, t: (nb, 0, 0)),
            pl.BlockSpec((None, CiB, TN), x_main),
            pl.BlockSpec((None, CiB, HALO), x_halo),
        ],
        out_specs=pl.BlockSpec((None, CoB, TN), lambda nb, b, t: (b, nb, t)),
        scratch_shapes=[pltpu.VMEM((CiB, TN + HALO), ACT_DTYPE)],
        compiler_params=pltpu.CompilerParams(
            # TODO(synk): on v7x verify megacore actually splits the T axis when
            # NB == 1 and B < 2 (reorder grid / CORE_PARALLEL if one core idles).
            dimension_semantics=("parallel", "parallel", "parallel"),
            vmem_limit_bytes=vmem_limit),
        cost_estimate=pl.CostEstimate(
            flops=2 * B * NB * CoB * CiB * Kp * T * TN,
            transcendentals=0,
            bytes_accessed=ACT_BYTES * (xw.size + B * NB * CoB * T * TN
                                        + lp["w_packed"].size)
                           + 4 * lp["b_packed"].size),
    )(lp["w_packed"], lp["b_packed"], xw, xw)
    return out, L_out


def avgpool1d_4_2_1(x, L):
    """nn.AvgPool1d(4, stride=2, padding=1, count_include_pad=False), NCW, f32."""
    B, C, _ = x.shape
    x = x[:, :, :L]
    L_pool = (L - 2) // 2 + 1
    TNP = min(2048, _round_up(max(L_pool, 1), 128))
    T = pl.cdiv(L_pool, TNP)
    Lh = (T + 1) * TNP
    xp = jnp.pad(x, ((0, 0), (0, 0), (1, 2 * Lh - L - 1)))   # zero pad both sides
    xe = xp[:, :, 0::2].reshape(B * C, Lh)                    # even phase
    xo = xp[:, :, 1::2].reshape(B * C, Lh)                    # odd phase
    BC = B * C

    out = pl.pallas_call(
        functools.partial(_pool_kernel, L=L),
        out_shape=jax.ShapeDtypeStruct((BC, T * TNP), jnp.float32),
        grid=(T,),
        in_specs=[
            pl.BlockSpec((BC, TNP), lambda t: (0, t)),
            pl.BlockSpec((BC, TNP), lambda t: (0, t)),
            pl.BlockSpec((BC, HALO), lambda t: (0, (t + 1) * (TNP // HALO))),
            pl.BlockSpec((BC, HALO), lambda t: (0, (t + 1) * (TNP // HALO))),
        ],
        out_specs=pl.BlockSpec((BC, TNP), lambda t: (0, t)),
        compiler_params=pltpu.CompilerParams(dimension_semantics=("parallel",)),
    )(xe, xo, xe, xo)
    return out.reshape(B, C, T * TNP)[:, :, :L_pool], L_pool


# ---------------------------------------------------------------------------
# Parameter construction & packing (mirrors NLayerDiscriminator.__init__)
# ---------------------------------------------------------------------------
def nlayer_disc_specs(nsources, ndf, n_layers, downsampling_factor):
    specs = [dict(cin=nsources, cout=ndf, k=15, stride=1, pad=7, groups=1,
                  pad_mode="reflect", lrelu=True)]
    nf = ndf
    nf_prev = ndf
    stride = downsampling_factor
    for _ in range(1, n_layers + 1):
        nf_prev = nf
        nf = min(nf * stride, 1024)
        specs.append(dict(cin=nf_prev, cout=nf, k=stride * 10 + 1, stride=stride,
                          pad=stride * 5, groups=nf_prev // 4,
                          pad_mode="zeros", lrelu=True))
    nf = min(nf * 2, 1024)
    # in_channels = nf_prev, exactly as written in the reference module.
    specs.append(dict(cin=nf_prev, cout=nf, k=5, stride=1, pad=2, groups=1,
                      pad_mode="zeros", lrelu=True))
    specs.append(dict(cin=nf, cout=1, k=3, stride=1, pad=1, groups=1,
                      pad_mode="zeros", lrelu=False))
    return specs


def _pack_conv_params(w, b, spec):
    """Pack a Conv1d weight once at init: stride-phase fold + group/block pack.

    Packed weights are stored in bf16 (MXU-native); bias stays f32 (added to the
    f32 accumulator in the kernel epilogue).
    """
    cin, cout, k = spec["cin"], spec["cout"], spec["k"]
    stride, groups = spec["stride"], spec["groups"]
    cin_g = cin // groups
    s = stride
    if s > 1:
        Kp = -(-k // s)
        w_eff = jnp.pad(w, ((0, 0), (0, 0), (0, Kp * s - k)))
        w_eff = (w_eff.reshape(cout, cin_g, Kp, s)
                      .transpose(0, 1, 3, 2)
                      .reshape(cout, cin_g * s, Kp))
        cin_g_eff = cin_g * s
    else:
        Kp, w_eff, cin_g_eff = k, w, cin_g
    cog = cout // groups

    if groups == 1:
        if cout > 256 and cout % 256 == 0:
            NB, CoB = cout // 256, 256        # row-split very wide dense layers
        else:
            NB, CoB = 1, cout
        CiB = cin_g_eff
        Wp = w_eff.reshape(NB, CoB, CiB, Kp).transpose(0, 3, 1, 2)
        bp = b.reshape(NB, CoB, 1)
    else:
        # pack SG consecutive groups into one block-diagonal dense block so the
        # MXU sees >= 16 (up to 128) output rows instead of 4-row matmuls.
        # TODO(synk): SG is matched to a 128-wide contraction on purpose; growing
        # it for the 256-wide MXU on v6e/v7x only dilutes useful-flop density.
        SG = max(1, min(groups, 128 // max(cin_g_eff, cog)))
        while groups % SG:
            SG -= 1
        if (SG * cog) % 16 or (SG * cin_g_eff) % 16:
            SG = groups                        # bf16 sublane tiling: use full extent
        NB = groups // SG
        CoB = SG * cog
        CiB = SG * cin_g_eff
        Wt = (w_eff.reshape(NB, SG, cog, cin_g_eff, Kp)
                   .transpose(0, 4, 1, 2, 3))          # [NB, Kp, SG, cog, cin_g]
        Wp = jnp.zeros((NB, Kp, CoB, CiB), jnp.float32)
        for j in range(SG):                             # block-diagonal densify
            Wp = Wp.at[:, :, j * cog:(j + 1) * cog,
                       j * cin_g_eff:(j + 1) * cin_g_eff].set(Wt[:, :, j])
        bp = b.reshape(NB, CoB, 1)

    CoBp = _round_up(CoB, 16)          # bf16 packs 2 rows / sublane -> pad to 16
    if CoBp != CoB:
        # padding only happens for single-block layers, so the next layer's
        # x[:, :cin] slice stays aligned with real channels.
        assert NB == 1
        Wp = jnp.pad(Wp, ((0, 0), (0, 0), (0, CoBp - CoB), (0, 0)))
        bp = jnp.pad(bp, ((0, 0), (0, CoBp - CoB), (0, 0)))
    return dict(w_packed=Wp.astype(ACT_DTYPE), b_packed=bp.astype(jnp.float32),
                Kp=Kp, NB=NB, CoB=CoBp, CiB=CiB, grouped=groups > 1)


def init_audio_discriminator(key, naudios, ndiscriminators, nfilters, n_layers,
                             downsampling_factor):
    # warm the runtime probes eagerly (outside any jit trace)
    _single_buffer_ok()
    _vmem_plan()
    # weight_norm(w) == w at init, so the effective conv weight is the N(0, 0.02)
    # tensor from weights_init.
    discs = []
    for _ in range(ndiscriminators):
        layers = []
        for s in nlayer_disc_specs(naudios, nfilters, n_layers, downsampling_factor):
            key, kw, kb = jax.random.split(key, 3)
            w = 0.02 * jax.random.normal(
                kw, (s["cout"], s["cin"] // s["groups"], s["k"]), jnp.float32)
            b = 0.02 * jax.random.normal(kb, (s["cout"],), jnp.float32)
            layers.append({**s, "weight": w, "bias": b,
                           **_pack_conv_params(w, b, s)})
        discs.append(layers)
    return discs


# ---------------------------------------------------------------------------
# Forward passes
# ---------------------------------------------------------------------------
def nlayer_disc_forward(layers, x, L):
    for lp in layers:
        x, L = conv1d_pallas(x, lp, L)
    # .squeeze(1); drop padded channels/lanes, return f32 like the torch module.
    return x[:, 0, :L].astype(jnp.float32)


def audio_discriminator_forward(params, audio):
    results = []
    x, L = audio, audio.shape[-1]
    for disc_layers in params:
        results.append(nlayer_disc_forward(disc_layers, x, L))
        x, L = avgpool1d_4_2_1(x, L)   # applied after every disc, like the reference
    return results


# ---------------------------------------------------------------------------
# Pure-JAX reference (lax.conv, f32) for numerical sanity checks
# ---------------------------------------------------------------------------
def _conv1d_ref(x, lp):
    pad = lp["pad"]
    if lp["pad_mode"] == "reflect":
        x = jnp.pad(x, ((0, 0), (0, 0), (pad, pad)), mode="reflect")
        pad = 0
    out = jax.lax.conv_general_dilated(
        x, lp["weight"], window_strides=(lp["stride"],), padding=[(pad, pad)],
        dimension_numbers=("NCH", "OIH", "NCH"),
        feature_group_count=lp["groups"],
        precision=jax.lax.Precision.HIGHEST)
    out = out + lp["bias"][None, :, None]
    if lp["lrelu"]:
        out = jnp.where(out >= 0, out, 0.2 * out)
    return out


def _avgpool_ref(x):
    B, C, L = x.shape
    xp = jnp.pad(x, ((0, 0), (0, 0), (1, 1)))
    op = jnp.pad(jnp.ones((1, 1, L), x.dtype), ((0, 0), (0, 0), (1, 1)))
    L_out = (L + 2 - 4) // 2 + 1
    s = jnp.stack([xp[..., 2 * t:2 * t + 4].sum(-1) for t in range(L_out)], axis=-1)
    c = jnp.stack([op[..., 2 * t:2 * t + 4].sum(-1) for t in range(L_out)], axis=-1)
    return s / c


def audio_discriminator_reference(params, audio):
    results = []
    for disc_layers in params:
        x = audio
        for lp in disc_layers:
            x = _conv1d_ref(x, lp)
        results.append(x[:, 0, :])
        audio = _avgpool_ref(audio)
    return results


# ---------------------------------------------------------------------------
if __name__ == "__main__":
    # Hyperparameters chosen small AND such that the reference PyTorch module
    # is well-formed (requires nf_prev == nf after its layer loop, which holds
    # for downsampling_factor == 1).
    naudios, ndiscriminators, nfilters, n_layers, downsampling_factor = 2, 2, 16, 2, 1
    B, L = 2, 64
    # bf16 operands with f32 accumulation vs the f32 HIGHEST reference.
    ATOL, RTOL = 2e-3, 2e-2

    key = jax.random.PRNGKey(0)
    k_audio, k_params, k_extra = jax.random.split(key, 3)
    audio = jax.random.normal(k_audio, (B, naudios, L), jnp.float32)
    params = init_audio_discriminator(
        k_params, naudios, ndiscriminators, nfilters, n_layers, downsampling_factor)

    fwd = jax.jit(functools.partial(audio_discriminator_forward, params))
    results = jax.block_until_ready(fwd(audio))

    refs = audio_discriminator_reference(params, audio)
    assert len(results) == ndiscriminators
    for r, rr in zip(results, refs):
        assert r.shape == rr.shape, (r.shape, rr.shape)
        assert jnp.allclose(r, rr, atol=ATOL, rtol=RTOL), \
            float(jnp.max(jnp.abs(r - rr)))

    # --- extra check 1: strided grouped conv (phase-decomposition path) -------
    spec = dict(cin=8, cout=16, k=41, stride=4, pad=20, groups=2,
                pad_mode="zeros", lrelu=True)
    kw2, kb2, kx2 = jax.random.split(k_extra, 3)
    w2 = 0.02 * jax.random.normal(
        kw2, (spec["cout"], spec["cin"] // spec["groups"], spec["k"]), jnp.float32)
    b2 = 0.02 * jax.random.normal(kb2, (spec["cout"],), jnp.float32)
    lp2 = {**spec, "weight": w2, "bias": b2, **_pack_conv_params(w2, b2, spec)}
    x2 = jax.random.normal(kx2, (2, spec["cin"], 70), jnp.float32)
    y2, lo2 = conv1d_pallas(x2, lp2, 70)
    y2 = jax.block_until_ready(y2).astype(jnp.float32)[:, :spec["cout"], :lo2]
    yr2 = _conv1d_ref(x2, lp2)
    assert y2.shape == yr2.shape, (y2.shape, yr2.shape)
    assert jnp.allclose(y2, yr2, atol=ATOL, rtol=RTOL), \
        float(jnp.max(jnp.abs(y2 - yr2)))

    # --- extra check 2: many-group layer (multi channel-block path) -----------
    spec3 = dict(cin=256, cout=256, k=5, stride=1, pad=2, groups=64,
                 pad_mode="zeros", lrelu=True)
    kw3, kb3, kx3 = jax.random.split(kx2, 3)
    w3 = 0.02 * jax.random.normal(
        kw3, (spec3["cout"], spec3["cin"] // spec3["groups"], spec3["k"]), jnp.float32)
    b3 = 0.02 * jax.random.normal(kb3, (spec3["cout"],), jnp.float32)
    lp3 = {**spec3, "weight": w3, "bias": b3, **_pack_conv_params(w3, b3, spec3)}
    x3 = jax.random.normal(kx3, (2, spec3["cin"], 40), jnp.float32)
    y3, lo3 = conv1d_pallas(x3, lp3, 40)
    y3 = jax.block_until_ready(y3).astype(jnp.float32)[:, :spec3["cout"], :lo3]
    yr3 = _conv1d_ref(x3, lp3)
    assert y3.shape == yr3.shape, (y3.shape, yr3.shape)
    assert jnp.allclose(y3, yr3, atol=ATOL, rtol=RTOL), \
        float(jnp.max(jnp.abs(y3 - yr3)))

    print("KERNEL_OK")
</pallas_src>

<mosaic_0001>
module attributes {stable_mosaic.version = 11 : i64} {
  func.func @_probe_copy_kernel(%arg0: i32, %arg1: memref<8x128xf32, #tpu.memory_space<vmem>>, %arg2: memref<8x128xf32, #tpu.memory_space<vmem>>) attributes {dimension_semantics = [#tpu.dimension_semantics<arbitrary>], iteration_bounds = array<i64: 1>, scalar_prefetch = 0 : i64, scratch_operands = 0 : i64, tpu.core_type = #tpu.core_type<tc>, window_params = [{pipeline_mode = #tpu.pipeline_mode<synchronous>, transform_indices = @transform_0, window_bounds = array<i64: 8, 128>}, {pipeline_mode = #tpu.pipeline_mode<synchronous>, transform_indices = @transform_1, window_bounds = array<i64: 8, 128>}]} {
    %c0 = arith.constant 0 : index
    %c0_0 = arith.constant 0 : index
    %0 = vector.load %arg1[%c0, %c0_0] : memref<8x128xf32, #tpu.memory_space<vmem>>, vector<8x128xf32>
    %c0_1 = arith.constant 0 : index
    %c0_2 = arith.constant 0 : index
    %1 = vector.load %arg2[%c0_1, %c0_2] : memref<8x128xf32, #tpu.memory_space<vmem>>, vector<8x128xf32>
    tpu.vector_store %arg2[%c0_1, %c0_2], %0 {strides = array<i32>} : memref<8x128xf32, #tpu.memory_space<vmem>>, vector<8x128xf32>,
    return
  }
  func.func @transform_0(%arg0: i32) -> (i32, i32) {
    %c0_i32 = arith.constant 0 : i32
    %c0_i32_0 = arith.constant 0 : i32
    %c0_i32_1 = arith.constant 0 : i32
    return %c0_i32, %c0_i32_0 : i32, i32
  }
  func.func @transform_1(%arg0: i32) -> (i32, i32) {
    %c0_i32 = arith.constant 0 : i32
    %c0_i32_0 = arith.constant 0 : i32
    %c0_i32_1 = arith.constant 0 : i32
    return %c0_i32, %c0_i32_0 : i32, i32
  }
}

module attributes {stable_mosaic.version = 11 : i64} {
  func.func @_pool_kernel(%arg0: i32, %arg1: memref<4x128xf32, #tpu.memory_space<vmem>>, %arg2: memref<4x128xf32, #tpu.memory_space<vmem>>, %arg3: memref<4x128xf32, #tpu.memory_space<vmem>>, %arg4: memref<4x128xf32, #tpu.memory_space<vmem>>, %arg5: memref<4x128xf32, #tpu.memory_space<vmem>>) attributes {dimension_semantics = [#tpu.dimension_semantics<parallel>], iteration_bounds = array<i64: 1>, scalar_prefetch = 0 : i64, scratch_operands = 0 : i64, tpu.core_type = #tpu.core_type<tc>, window_params = [{transform_indices = @transform_0, window_bounds = array<i64: 4, 128>}, {transform_indices = @transform_1, window_bounds = array<i64: 4, 128>}, {transform_indices = @transform_2, window_bounds = array<i64: 4, 128>}, {transform_indices = @transform_3, window_bounds = array<i64: 4, 128>}, {transform_indices = @transform_4, window_bounds = array<i64: 4, 128>}]} {
    %c0 = arith.constant 0 : index
    %c0_0 = arith.constant 0 : index
    %0 = vector.load %arg1[%c0, %c0_0] : memref<4x128xf32, #tpu.memory_space<vmem>>, vector<4x128xf32>
    %c0_1 = arith.constant 0 : index
    %c0_2 = arith.constant 0 : index
    %1 = vector.load %arg3[%c0_1, %c0_2] : memref<4x128xf32, #tpu.memory_space<vmem>>, vector<4x128xf32>
    %2 = tpu.concatenate %0, %1 in 1 : vector<4x128xf32>, vector<4x128xf32> -> vector<4x256xf32>
    %c0_3 = arith.constant 0 : index
    %c0_4 = arith.constant 0 : index
    %3 = vector.load %arg2[%c0_3, %c0_4] : memref<4x128xf32, #tpu.memory_space<vmem>>, vector<4x128xf32>
    %c0_5 = arith.constant 0 : index
    %c0_6 = arith.constant 0 : index
    %4 = vector.load %arg4[%c0_5, %c0_6] : memref<4x128xf32, #tpu.memory_space<vmem>>, vector<4x128xf32>
    %5 = tpu.concatenate %3, %4 in 1 : vector<4x128xf32>, vector<4x128xf32> -> vector<4x256xf32>
    %6 = vector.extract_strided_slice %2 {offsets = [0, 0], sizes = [4, 128], strides = [1, 1]} : vector<4x256xf32> to vector<4x128xf32>
    %7 = vector.extract_strided_slice %5 {offsets = [0, 0], sizes = [4, 128], strides = [1, 1]} : vector<4x256xf32> to vector<4x128xf32>
    %8 = arith.addf %6, %7 : vector<4x128xf32>
    %9 = vector.extract_strided_slice %2 {offsets = [0, 1], sizes = [4, 128], strides = [1, 1]} : vector<4x256xf32> to vector<4x128xf32>
    %10 = arith.addf %8, %9 : vector<4x128xf32>
    %11 = vector.extract_strided_slice %5 {offsets = [0, 1], sizes = [4, 128], strides = [1, 1]} : vector<4x256xf32> to vector<4x128xf32>
    %12 = arith.addf %10, %11 : vector<4x128xf32>
    %c128_i32 = arith.constant 128 : i32
    %13 = arith.muli %arg0, %c128_i32 : i32
    %14 = tpu.iota {dimensions = array<i32: 1>} : vector<4x128xi32>
    %15 = vector.broadcast %13 : i32 to vector<4x128xi32>
    %16 = arith.addi %15, %14 : vector<4x128xi32>
    %c2_i32 = arith.constant 2 : i32
    %17 = vector.broadcast %c2_i32 : i32 to vector<4x128xi32>
    %18 = arith.muli %17, %16 : vector<4x128xi32>
    %c1_i32 = arith.constant 1 : i32
    %19 = vector.broadcast %c1_i32 : i32 to vector<4x128xi32>
    %20 = arith.maxsi %18, %19 : vector<4x128xi32>
    %c2_i32_7 = arith.constant 2 : i32
    %21 = vector.broadcast %c2_i32_7 : i32 to vector<4x128xi32>
    %22 = arith.muli %21, %16 : vector<4x128xi32>
    %c4_i32 = arith.constant 4 : i32
    %23 = vector.broadcast %c4_i32 : i32 to vector<4x128xi32>
    %24 = arith.addi %22, %23 : vector<4x128xi32>
    %c65_i32 = arith.constant 65 : i32
    %25 = vector.broadcast %c65_i32 : i32 to vector<4x128xi32>
    %26 = arith.minsi %24, %25 : vector<4x128xi32>
    %27 = arith.subi %26, %20 : vector<4x128xi32>
    %c1_i32_8 = arith.constant 1 : i32
    %28 = vector.broadcast %c1_i32_8 : i32 to vector<4x128xi32>
    %29 = arith.maxsi %27, %28 : vector<4x128xi32>
    %30 = arith.sitofp %29 : vector<4x128xi32> to vector<4x128xf32>
    %31 = arith.divf %12, %30 : vector<4x128xf32>
    %c0_9 = arith.constant 0 : index
    %c0_10 = arith.constant 0 : index
    %32 = vector.load %arg5[%c0_9, %c0_10] : memref<4x128xf32, #tpu.memory_space<vmem>>, vector<4x128xf32>
    tpu.vector_store %arg5[%c0_9, %c0_10], %31 {strides = array<i32>} : memref<4x128xf32, #tpu.memory_space<vmem>>, vector<4x128xf32>,
    return
  }
  func.func @transform_0(%arg0: i32) -> (i32, i32) {
    %c0_i32 = arith.constant 0 : i32
    %c0_i32_0 = arith.constant 0 : i32
    return %c0_i32, %arg0 : i32, i32
  }
  func.func @transform_1(%arg0: i32) -> (i32, i32) {
    %c0_i32 = arith.constant 0 : i32
    %c0_i32_0 = arith.constant 0 : i32
    return %c0_i32, %arg0 : i32, i32
  }
  func.func @transform_2(%arg0: i32) -> (i32, i32) {
    %c1_i32 = arith.constant 1 : i32
    %0 = arith.addi %arg0, %c1_i32 : i32
    %c1_i32_0 = arith.constant 1 : i32
    %1 = arith.muli %0, %c1_i32_0 : i32
    %c0_i32 = arith.constant 0 : i32
    %c0_i32_1 = arith.constant 0 : i32
    return %c0_i32, %1 : i32, i32
  }
  func.func @transform_3(%arg0: i32) -> (i32, i32) {
    %c1_i32 = arith.constant 1 : i32
    %0 = arith.addi %arg0, %c1_i32 : i32
    %c1_i32_0 = arith.constant 1 : i32
    %1 = arith.muli %0, %c1_i32_0 : i32
    %c0_i32 = arith.constant 0 : i32
    %c0_i32_1 = arith.constant 0 : i32
    return %c0_i32, %1 : i32, i32
  }
  func.func @transform_4(%arg0: i32) -> (i32, i32) {
    %c0_i32 = arith.constant 0 : i32
    %c0_i32_0 = arith.constant 0 : i32
    return %c0_i32, %arg0 : i32, i32
  }
}

module attributes {stable_mosaic.version = 11 : i64} {
  func.func @_conv_tap_kernel(%arg0: i32, %arg1: i32, %arg2: i32, %arg3: memref<1x15x16x2xbf16, #tpu.memory_space<vmem>>, %arg4: memref<1x16x1xf32, #tpu.memory_space<vmem>>, %arg5: memref<1x2x128xbf16, #tpu.memory_space<vmem>>, %arg6: memref<1x2x128xbf16, #tpu.memory_space<vmem>>, %arg7: memref<1x16x128xbf16, #tpu.memory_space<vmem>>, %arg8: memref<2x256xbf16, #tpu.memory_space<vmem>>) attributes {dimension_semantics = [#tpu.dimension_semantics<parallel>, #tpu.dimension_semantics<parallel>, #tpu.dimension_semantics<parallel>], iteration_bounds = array<i64: 1, 2, 1>, scalar_prefetch = 0 : i64, scratch_operands = 1 : i64, tpu.core_type = #tpu.core_type<tc>, window_params = [{transform_indices = @transform_0, window_bounds = array<i64: 1, 15, 16, 2>}, {transform_indices = @transform_1, window_bounds = array<i64: 1, 16, 1>}, {transform_indices = @transform_2, window_bounds = array<i64: 1, 2, 128>}, {transform_indices = @transform_3, window_bounds = array<i64: 1, 2, 128>}, {transform_indices = @transform_4, window_bounds = array<i64: 1, 16, 128>}]} {
    %c0 = arith.constant 0 : index
    %c0_0 = arith.constant 0 : index
    %c0_1 = arith.constant 0 : index
    %0 = vector.load %arg5[%c0, %c0_0, %c0_1] : memref<1x2x128xbf16, #tpu.memory_space<vmem>>, vector<1x2x128xbf16>
    %1 = vector.shape_cast %0 : vector<1x2x128xbf16> to vector<2x128xbf16>
    %c0_2 = arith.constant 0 : index
    %c0_3 = arith.constant 0 : index
    %2 = vector.load %arg8[%c0_2, %c0_3] : memref<2x256xbf16, #tpu.memory_space<vmem>>, vector<2x128xbf16>
    tpu.vector_store %arg8[%c0_2, %c0_3], %1 {strides = array<i32>} : memref<2x256xbf16, #tpu.memory_space<vmem>>, vector<2x128xbf16>,
    %c0_4 = arith.constant 0 : index
    %c0_5 = arith.constant 0 : index
    %c0_6 = arith.constant 0 : index
    %3 = vector.load %arg6[%c0_4, %c0_5, %c0_6] : memref<1x2x128xbf16, #tpu.memory_space<vmem>>, vector<1x2x128xbf16>
    %4 = vector.shape_cast %3 : vector<1x2x128xbf16> to vector<2x128xbf16>
    %c0_7 = arith.constant 0 : index
    %c128 = arith.constant 128 : index
    %5 = vector.load %arg8[%c0_7, %c128] : memref<2x256xbf16, #tpu.memory_space<vmem>>, vector<2x128xbf16>
    tpu.vector_store %arg8[%c0_7, %c128], %4 {strides = array<i32>} : memref<2x256xbf16, #tpu.memory_space<vmem>>, vector<2x128xbf16>,
    %c0_8 = arith.constant 0 : index
    %c0_9 = arith.constant 0 : index
    %c0_10 = arith.constant 0 : index
    %c0_11 = arith.constant 0 : index
    %6 = vector.load %arg3[%c0_8, %c0_9, %c0_10, %c0_11] : memref<1x15x16x2xbf16, #tpu.memory_space<vmem>>, vector<1x1x16x2xbf16>
    %7 = vector.shape_cast %6 : vector<1x1x16x2xbf16> to vector<16x2xbf16>
    %c0_12 = arith.constant 0 : index
    %c0_13 = arith.constant 0 : index
    %8 = vector.load %arg8[%c0_12, %c0_13] : memref<2x256xbf16, #tpu.memory_space<vmem>>, vector<2x128xbf16>
    %cst = arith.constant dense<0.000000e+00> : vector<16x128xf32>
    %9 = tpu.matmul %7, %8, %cst {dimension_numbers = #tpu.dot_dimension_numbers<[1], [0], [0], [1], [0, 0, 1, 1], [], []>} : vector<16x2xbf16>, vector<2x128xbf16>, vector<16x128xf32> -> vector<16x128xf32>
    %c0_14 = arith.constant 0 : index
    %c1 = arith.constant 1 : index
    %c0_15 = arith.constant 0 : index
    %c0_16 = arith.constant 0 : index
    %10 = vector.load %arg3[%c0_14, %c1, %c0_15, %c0_16] : memref<1x15x16x2xbf16, #tpu.memory_space<vmem>>, vector<1x1x16x2xbf16>
    %11 = vector.shape_cast %10 : vector<1x1x16x2xbf16> to vector<16x2xbf16>
    %c0_17 = arith.constant 0 : index
    %c1_18 = arith.constant 1 : index
    %12 = vector.load %arg8[%c0_17, %c1_18] : memref<2x256xbf16, #tpu.memory_space<vmem>>, vector<2x128xbf16>
    %cst_19 = arith.constant dense<0.000000e+00> : vector<16x128xf32>
    %13 = tpu.matmul %11, %12, %cst_19 {dimension_numbers = #tpu.dot_dimension_numbers<[1], [0], [0], [1], [0, 0, 1, 1], [], []>} : vector<16x2xbf16>, vector<2x128xbf16>, vector<16x128xf32> -> vector<16x128xf32>
    %14 = arith.addf %9, %13 : vector<16x128xf32>
    %c0_20 = arith.constant 0 : index
    %c2 = arith.constant 2 : index
    %c0_21 = arith.constant 0 : index
    %c0_22 = arith.constant 0 : index
    %15 = vector.load %arg3[%c0_20, %c2, %c0_21, %c0_22] : memref<1x15x16x2xbf16, #tpu.memory_space<vmem>>, vector<1x1x16x2xbf16>
    %16 = vector.shape_cast %15 : vector<1x1x16x2xbf16> to vector<16x2xbf16>
    %c0_23 = arith.constant 0 : index
    %c2_24 = arith.constant 2 : index
    %17 = vector.load %arg8[%c0_23, %c2_24] : memref<2x256xbf16, #tpu.memory_space<vmem>>, vector<2x128xbf16>
    %cst_25 = arith.constant dense<0.000000e+00> : vector<16x128xf32>
    %18 = tpu.matmul %16, %17, %cst_25 {dimension_numbers = #tpu.dot_dimension_numbers<[1], [0], [0], [1], [0, 0, 1, 1], [], []>} : vector<16x2xbf16>, vector<2x128xbf16>, vector<16x128xf32> -> vector<16x128xf32>
    %19 = arith.addf %14, %18 : vector<16x128xf32>
    %c0_26 = arith.constant 0 : index
    %c3 = arith.constant 3 : index
    %c0_27 = arith.constant 0 : index
    %c0_28 = arith.constant 0 : index
    %20 = vector.load %arg3[%c0_26, %c3, %c0_27, %c0_28] : memref<1x15x16x2xbf16, #tpu.memory_space<vmem>>, vector<1x1x16x2xbf16>
    %21 = vector.shape_cast %20 : vector<1x1x16x2xbf16> to vector<16x2xbf16>
    %c0_29 = arith.constant 0 : index
    %c3_30 = arith.constant 3 : index
    %22 = vector.load %arg8[%c0_29, %c3_30] : memref<2x256xbf16, #tpu.memory_space<vmem>>, vector<2x128xbf16>
    %cst_31 = arith.constant dense<0.000000e+00> : vector<16x128xf32>
    %23 = tpu.matmul %21, %22, %cst_31 {dimension_numbers = #tpu.dot_dimension_numbers<[1], [0], [0], [1], [0, 0, 1, 1], [], []>} : vector<16x2xbf16>, vector<2x128xbf16>, vector<16x128xf32> -> vector<16x128xf32>
    %24 = arith.addf %19, %23 : vector<16x128xf32>
    %c0_32 = arith.constant 0 : index
    %c4 = arith.constant 4 : index
    %c0_33 = arith.constant 0 : index
    %c0_34 = arith.constant 0 : index
    %25 = vector.load %arg3[%c0_32, %c4, %c0_33, %c0_34] : memref<1x15x16x2xbf16, #tpu.memory_space<vmem>>, vector<1x1x16x2xbf16>
    %26 = vector.shape_cast %25 : vector<1x1x16x2xbf16> to vector<16x2xbf16>
    %c0_35 = arith.constant 0 : index
    %c4_36 = arith.constant 4 : index
    %27 = vector.load %arg8[%c0_35, %c4_36] : memref<2x256xbf16, #tpu.memory_space<vmem>>, vector<2x128xbf16>
    %cst_37 = arith.constant dense<0.000000e+00> : vector<16x128xf32>
    %28 = tpu.matmul %26, %27, %cst_37 {dimension_numbers = #tpu.dot_dimension_numbers<[1], [0], [0], [1], [0, 0, 1, 1], [], []>} : vector<16x2xbf16>, vector<2x128xbf16>, vector<16x128xf32> -> vector<16x128xf32>
    %29 = arith.addf %24, %28 : vector<16x128xf32>
    %c0_38 = arith.constant 0 : index
    %c5 = arith.constant 5 : index
    %c0_39 = arith.constant 0 : index
    %c0_40 = arith.constant 0 : index
    %30 = vector.load %arg3[%c0_38, %c5, %c0_39, %c0_40] : memref<1x15x16x2xbf16, #tpu.memory_space<vmem>>, vector<1x1x16x2xbf16>
    %31 = vector.shape_cast %30 : vector<1x1x16x2xbf16> to vector<16x2xbf16>
    %c0_41 = arith.constant 0 : index
    %c5_42 = arith.constant 5 : index
    %32 = vector.load %arg8[%c0_41, %c5_42] : memref<2x256xbf16, #tpu.memory_space<vmem>>, vector<2x128xbf16>
    %cst_43 = arith.constant dense<0.000000e+00> : vector<16x128xf32>
    %33 = tpu.matmul %31, %32, %cst_43 {dimension_numbers = #tpu.dot_dimension_numbers<[1], [0], [0], [1], [0, 0, 1, 1], [], []>} : vector<16x2xbf16>, vector<2x128xbf16>, vector<16x128xf32> -> vector<16x128xf32>
    %34 = arith.addf %29, %33 : vector<16x128xf32>
    %c0_44 = arith.constant 0 : index
    %c6 = arith.constant 6 : index
    %c0_45 = arith.constant 0 : index
    %c0_46 = arith.constant 0 : index
    %35 = vector.load %arg3[%c0_44, %c6, %c0_45, %c0_46] : memref<1x15x16x2xbf16, #tpu.memory_space<vmem>>, vector<1x1x16x2xbf16>
    %36 = vector.shape_cast %35 : vector<1x1x16x2xbf16> to vector<16x2xbf16>
    %c0_47 = arith.constant 0 : index
    %c6_48 = arith.constant 6 : index
    %37 = vector.load %arg8[%c0_47, %c6_48] : memref<2x256xbf16, #tpu.memory_space<vmem>>, vector<2x128xbf16>
    %cst_49 = arith.constant dense<0.000000e+00> : vector<16x128xf32>
    %38 = tpu.matmul %36, %37, %cst_49 {dimension_numbers = #tpu.dot_dimension_numbers<[1], [0], [0], [1], [0, 0, 1, 1], [], []>} : vector<16x2xbf16>, vector<2x128xbf16>, vector<16x128xf32> -> vector<16x128xf32>
    %39 = arith.addf %34, %38 : vector<16x128xf32>
    %c0_50 = arith.constant 0 : index
    %c7 = arith.constant 7 : index
    %c0_51 = arith.constant 0 : index
    %c0_52 = arith.constant 0 : index
    %40 = vector.load %arg3[%c0_50, %c7, %c0_51, %c0_52] : memref<1x15x16x2xbf16, #tpu.memory_space<vmem>>, vector<1x1x16x2xbf16>
    %41 = vector.shape_cast %40 : vector<1x1x16x2xbf16> to vector<16x2xbf16>
    %c0_53 = arith.constant 0 : index
    %c7_54 = arith.constant 7 : index
    %42 = vector.load %arg8[%c0_53, %c7_54] : memref<2x256xbf16, #tpu.memory_space<vmem>>, vector<2x128xbf16>
    %cst_55 = arith.constant dense<0.000000e+00> : vector<16x128xf32>
    %43 = tpu.matmul %41, %42, %cst_55 {dimension_numbers = #tpu.dot_dimension_numbers<[1], [0], [0], [1], [0, 0, 1, 1], [], []>} : vector<16x2xbf16>, vector<2x128xbf16>, vector<16x128xf32> -> vector<16x128xf32>
    %44 = arith.addf %39, %43 : vector<16x128xf32>
    %c0_56 = arith.constant 0 : index
    %c8 = arith.constant 8 : index
    %c0_57 = arith.constant 0 : index
    %c0_58 = arith.constant 0 : index
    %45 = vector.load %arg3[%c0_56, %c8, %c0_57, %c0_58] : memref<1x15x16x2xbf16, #tpu.memory_space<vmem>>, vector<1x1x16x2xbf16>
    %46 = vector.shape_cast %45 : vector<1x1x16x2xbf16> to vector<16x2xbf16>
    %c0_59 = arith.constant 0 : index
    %c8_60 = arith.constant 8 : index
    %47 = vector.load %arg8[%c0_59, %c8_60] : memref<2x256xbf16, #tpu.memory_space<vmem>>, vector<2x128xbf16>
    %cst_61 = arith.constant dense<0.000000e+00> : vector<16x128xf32>
    %48 = tpu.matmul %46, %47, %cst_61 {dimension_numbers = #tpu.dot_dimension_numbers<[1], [0], [0], [1], [0, 0, 1, 1], [], []>} : vector<16x2xbf16>, vector<2x128xbf16>, vector<16x128xf32> -> vector<16x128xf32>
    %49 = arith.addf %44, %48 : vector<16x128xf32>
    %c0_62 = arith.constant 0 : index
    %c9 = arith.constant 9 : index
    %c0_63 = arith.constant 0 : index
    %c0_64 = arith.constant 0 : index
    %50 = vector.load %arg3[%c0_62, %c9, %c0_63, %c0_64] : memref<1x15x16x2xbf16, #tpu.memory_space<vmem>>, vector<1x1x16x2xbf16>
    %51 = vector.shape_cast %50 : vector<1x1x16x2xbf16> to vector<16x2xbf16>
    %c0_65 = arith.constant 0 : index
    %c9_66 = arith.constant 9 : index
    %52 = vector.load %arg8[%c0_65, %c9_66] : memref<2x256xbf16, #tpu.memory_space<vmem>>, vector<2x128xbf16>
    %cst_67 = arith.constant dense<0.000000e+00> : vector<16x128xf32>
    %53 = tpu.matmul %51, %52, %cst_67 {dimension_numbers = #tpu.dot_dimension_numbers<[1], [0], [0], [1], [0, 0, 1, 1], [], []>} : vector<16x2xbf16>, vector<2x128xbf16>, vector<16x128xf32> -> vector<16x128xf32>
    %54 = arith.addf %49, %53 : vector<16x128xf32>
    %c0_68 = arith.constant 0 : index
    %c10 = arith.constant 10 : index
    %c0_69 = arith.constant 0 : index
    %c0_70 = arith.constant 0 : index
    %55 = vector.load %arg3[%c0_68, %c10, %c0_69, %c0_70] : memref<1x15x16x2xbf16, #tpu.memory_space<vmem>>, vector<1x1x16x2xbf16>
    %56 = vector.shape_cast %55 : vector<1x1x16x2xbf16> to vector<16x2xbf16>
    %c0_71 = arith.constant 0 : index
    %c10_72 = arith.constant 10 : index
    %57 = vector.load %arg8[%c0_71, %c10_72] : memref<2x256xbf16, #tpu.memory_space<vmem>>, vector<2x128xbf16>
    %cst_73 = arith.constant dense<0.000000e+00> : vector<16x128xf32>
    %58 = tpu.matmul %56, %57, %cst_73 {dimension_numbers = #tpu.dot_dimension_numbers<[1], [0], [0], [1], [0, 0, 1, 1], [], []>} : vector<16x2xbf16>, vector<2x128xbf16>, vector<16x128xf32> -> vector<16x128xf32>
    %59 = arith.addf %54, %58 : vector<16x128xf32>
    %c0_74 = arith.constant 0 : index
    %c11 = arith.constant 11 : index
    %c0_75 = arith.constant 0 : index
    %c0_76 = arith.constant 0 : index
    %60 = vector.load %arg3[%c0_74, %c11, %c0_75, %c0_76] : memref<1x15x16x2xbf16, #tpu.memory_space<vmem>>, vector<1x1x16x2xbf16>
    %61 = vector.shape_cast %60 : vector<1x1x16x2xbf16> to vector<16x2xbf16>
    %c0_77 = arith.constant 0 : index
    %c11_78 = arith.constant 11 : index
    %62 = vector.load %arg8[%c0_77, %c11_78] : memref<2x256xbf16, #tpu.memory_space<vmem>>, vector<2x128xbf16>
    %cst_79 = arith.constant dense<0.000000e+00> : vector<16x128xf32>
    %63 = tpu.matmul %61, %62, %cst_79 {dimension_numbers = #tpu.dot_dimension_numbers<[1], [0], [0], [1], [0, 0, 1, 1], [], []>} : vector<16x2xbf16>, vector<2x128xbf16>, vector<16x128xf32> -> vector<16x128xf32>
    %64 = arith.addf %59, %63 : vector<16x128xf32>
    %c0_80 = arith.constant 0 : index
    %c12 = arith.constant 12 : index
    %c0_81 = arith.constant 0 : index
    %c0_82 = arith.constant 0 : index
    %65 = vector.load %arg3[%c0_80, %c12, %c0_81, %c0_82] : memref<1x15x16x2xbf16, #tpu.memory_space<vmem>>, vector<1x1x16x2xbf16>
    %66 = vector.shape_cast %65 : vector<1x1x16x2xbf16> to vector<16x2xbf16>
    %c0_83 = arith.constant 0 : index
    %c12_84 = arith.constant 12 : index
    %67 = vector.load %arg8[%c0_83, %c12_84] : memref<2x256xbf16, #tpu.memory_space<vmem>>, vector<2x128xbf16>
    %cst_85 = arith.constant dense<0.000000e+00> : vector<16x128xf32>
    %68 = tpu.matmul %66, %67, %cst_85 {dimension_numbers = #tpu.dot_dimension_numbers<[1], [0], [0], [1], [0, 0, 1, 1], [], []>} : vector<16x2xbf16>, vector<2x128xbf16>, vector<16x128xf32> -> vector<16x128xf32>
    %69 = arith.addf %64, %68 : vector<16x128xf32>
    %c0_86 = arith.constant 0 : index
    %c13 = arith.constant 13 : index
    %c0_87 = arith.constant 0 : index
    %c0_88 = arith.constant 0 : index
    %70 = vector.load %arg3[%c0_86, %c13, %c0_87, %c0_88] : memref<1x15x16x2xbf16, #tpu.memory_space<vmem>>, vector<1x1x16x2xbf16>
    %71 = vector.shape_cast %70 : vector<1x1x16x2xbf16> to vector<16x2xbf16>
    %c0_89 = arith.constant 0 : index
    %c13_90 = arith.constant 13 : index
    %72 = vector.load %arg8[%c0_89, %c13_90] : memref<2x256xbf16, #tpu.memory_space<vmem>>, vector<2x128xbf16>
    %cst_91 = arith.constant dense<0.000000e+00> : vector<16x128xf32>
    %73 = tpu.matmul %71, %72, %cst_91 {dimension_numbers = #tpu.dot_dimension_numbers<[1], [0], [0], [1], [0, 0, 1, 1], [], []>} : vector<16x2xbf16>, vector<2x128xbf16>, vector<16x128xf32> -> vector<16x128xf32>
    %74 = arith.addf %69, %73 : vector<16x128xf32>
    %c0_92 = arith.constant 0 : index
    %c14 = arith.constant 14 : index
    %c0_93 = arith.constant 0 : index
    %c0_94 = arith.constant 0 : index
    %75 = vector.load %arg3[%c0_92, %c14, %c0_93, %c0_94] : memref<1x15x16x2xbf16, #tpu.memory_space<vmem>>, vector<1x1x16x2xbf16>
    %76 = vector.shape_cast %75 : vector<1x1x16x2xbf16> to vector<16x2xbf16>
    %c0_95 = arith.constant 0 : index
    %c14_96 = arith.constant 14 : index
    %77 = vector.load %arg8[%c0_95, %c14_96] : memref<2x256xbf16, #tpu.memory_space<vmem>>, vector<2x128xbf16>
    %cst_97 = arith.constant dense<0.000000e+00> : vector<16x128xf32>
    %78 = tpu.matmul %76, %77, %cst_97 {dimension_numbers = #tpu.dot_dimension_numbers<[1], [0], [0], [1], [0, 0, 1, 1], [], []>} : vector<16x2xbf16>, vector<2x128xbf16>, vector<16x128xf32> -> vector<16x128xf32>
    %79 = arith.addf %74, %78 : vector<16x128xf32>
    %c0_98 = arith.constant 0 : index
    %c0_99 = arith.constant 0 : index
    %c0_100 = arith.constant 0 : index
    %80 = vector.load %arg4[%c0_98, %c0_99, %c0_100] : memref<1x16x1xf32, #tpu.memory_space<vmem>>, vector<1x16x1xf32>
    %81 = vector.shape_cast %80 : vector<1x16x1xf32> to vector<16x1xf32>
    %82 = vector.broadcast %81 : vector<16x1xf32> to vector<16x128xf32>
    %83 = arith.addf %79, %82 : vector<16x128xf32>
    %cst_101 = arith.constant 0.000000e+00 : f32
    %84 = vector.broadcast %cst_101 : f32 to vector<16x128xf32>
    %85 = arith.cmpf oge, %83, %84 : vector<16x128xf32>
    %cst_102 = arith.constant 2.000000e-01 : f32
    %86 = vector.broadcast %cst_102 : f32 to vector<16x128xf32>
    %87 = arith.mulf %86, %83 : vector<16x128xf32>
    %88 = arith.select %85, %83, %87 : vector<16x128xi1>, vector<16x128xf32>
    %89 = arith.truncf %88 : vector<16x128xf32> to vector<16x128xbf16>
    %c0_103 = arith.constant 0 : index
    %c0_104 = arith.constant 0 : index
    %c0_105 = arith.constant 0 : index
    %90 = vector.load %arg7[%c0_103, %c0_104, %c0_105] : memref<1x16x128xbf16, #tpu.memory_space<vmem>>, vector<1x16x128xbf16>
    %91 = vector.shape_cast %90 : vector<1x16x128xbf16> to vector<16x128xbf16>
    %92 = vector.shape_cast %89 : vector<16x128xbf16> to vector<1x16x128xbf16>
    tpu.vector_store %arg7[%c0_103, %c0_104, %c0_105], %92 {strides = array<i32>} : memref<1x16x128xbf16, #tpu.memory_space<vmem>>, vector<1x16x128xbf16>,
    return
  }
  func.func @transform_0(%arg0: i32, %arg1: i32, %arg2: i32) -> (i32, i32, i32, i32) {
    %c0_i32 = arith.constant 0 : i32
    %c0_i32_0 = arith.constant 0 : i32
    %c0_i32_1 = arith.constant 0 : i32
    %c0_i32_2 = arith.constant 0 : i32
    return %arg0, %c0_i32, %c0_i32_0, %c0_i32_1 : i32, i32, i32, i32
  }
  func.func @transform_1(%arg0: i32, %arg1: i32, %arg2: i32) -> (i32, i32, i32) {
    %c0_i32 = arith.constant 0 : i32
    %c0_i32_0 = arith.constant 0 : i32
    %c0_i32_1 = arith.constant 0 : i32
    return %arg0, %c0_i32, %c0_i32_0 : i32, i32, i32
  }
  func.func @transform_2(%arg0: i32, %arg1: i32, %arg2: i32) -> (i32, i32, i32) {
    %c0_i32 = arith.constant 0 : i32
    %c0_i32_0 = arith.constant 0 : i32
    return %arg1, %c0_i32, %arg2 : i32, i32, i32
  }
  func.func @transform_3(%arg0: i32, %arg1: i32, %arg2: i32) -> (i32, i32, i32) {
    %c1_i32 = arith.constant 1 : i32
    %0 = arith.addi %arg2, %c1_i32 : i32
    %c1_i32_0 = arith.constant 1 : i32
    %1 = arith.muli %0, %c1_i32_0 : i32
    %c0_i32 = arith.constant 0 : i32
    %c0_i32_1 = arith.constant 0 : i32
    return %arg1, %c0_i32, %1 : i32, i32, i32
  }
  func.func @transform_4(%arg0: i32, %arg1: i32, %arg2: i32) -> (i32, i32, i32) {
    %c0_i32 = arith.constant 0 : i32
    return %arg1, %arg0, %arg2 : i32, i32, i32
  }
}

module attributes {stable_mosaic.version = 11 : i64} {
  func.func @_conv_tap_kernel(%arg0: i32, %arg1: i32, %arg2: i32, %arg3: memref<1x11x16x16xbf16, #tpu.memory_space<vmem>>, %arg4: memref<1x16x1xf32, #tpu.memory_space<vmem>>, %arg5: memref<1x16x128xbf16, #tpu.memory_space<vmem>>, %arg6: memref<1x16x128xbf16, #tpu.memory_space<vmem>>, %arg7: memref<1x16x128xbf16, #tpu.memory_space<vmem>>, %arg8: memref<16x256xbf16, #tpu.memory_space<vmem>>) attributes {dimension_semantics = [#tpu.dimension_semantics<parallel>, #tpu.dimension_semantics<parallel>, #tpu.dimension_semantics<parallel>], iteration_bounds = array<i64: 1, 2, 1>, scalar_prefetch = 0 : i64, scratch_operands = 1 : i64, tpu.core_type = #tpu.core_type<tc>, window_params = [{transform_indices = @transform_0, window_bounds = array<i64: 1, 11, 16, 16>}, {transform_indices = @transform_1, window_bounds = array<i64: 1, 16, 1>}, {transform_indices = @transform_2, window_bounds = array<i64: 1, 16, 128>}, {transform_indices = @transform_3, window_bounds = array<i64: 1, 16, 128>}, {transform_indices = @transform_4, window_bounds = array<i64: 1, 16, 128>}]} {
    %c0 = arith.constant 0 : index
    %c0_0 = arith.constant 0 : index
    %c0_1 = arith.constant 0 : index
    %0 = vector.load %arg5[%c0, %c0_0, %c0_1] : memref<1x16x128xbf16, #tpu.memory_space<vmem>>, vector<1x16x128xbf16>
    %1 = vector.shape_cast %0 : vector<1x16x128xbf16> to vector<16x128xbf16>
    %c0_2 = arith.constant 0 : index
    %c0_3 = arith.constant 0 : index
    %2 = vector.load %arg8[%c0_2, %c0_3] : memref<16x256xbf16, #tpu.memory_space<vmem>>, vector<16x128xbf16>
    tpu.vector_store %arg8[%c0_2, %c0_3], %1 {strides = array<i32>} : memref<16x256xbf16, #tpu.memory_space<vmem>>, vector<16x128xbf16>,
    %c0_4 = arith.constant 0 : index
    %c0_5 = arith.constant 0 : index
    %c0_6 = arith.constant 0 : index
    %3 = vector.load %arg6[%c0_4, %c0_5, %c0_6] : memref<1x16x128xbf16, #tpu.memory_space<vmem>>, vector<1x16x128xbf16>
    %4 = vector.shape_cast %3 : vector<1x16x128xbf16> to vector<16x128xbf16>
    %c0_7 = arith.constant 0 : index
    %c128 = arith.constant 128 : index
    %5 = vector.load %arg8[%c0_7, %c128] : memref<16x256xbf16, #tpu.memory_space<vmem>>, vector<16x128xbf16>
    tpu.vector_store %arg8[%c0_7, %c128], %4 {strides = array<i32>} : memref<16x256xbf16, #tpu.memory_space<vmem>>, vector<16x128xbf16>,
    %c0_8 = arith.constant 0 : index
    %c0_9 = arith.constant 0 : index
    %c0_10 = arith.constant 0 : index
    %c0_11 = arith.constant 0 : index
    %6 = vector.load %arg3[%c0_8, %c0_9, %c0_10, %c0_11] : memref<1x11x16x16xbf16, #tpu.memory_space<vmem>>, vector<1x1x16x16xbf16>
    %7 = vector.shape_cast %6 : vector<1x1x16x16xbf16> to vector<16x16xbf16>
    %c0_12 = arith.constant 0 : index
    %c0_13 = arith.constant 0 : index
    %8 = vector.load %arg8[%c0_12, %c0_13] : memref<16x256xbf16, #tpu.memory_space<vmem>>, vector<16x128xbf16>
    %cst = arith.constant dense<0.000000e+00> : vector<16x128xf32>
    %9 = tpu.matmul %7, %8, %cst {dimension_numbers = #tpu.dot_dimension_numbers<[1], [0], [0], [1], [0, 0, 1, 1], [], []>} : vector<16x16xbf16>, vector<16x128xbf16>, vector<16x128xf32> -> vector<16x128xf32>
    %c0_14 = arith.constant 0 : index
    %c1 = arith.constant 1 : index
    %c0_15 = arith.constant 0 : index
    %c0_16 = arith.constant 0 : index
    %10 = vector.load %arg3[%c0_14, %c1, %c0_15, %c0_16] : memref<1x11x16x16xbf16, #tpu.memory_space<vmem>>, vector<1x1x16x16xbf16>
    %11 = vector.shape_cast %10 : vector<1x1x16x16xbf16> to vector<16x16xbf16>
    %c0_17 = arith.constant 0 : index
    %c1_18 = arith.constant 1 : index
    %12 = vector.load %arg8[%c0_17, %c1_18] : memref<16x256xbf16, #tpu.memory_space<vmem>>, vector<16x128xbf16>
    %cst_19 = arith.constant dense<0.000000e+00> : vector<16x128xf32>
    %13 = tpu.matmul %11, %12, %cst_19 {dimension_numbers = #tpu.dot_dimension_numbers<[1], [0], [0], [1], [0, 0, 1, 1], [], []>} : vector<16x16xbf16>, vector<16x128xbf16>, vector<16x128xf32> -> vector<16x128xf32>
    %14 = arith.addf %9, %13 : vector<16x128xf32>
    %c0_20 = arith.constant 0 : index
    %c2 = arith.constant 2 : index
    %c0_21 = arith.constant 0 : index
    %c0_22 = arith.constant 0 : index
    %15 = vector.load %arg3[%c0_20, %c2, %c0_21, %c0_22] : memref<1x11x16x16xbf16, #tpu.memory_space<vmem>>, vector<1x1x16x16xbf16>
    %16 = vector.shape_cast %15 : vector<1x1x16x16xbf16> to vector<16x16xbf16>
    %c0_23 = arith.constant 0 : index
    %c2_24 = arith.constant 2 : index
    %17 = vector.load %arg8[%c0_23, %c2_24] : memref<16x256xbf16, #tpu.memory_space<vmem>>, vector<16x128xbf16>
    %cst_25 = arith.constant dense<0.000000e+00> : vector<16x128xf32>
    %18 = tpu.matmul %16, %17, %cst_25 {dimension_numbers = #tpu.dot_dimension_numbers<[1], [0], [0], [1], [0, 0, 1, 1], [], []>} : vector<16x16xbf16>, vector<16x128xbf16>, vector<16x128xf32> -> vector<16x128xf32>
    %19 = arith.addf %14, %18 : vector<16x128xf32>
    %c0_26 = arith.constant 0 : index
    %c3 = arith.constant 3 : index
    %c0_27 = arith.constant 0 : index
    %c0_28 = arith.constant 0 : index
    %20 = vector.load %arg3[%c0_26, %c3, %c0_27, %c0_28] : memref<1x11x16x16xbf16, #tpu.memory_space<vmem>>, vector<1x1x16x16xbf16>
    %21 = vector.shape_cast %20 : vector<1x1x16x16xbf16> to vector<16x16xbf16>
    %c0_29 = arith.constant 0 : index
    %c3_30 = arith.constant 3 : index
    %22 = vector.load %arg8[%c0_29, %c3_30] : memref<16x256xbf16, #tpu.memory_space<vmem>>, vector<16x128xbf16>
    %cst_31 = arith.constant dense<0.000000e+00> : vector<16x128xf32>
    %23 = tpu.matmul %21, %22, %cst_31 {dimension_numbers = #tpu.dot_dimension_numbers<[1], [0], [0], [1], [0, 0, 1, 1], [], []>} : vector<16x16xbf16>, vector<16x128xbf16>, vector<16x128xf32> -> vector<16x128xf32>
    %24 = arith.addf %19, %23 : vector<16x128xf32>
    %c0_32 = arith.constant 0 : index
    %c4 = arith.constant 4 : index
    %c0_33 = arith.constant 0 : index
    %c0_34 = arith.constant 0 : index
    %25 = vector.load %arg3[%c0_32, %c4, %c0_33, %c0_34] : memref<1x11x16x16xbf16, #tpu.memory_space<vmem>>, vector<1x1x16x16xbf16>
    %26 = vector.shape_cast %25 : vector<1x1x16x16xbf16> to vector<16x16xbf16>
    %c0_35 = arith.constant 0 : index
    %c4_36 = arith.constant 4 : index
    %27 = vector.load %arg8[%c0_35, %c4_36] : memref<16x256xbf16, #tpu.memory_space<vmem>>, vector<16x128xbf16>
    %cst_37 = arith.constant dense<0.000000e+00> : vector<16x128xf32>
    %28 = tpu.matmul %26, %27, %cst_37 {dimension_numbers = #tpu.dot_dimension_numbers<[1], [0], [0], [1], [0, 0, 1, 1], [], []>} : vector<16x16xbf16>, vector<16x128xbf16>, vector<16x128xf32> -> vector<16x128xf32>
    %29 = arith.addf %24, %28 : vector<16x128xf32>
    %c0_38 = arith.constant 0 : index
    %c5 = arith.constant 5 : index
    %c0_39 = arith.constant 0 : index
    %c0_40 = arith.constant 0 : index
    %30 = vector.load %arg3[%c0_38, %c5, %c0_39, %c0_40] : memref<1x11x16x16xbf16, #tpu.memory_space<vmem>>, vector<1x1x16x16xbf16>
    %31 = vector.shape_cast %30 : vector<1x1x16x16xbf16> to vector<16x16xbf16>
    %c0_41 = arith.constant 0 : index
    %c5_42 = arith.constant 5 : index
    %32 = vector.load %arg8[%c0_41, %c5_42] : memref<16x256xbf16, #tpu.memory_space<vmem>>, vector<16x128xbf16>
    %cst_43 = arith.constant dense<0.000000e+00> : vector<16x128xf32>
    %33 = tpu.matmul %31, %32, %cst_43 {dimension_numbers = #tpu.dot_dimension_numbers<[1], [0], [0], [1], [0, 0, 1, 1], [], []>} : vector<16x16xbf16>, vector<16x128xbf16>, vector<16x128xf32> -> vector<16x128xf32>
    %34 = arith.addf %29, %33 : vector<16x128xf32>
    %c0_44 = arith.constant 0 : index
    %c6 = arith.constant 6 : index
    %c0_45 = arith.constant 0 : index
    %c0_46 = arith.constant 0 : index
    %35 = vector.load %arg3[%c0_44, %c6, %c0_45, %c0_46] : memref<1x11x16x16xbf16, #tpu.memory_space<vmem>>, vector<1x1x16x16xbf16>
    %36 = vector.shape_cast %35 : vector<1x1x16x16xbf16> to vector<16x16xbf16>
    %c0_47 = arith.constant 0 : index
    %c6_48 = arith.constant 6 : index
    %37 = vector.load %arg8[%c0_47, %c6_48] : memref<16x256xbf16, #tpu.memory_space<vmem>>, vector<16x128xbf16>
    %cst_49 = arith.constant dense<0.000000e+00> : vector<16x128xf32>
    %38 = tpu.matmul %36, %37, %cst_49 {dimension_numbers = #tpu.dot_dimension_numbers<[1], [0], [0], [1], [0, 0, 1, 1], [], []>} : vector<16x16xbf16>, vector<16x128xbf16>, vector<16x128xf32> -> vector<16x128xf32>
    %39 = arith.addf %34, %38 : vector<16x128xf32>
    %c0_50 = arith.constant 0 : index
    %c7 = arith.constant 7 : index
    %c0_51 = arith.constant 0 : index
    %c0_52 = arith.constant 0 : index
    %40 = vector.load %arg3[%c0_50, %c7, %c0_51, %c0_52] : memref<1x11x16x16xbf16, #tpu.memory_space<vmem>>, vector<1x1x16x16xbf16>
    %41 = vector.shape_cast %40 : vector<1x1x16x16xbf16> to vector<16x16xbf16>
    %c0_53 = arith.constant 0 : index
    %c7_54 = arith.constant 7 : index
    %42 = vector.load %arg8[%c0_53, %c7_54] : memref<16x256xbf16, #tpu.memory_space<vmem>>, vector<16x128xbf16>
    %cst_55 = arith.constant dense<0.000000e+00> : vector<16x128xf32>
    %43 = tpu.matmul %41, %42, %cst_55 {dimension_numbers = #tpu.dot_dimension_numbers<[1], [0], [0], [1], [0, 0, 1, 1], [], []>} : vector<16x16xbf16>, vector<16x128xbf16>, vector<16x128xf32> -> vector<16x128xf32>
    %44 = arith.addf %39, %43 : vector<16x128xf32>
    %c0_56 = arith.constant 0 : index
    %c8 = arith.constant 8 : index
    %c0_57 = arith.constant 0 : index
    %c0_58 = arith.constant 0 : index
    %45 = vector.load %arg3[%c0_56, %c8, %c0_57, %c0_58] : memref<1x11x16x16xbf16, #tpu.memory_space<vmem>>, vector<1x1x16x16xbf16>
    %46 = vector.shape_cast %45 : vector<1x1x16x16xbf16> to vector<16x16xbf16>
    %c0_59 = arith.constant 0 : index
    %c8_60 = arith.constant 8 : index
    %47 = vector.load %arg8[%c0_59, %c8_60] : memref<16x256xbf16, #tpu.memory_space<vmem>>, vector<16x128xbf16>
    %cst_61 = arith.constant dense<0.000000e+00> : vector<16x128xf32>
    %48 = tpu.matmul %46, %47, %cst_61 {dimension_numbers = #tpu.dot_dimension_numbers<[1], [0], [0], [1], [0, 0, 1, 1], [], []>} : vector<16x16xbf16>, vector<16x128xbf16>, vector<16x128xf32> -> vector<16x128xf32>
    %49 = arith.addf %44, %48 : vector<16x128xf32>
    %c0_62 = arith.constant 0 : index
    %c9 = arith.constant 9 : index
    %c0_63 = arith.constant 0 : index
    %c0_64 = arith.constant 0 : index
    %50 = vector.load %arg3[%c0_62, %c9, %c0_63, %c0_64] : memref<1x11x16x16xbf16, #tpu.memory_space<vmem>>, vector<1x1x16x16xbf16>
    %51 = vector.shape_cast %50 : vector<1x1x16x16xbf16> to vector<16x16xbf16>
    %c0_65 = arith.constant 0 : index
    %c9_66 = arith.constant 9 : index
    %52 = vector.load %arg8[%c0_65, %c9_66] : memref<16x256xbf16, #tpu.memory_space<vmem>>, vector<16x128xbf16>
    %cst_67 = arith.constant dense<0.000000e+00> : vector<16x128xf32>
    %53 = tpu.matmul %51, %52, %cst_67 {dimension_numbers = #tpu.dot_dimension_numbers<[1], [0], [0], [1], [0, 0, 1, 1], [], []>} : vector<16x16xbf16>, vector<16x128xbf16>, vector<16x128xf32> -> vector<16x128xf32>
    %54 = arith.addf %49, %53 : vector<16x128xf32>
    %c0_68 = arith.constant 0 : index
    %c10 = arith.constant 10 : index
    %c0_69 = arith.constant 0 : index
    %c0_70 = arith.constant 0 : index
    %55 = vector.load %arg3[%c0_68, %c10, %c0_69, %c0_70] : memref<1x11x16x16xbf16, #tpu.memory_space<vmem>>, vector<1x1x16x16xbf16>
    %56 = vector.shape_cast %55 : vector<1x1x16x16xbf16> to vector<16x16xbf16>
    %c0_71 = arith.constant 0 : index
    %c10_72 = arith.constant 10 : index
    %57 = vector.load %arg8[%c0_71, %c10_72] : memref<16x256xbf16, #tpu.memory_space<vmem>>, vector<16x128xbf16>
    %cst_73 = arith.constant dense<0.000000e+00> : vector<16x128xf32>
    %58 = tpu.matmul %56, %57, %cst_73 {dimension_numbers = #tpu.dot_dimension_numbers<[1], [0], [0], [1], [0, 0, 1, 1], [], []>} : vector<16x16xbf16>, vector<16x128xbf16>, vector<16x128xf32> -> vector<16x128xf32>
    %59 = arith.addf %54, %58 : vector<16x128xf32>
    %c0_74 = arith.constant 0 : index
    %c0_75 = arith.constant 0 : index
    %c0_76 = arith.constant 0 : index
    %60 = vector.load %arg4[%c0_74, %c0_75, %c0_76] : memref<1x16x1xf32, #tpu.memory_space<vmem>>, vector<1x16x1xf32>
    %61 = vector.shape_cast %60 : vector<1x16x1xf32> to vector<16x1xf32>
    %62 = vector.broadcast %61 : vector<16x1xf32> to vector<16x128xf32>
    %63 = arith.addf %59, %62 : vector<16x128xf32>
    %cst_77 = arith.constant 0.000000e+00 : f32
    %64 = vector.broadcast %cst_77 : f32 to vector<16x128xf32>
    %65 = arith.cmpf oge, %63, %64 : vector<16x128xf32>
    %cst_78 = arith.constant 2.000000e-01 : f32
    %66 = vector.broadcast %cst_78 : f32 to vector<16x128xf32>
    %67 = arith.mulf %66, %63 : vector<16x128xf32>
    %68 = arith.select %65, %63, %67 : vector<16x128xi1>, vector<16x128xf32>
    %69 = arith.truncf %68 : vector<16x128xf32> to vector<16x128xbf16>
    %c0_79 = arith.constant 0 : index
    %c0_80 = arith.constant 0 : index
    %c0_81 = arith.constant 0 : index
    %70 = vector.load %arg7[%c0_79, %c0_80, %c0_81] : memref<1x16x128xbf16, #tpu.memory_space<vmem>>, vector<1x16x128xbf16>
    %71 = vector.shape_cast %70 : vector<1x16x128xbf16> to vector<16x128xbf16>
    %72 = vector.shape_cast %69 : vector<16x128xbf16> to vector<1x16x128xbf16>
    tpu.vector_store %arg7[%c0_79, %c0_80, %c0_81], %72 {strides = array<i32>} : memref<1x16x128xbf16, #tpu.memory_space<vmem>>, vector<1x16x128xbf16>,
    return
  }
  func.func @transform_0(%arg0: i32, %arg1: i32, %arg2: i32) -> (i32, i32, i32, i32) {
    %c0_i32 = arith.constant 0 : i32
    %c0_i32_0 = arith.constant 0 : i32
    %c0_i32_1 = arith.constant 0 : i32
    %c0_i32_2 = arith.constant 0 : i32
    return %arg0, %c0_i32, %c0_i32_0, %c0_i32_1 : i32, i32, i32, i32
  }
  func.func @transform_1(%arg0: i32, %arg1: i32, %arg2: i32) -> (i32, i32, i32) {
    %c0_i32 = arith.constant 0 : i32
    %c0_i32_0 = arith.constant 0 : i32
    %c0_i32_1 = arith.constant 0 : i32
    return %arg0, %c0_i32, %c0_i32_0 : i32, i32, i32
  }
  func.func @transform_2(%arg0: i32, %arg1: i32, %arg2: i32) -> (i32, i32, i32) {
    %c0_i32 = arith.constant 0 : i32
    return %arg1, %arg0, %arg2 : i32, i32, i32
  }
  func.func @transform_3(%arg0: i32, %arg1: i32, %arg2: i32) -> (i32, i32, i32) {
    %c1_i32 = arith.constant 1 : i32
    %0 = arith.addi %arg2, %c1_i32 : i32
    %c1_i32_0 = arith.constant 1 : i32
    %1 = arith.muli %0, %c1_i32_0 : i32
    %c0_i32 = arith.constant 0 : i32
    return %arg1, %arg0, %1 : i32, i32, i32
  }
  func.func @transform_4(%arg0: i32, %arg1: i32, %arg2: i32) -> (i32, i32, i32) {
    %c0_i32 = arith.constant 0 : i32
    return %arg1, %arg0, %arg2 : i32, i32, i32
  }
}

module attributes {stable_mosaic.version = 11 : i64} {
  func.func @_conv_tap_kernel(%arg0: i32, %arg1: i32, %arg2: i32, %arg3: memref<1x5x32x16xbf16, #tpu.memory_space<vmem>>, %arg4: memref<1x32x1xf32, #tpu.memory_space<vmem>>, %arg5: memref<1x16x128xbf16, #tpu.memory_space<vmem>>, %arg6: memref<1x16x128xbf16, #tpu.memory_space<vmem>>, %arg7: memref<1x32x128xbf16, #tpu.memory_space<vmem>>, %arg8: memref<16x256xbf16, #tpu.memory_space<vmem>>) attributes {dimension_semantics = [#tpu.dimension_semantics<parallel>, #tpu.dimension_semantics<parallel>, #tpu.dimension_semantics<parallel>], iteration_bounds = array<i64: 1, 2, 1>, scalar_prefetch = 0 : i64, scratch_operands = 1 : i64, tpu.core_type = #tpu.core_type<tc>, window_params = [{transform_indices = @transform_0, window_bounds = array<i64: 1, 5, 32, 16>}, {transform_indices = @transform_1, window_bounds = array<i64: 1, 32, 1>}, {transform_indices = @transform_2, window_bounds = array<i64: 1, 16, 128>}, {transform_indices = @transform_3, window_bounds = array<i64: 1, 16, 128>}, {transform_indices = @transform_4, window_bounds = array<i64: 1, 32, 128>}]} {
    %c0 = arith.constant 0 : index
    %c0_0 = arith.constant 0 : index
    %c0_1 = arith.constant 0 : index
    %0 = vector.load %arg5[%c0, %c0_0, %c0_1] : memref<1x16x128xbf16, #tpu.memory_space<vmem>>, vector<1x16x128xbf16>
    %1 = vector.shape_cast %0 : vector<1x16x128xbf16> to vector<16x128xbf16>
    %c0_2 = arith.constant 0 : index
    %c0_3 = arith.constant 0 : index
    %2 = vector.load %arg8[%c0_2, %c0_3] : memref<16x256xbf16, #tpu.memory_space<vmem>>, vector<16x128xbf16>
    tpu.vector_store %arg8[%c0_2, %c0_3], %1 {strides = array<i32>} : memref<16x256xbf16, #tpu.memory_space<vmem>>, vector<16x128xbf16>,
    %c0_4 = arith.constant 0 : index
    %c0_5 = arith.constant 0 : index
    %c0_6 = arith.constant 0 : index
    %3 = vector.load %arg6[%c0_4, %c0_5, %c0_6] : memref<1x16x128xbf16, #tpu.memory_space<vmem>>, vector<1x16x128xbf16>
    %4 = vector.shape_cast %3 : vector<1x16x128xbf16> to vector<16x128xbf16>
    %c0_7 = arith.constant 0 : index
    %c128 = arith.constant 128 : index
    %5 = vector.load %arg8[%c0_7, %c128] : memref<16x256xbf16, #tpu.memory_space<vmem>>, vector<16x128xbf16>
    tpu.vector_store %arg8[%c0_7, %c128], %4 {strides = array<i32>} : memref<16x256xbf16, #tpu.memory_space<vmem>>, vector<16x128xbf16>,
    %c0_8 = arith.constant 0 : index
    %c0_9 = arith.constant 0 : index
    %c0_10 = arith.constant 0 : index
    %c0_11 = arith.constant 0 : index
    %6 = vector.load %arg3[%c0_8, %c0_9, %c0_10, %c0_11] : memref<1x5x32x16xbf16, #tpu.memory_space<vmem>>, vector<1x1x32x16xbf16>
    %7 = vector.shape_cast %6 : vector<1x1x32x16xbf16> to vector<32x16xbf16>
    %c0_12 = arith.constant 0 : index
    %c0_13 = arith.constant 0 : index
    %8 = vector.load %arg8[%c0_12, %c0_13] : memref<16x256xbf16, #tpu.memory_space<vmem>>, vector<16x128xbf16>
    %cst = arith.constant dense<0.000000e+00> : vector<32x128xf32>
    %9 = tpu.matmul %7, %8, %cst {dimension_numbers = #tpu.dot_dimension_numbers<[1], [0], [0], [1], [0, 0, 1, 1], [], []>} : vector<32x16xbf16>, vector<16x128xbf16>, vector<32x128xf32> -> vector<32x128xf32>
    %c0_14 = arith.constant 0 : index
    %c1 = arith.constant 1 : index
    %c0_15 = arith.constant 0 : index
    %c0_16 = arith.constant 0 : index
    %10 = vector.load %arg3[%c0_14, %c1, %c0_15, %c0_16] : memref<1x5x32x16xbf16, #tpu.memory_space<vmem>>, vector<1x1x32x16xbf16>
    %11 = vector.shape_cast %10 : vector<1x1x32x16xbf16> to vector<32x16xbf16>
    %c0_17 = arith.constant 0 : index
    %c1_18 = arith.constant 1 : index
    %12 = vector.load %arg8[%c0_17, %c1_18] : memref<16x256xbf16, #tpu.memory_space<vmem>>, vector<16x128xbf16>
    %cst_19 = arith.constant dense<0.000000e+00> : vector<32x128xf32>
    %13 = tpu.matmul %11, %12, %cst_19 {dimension_numbers = #tpu.dot_dimension_numbers<[1], [0], [0], [1], [0, 0, 1, 1], [], []>} : vector<32x16xbf16>, vector<16x128xbf16>, vector<32x128xf32> -> vector<32x128xf32>
    %14 = arith.addf %9, %13 : vector<32x128xf32>
    %c0_20 = arith.constant 0 : index
    %c2 = arith.constant 2 : index
    %c0_21 = arith.constant 0 : index
    %c0_22 = arith.constant 0 : index
    %15 = vector.load %arg3[%c0_20, %c2, %c0_21, %c0_22] : memref<1x5x32x16xbf16, #tpu.memory_space<vmem>>, vector<1x1x32x16xbf16>
    %16 = vector.shape_cast %15 : vector<1x1x32x16xbf16> to vector<32x16xbf16>
    %c0_23 = arith.constant 0 : index
    %c2_24 = arith.constant 2 : index
    %17 = vector.load %arg8[%c0_23, %c2_24] : memref<16x256xbf16, #tpu.memory_space<vmem>>, vector<16x128xbf16>
    %cst_25 = arith.constant dense<0.000000e+00> : vector<32x128xf32>
    %18 = tpu.matmul %16, %17, %cst_25 {dimension_numbers = #tpu.dot_dimension_numbers<[1], [0], [0], [1], [0, 0, 1, 1], [], []>} : vector<32x16xbf16>, vector<16x128xbf16>, vector<32x128xf32> -> vector<32x128xf32>
    %19 = arith.addf %14, %18 : vector<32x128xf32>
    %c0_26 = arith.constant 0 : index
    %c3 = arith.constant 3 : index
    %c0_27 = arith.constant 0 : index
    %c0_28 = arith.constant 0 : index
    %20 = vector.load %arg3[%c0_26, %c3, %c0_27, %c0_28] : memref<1x5x32x16xbf16, #tpu.memory_space<vmem>>, vector<1x1x32x16xbf16>
    %21 = vector.shape_cast %20 : vector<1x1x32x16xbf16> to vector<32x16xbf16>
    %c0_29 = arith.constant 0 : index
    %c3_30 = arith.constant 3 : index
    %22 = vector.load %arg8[%c0_29, %c3_30] : memref<16x256xbf16, #tpu.memory_space<vmem>>, vector<16x128xbf16>
    %cst_31 = arith.constant dense<0.000000e+00> : vector<32x128xf32>
    %23 = tpu.matmul %21, %22, %cst_31 {dimension_numbers = #tpu.dot_dimension_numbers<[1], [0], [0], [1], [0, 0, 1, 1], [], []>} : vector<32x16xbf16>, vector<16x128xbf16>, vector<32x128xf32> -> vector<32x128xf32>
    %24 = arith.addf %19, %23 : vector<32x128xf32>
    %c0_32 = arith.constant 0 : index
    %c4 = arith.constant 4 : index
    %c0_33 = arith.constant 0 : index
    %c0_34 = arith.constant 0 : index
    %25 = vector.load %arg3[%c0_32, %c4, %c0_33, %c0_34] : memref<1x5x32x16xbf16, #tpu.memory_space<vmem>>, vector<1x1x32x16xbf16>
    %26 = vector.shape_cast %25 : vector<1x1x32x16xbf16> to vector<32x16xbf16>
    %c0_35 = arith.constant 0 : index
    %c4_36 = arith.constant 4 : index
    %27 = vector.load %arg8[%c0_35, %c4_36] : memref<16x256xbf16, #tpu.memory_space<vmem>>, vector<16x128xbf16>
    %cst_37 = arith.constant dense<0.000000e+00> : vector<32x128xf32>
    %28 = tpu.matmul %26, %27, %cst_37 {dimension_numbers = #tpu.dot_dimension_numbers<[1], [0], [0], [1], [0, 0, 1, 1], [], []>} : vector<32x16xbf16>, vector<16x128xbf16>, vector<32x128xf32> -> vector<32x128xf32>
    %29 = arith.addf %24, %28 : vector<32x128xf32>
    %c0_38 = arith.constant 0 : index
    %c0_39 = arith.constant 0 : index
    %c0_40 = arith.constant 0 : index
    %30 = vector.load %arg4[%c0_38, %c0_39, %c0_40] : memref<1x32x1xf32, #tpu.memory_space<vmem>>, vector<1x32x1xf32>
    %31 = vector.shape_cast %30 : vector<1x32x1xf32> to vector<32x1xf32>
    %32 = vector.broadcast %31 : vector<32x1xf32> to vector<32x128xf32>
    %33 = arith.addf %29, %32 : vector<32x128xf32>
    %cst_41 = arith.constant 0.000000e+00 : f32
    %34 = vector.broadcast %cst_41 : f32 to vector<32x128xf32>
    %35 = arith.cmpf oge, %33, %34 : vector<32x128xf32>
    %cst_42 = arith.constant 2.000000e-01 : f32
    %36 = vector.broadcast %cst_42 : f32 to vector<32x128xf32>
    %37 = arith.mulf %36, %33 : vector<32x128xf32>
    %38 = arith.select %35, %33, %37 : vector<32x128xi1>, vector<32x128xf32>
    %39 = arith.truncf %38 : vector<32x128xf32> to vector<32x128xbf16>
    %c0_43 = arith.constant 0 : index
    %c0_44 = arith.constant 0 : index
    %c0_45 = arith.constant 0 : index
    %40 = vector.load %arg7[%c0_43, %c0_44, %c0_45] : memref<1x32x128xbf16, #tpu.memory_space<vmem>>, vector<1x32x128xbf16>
    %41 = vector.shape_cast %40 : vector<1x32x128xbf16> to vector<32x128xbf16>
    %42 = vector.shape_cast %39 : vector<32x128xbf16> to vector<1x32x128xbf16>
    tpu.vector_store %arg7[%c0_43, %c0_44, %c0_45], %42 {strides = array<i32>} : memref<1x32x128xbf16, #tpu.memory_space<vmem>>, vector<1x32x128xbf16>,
    return
  }
  func.func @transform_0(%arg0: i32, %arg1: i32, %arg2: i32) -> (i32, i32, i32, i32) {
    %c0_i32 = arith.constant 0 : i32
    %c0_i32_0 = arith.constant 0 : i32
    %c0_i32_1 = arith.constant 0 : i32
    %c0_i32_2 = arith.constant 0 : i32
    return %arg0, %c0_i32, %c0_i32_0, %c0_i32_1 : i32, i32, i32, i32
  }
  func.func @transform_1(%arg0: i32, %arg1: i32, %arg2: i32) -> (i32, i32, i32) {
    %c0_i32 = arith.constant 0 : i32
    %c0_i32_0 = arith.constant 0 : i32
    %c0_i32_1 = arith.constant 0 : i32
    return %arg0, %c0_i32, %c0_i32_0 : i32, i32, i32
  }
  func.func @transform_2(%arg0: i32, %arg1: i32, %arg2: i32) -> (i32, i32, i32) {
    %c0_i32 = arith.constant 0 : i32
    %c0_i32_0 = arith.constant 0 : i32
    return %arg1, %c0_i32, %arg2 : i32, i32, i32
  }
  func.func @transform_3(%arg0: i32, %arg1: i32, %arg2: i32) -> (i32, i32, i32) {
    %c1_i32 = arith.constant 1 : i32
    %0 = arith.addi %arg2, %c1_i32 : i32
    %c1_i32_0 = arith.constant 1 : i32
    %1 = arith.muli %0, %c1_i32_0 : i32
    %c0_i32 = arith.constant 0 : i32
    %c0_i32_1 = arith.constant 0 : i32
    return %arg1, %c0_i32, %1 : i32, i32, i32
  }
  func.func @transform_4(%arg0: i32, %arg1: i32, %arg2: i32) -> (i32, i32, i32) {
    %c0_i32 = arith.constant 0 : i32
    return %arg1, %arg0, %arg2 : i32, i32, i32
  }
}

module attributes {stable_mosaic.version = 11 : i64} {
  func.func @_conv_tap_kernel(%arg0: i32, %arg1: i32, %arg2: i32, %arg3: memref<1x3x16x32xbf16, #tpu.memory_space<vmem>>, %arg4: memref<1x16x1xf32, #tpu.memory_space<vmem>>, %arg5: memref<1x32x128xbf16, #tpu.memory_space<vmem>>, %arg6: memref<1x32x128xbf16, #tpu.memory_space<vmem>>, %arg7: memref<1x16x128xbf16, #tpu.memory_space<vmem>>, %arg8: memref<32x256xbf16, #tpu.memory_space<vmem>>) attributes {dimension_semantics = [#tpu.dimension_semantics<parallel>, #tpu.dimension_semantics<parallel>, #tpu.dimension_semantics<parallel>], iteration_bounds = array<i64: 1, 2, 1>, scalar_prefetch = 0 : i64, scratch_operands = 1 : i64, tpu.core_type = #tpu.core_type<tc>, window_params = [{transform_indices = @transform_0, window_bounds = array<i64: 1, 3, 16, 32>}, {transform_indices = @transform_1, window_bounds = array<i64: 1, 16, 1>}, {transform_indices = @transform_2, window_bounds = array<i64: 1, 32, 128>}, {transform_indices = @transform_3, window_bounds = array<i64: 1, 32, 128>}, {transform_indices = @transform_4, window_bounds = array<i64: 1, 16, 128>}]} {
    %c0 = arith.constant 0 : index
    %c0_0 = arith.constant 0 : index
    %c0_1 = arith.constant 0 : index
    %0 = vector.load %arg5[%c0, %c0_0, %c0_1] : memref<1x32x128xbf16, #tpu.memory_space<vmem>>, vector<1x32x128xbf16>
    %1 = vector.shape_cast %0 : vector<1x32x128xbf16> to vector<32x128xbf16>
    %c0_2 = arith.constant 0 : index
    %c0_3 = arith.constant 0 : index
    %2 = vector.load %arg8[%c0_2, %c0_3] : memref<32x256xbf16, #tpu.memory_space<vmem>>, vector<32x128xbf16>
    tpu.vector_store %arg8[%c0_2, %c0_3], %1 {strides = array<i32>} : memref<32x256xbf16, #tpu.memory_space<vmem>>, vector<32x128xbf16>,
    %c0_4 = arith.constant 0 : index
    %c0_5 = arith.constant 0 : index
    %c0_6 = arith.constant 0 : index
    %3 = vector.load %arg6[%c0_4, %c0_5, %c0_6] : memref<1x32x128xbf16, #tpu.memory_space<vmem>>, vector<1x32x128xbf16>
    %4 = vector.shape_cast %3 : vector<1x32x128xbf16> to vector<32x128xbf16>
    %c0_7 = arith.constant 0 : index
    %c128 = arith.constant 128 : index
    %5 = vector.load %arg8[%c0_7, %c128] : memref<32x256xbf16, #tpu.memory_space<vmem>>, vector<32x128xbf16>
    tpu.vector_store %arg8[%c0_7, %c128], %4 {strides = array<i32>} : memref<32x256xbf16, #tpu.memory_space<vmem>>, vector<32x128xbf16>,
    %c0_8 = arith.constant 0 : index
    %c0_9 = arith.constant 0 : index
    %c0_10 = arith.constant 0 : index
    %c0_11 = arith.constant 0 : index
    %6 = vector.load %arg3[%c0_8, %c0_9, %c0_10, %c0_11] : memref<1x3x16x32xbf16, #tpu.memory_space<vmem>>, vector<1x1x16x32xbf16>
    %7 = vector.shape_cast %6 : vector<1x1x16x32xbf16> to vector<16x32xbf16>
    %c0_12 = arith.constant 0 : index
    %c0_13 = arith.constant 0 : index
    %8 = vector.load %arg8[%c0_12, %c0_13] : memref<32x256xbf16, #tpu.memory_space<vmem>>, vector<32x128xbf16>
    %cst = arith.constant dense<0.000000e+00> : vector<16x128xf32>
    %9 = tpu.matmul %7, %8, %cst {dimension_numbers = #tpu.dot_dimension_numbers<[1], [0], [0], [1], [0, 0, 1, 1], [], []>} : vector<16x32xbf16>, vector<32x128xbf16>, vector<16x128xf32> -> vector<16x128xf32>
    %c0_14 = arith.constant 0 : index
    %c1 = arith.constant 1 : index
    %c0_15 = arith.constant 0 : index
    %c0_16 = arith.constant 0 : index
    %10 = vector.load %arg3[%c0_14, %c1, %c0_15, %c0_16] : memref<1x3x16x32xbf16, #tpu.memory_space<vmem>>, vector<1x1x16x32xbf16>
    %11 = vector.shape_cast %10 : vector<1x1x16x32xbf16> to vector<16x32xbf16>
    %c0_17 = arith.constant 0 : index
    %c1_18 = arith.constant 1 : index
    %12 = vector.load %arg8[%c0_17, %c1_18] : memref<32x256xbf16, #tpu.memory_space<vmem>>, vector<32x128xbf16>
    %cst_19 = arith.constant dense<0.000000e+00> : vector<16x128xf32>
    %13 = tpu.matmul %11, %12, %cst_19 {dimension_numbers = #tpu.dot_dimension_numbers<[1], [0], [0], [1], [0, 0, 1, 1], [], []>} : vector<16x32xbf16>, vector<32x128xbf16>, vector<16x128xf32> -> vector<16x128xf32>
    %14 = arith.addf %9, %13 : vector<16x128xf32>
    %c0_20 = arith.constant 0 : index
    %c2 = arith.constant 2 : index
    %c0_21 = arith.constant 0 : index
    %c0_22 = arith.constant 0 : index
    %15 = vector.load %arg3[%c0_20, %c2, %c0_21, %c0_22] : memref<1x3x16x32xbf16, #tpu.memory_space<vmem>>, vector<1x1x16x32xbf16>
    %16 = vector.shape_cast %15 : vector<1x1x16x32xbf16> to vector<16x32xbf16>
    %c0_23 = arith.constant 0 : index
    %c2_24 = arith.constant 2 : index
    %17 = vector.load %arg8[%c0_23, %c2_24] : memref<32x256xbf16, #tpu.memory_space<vmem>>, vector<32x128xbf16>
    %cst_25 = arith.constant dense<0.000000e+00> : vector<16x128xf32>
    %18 = tpu.matmul %16, %17, %cst_25 {dimension_numbers = #tpu.dot_dimension_numbers<[1], [0], [0], [1], [0, 0, 1, 1], [], []>} : vector<16x32xbf16>, vector<32x128xbf16>, vector<16x128xf32> -> vector<16x128xf32>
    %19 = arith.addf %14, %18 : vector<16x128xf32>
    %c0_26 = arith.constant 0 : index
    %c0_27 = arith.constant 0 : index
    %c0_28 = arith.constant 0 : index
    %20 = vector.load %arg4[%c0_26, %c0_27, %c0_28] : memref<1x16x1xf32, #tpu.memory_space<vmem>>, vector<1x16x1xf32>
    %21 = vector.shape_cast %20 : vector<1x16x1xf32> to vector<16x1xf32>
    %22 = vector.broadcast %21 : vector<16x1xf32> to vector<16x128xf32>
    %23 = arith.addf %19, %22 : vector<16x128xf32>
    %24 = arith.truncf %23 : vector<16x128xf32> to vector<16x128xbf16>
    %c0_29 = arith.constant 0 : index
    %c0_30 = arith.constant 0 : index
    %c0_31 = arith.constant 0 : index
    %25 = vector.load %arg7[%c0_29, %c0_30, %c0_31] : memref<1x16x128xbf16, #tpu.memory_space<vmem>>, vector<1x16x128xbf16>
    %26 = vector.shape_cast %25 : vector<1x16x128xbf16> to vector<16x128xbf16>
    %27 = vector.shape_cast %24 : vector<16x128xbf16> to vector<1x16x128xbf16>
    tpu.vector_store %arg7[%c0_29, %c0_30, %c0_31], %27 {strides = array<i32>} : memref<1x16x128xbf16, #tpu.memory_space<vmem>>, vector<1x16x128xbf16>,
    return
  }
  func.func @transform_0(%arg0: i32, %arg1: i32, %arg2: i32) -> (i32, i32, i32, i32) {
    %c0_i32 = arith.constant 0 : i32
    %c0_i32_0 = arith.constant 0 : i32
    %c0_i32_1 = arith.constant 0 : i32
    %c0_i32_2 = arith.constant 0 : i32
    return %arg0, %c0_i32, %c0_i32_0, %c0_i32_1 : i32, i32, i32, i32
  }
  func.func @transform_1(%arg0: i32, %arg1: i32, %arg2: i32) -> (i32, i32, i32) {
    %c0_i32 = arith.constant 0 : i32
    %c0_i32_0 = arith.constant 0 : i32
    %c0_i32_1 = arith.constant 0 : i32
    return %arg0, %c0_i32, %c0_i32_0 : i32, i32, i32
  }
  func.func @transform_2(%arg0: i32, %arg1: i32, %arg2: i32) -> (i32, i32, i32) {
    %c0_i32 = arith.constant 0 : i32
    %c0_i32_0 = arith.constant 0 : i32
    return %arg1, %c0_i32, %arg2 : i32, i32, i32
  }
  func.func @transform_3(%arg0: i32, %arg1: i32, %arg2: i32) -> (i32, i32, i32) {
    %c1_i32 = arith.constant 1 : i32
    %0 = arith.addi %arg2, %c1_i32 : i32
    %c1_i32_0 = arith.constant 1 : i32
    %1 = arith.muli %0, %c1_i32_0 : i32
    %c0_i32 = arith.constant 0 : i32
    %c0_i32_1 = arith.constant 0 : i32
    return %arg1, %c0_i32, %1 : i32, i32, i32
  }
  func.func @transform_4(%arg0: i32, %arg1: i32, %arg2: i32) -> (i32, i32, i32) {
    %c0_i32 = arith.constant 0 : i32
    return %arg1, %arg0, %arg2 : i32, i32, i32
  }
}

</mosaic_0001>

<llo_original>
// kernel: tpu_custom_call.1
$region0: #{tpu_custom_call.1}
  #allocation0 [shape = 'u32[]', space=smem, size = 0x4, offset = 0x4, fixed_abs, tag = 'smem constant byte address 0x4 - core index']
  #allocation1 [shape = 'u32[144,128]{1,0:T(1,128)}', space=vmem, size = 0x12000, scoped, tag = 'internal scratch']
  %s0 = inlined_call_operand.hbm [shape: f32[8,128], index: 0, kind: input, shape index: {}]
  %s1 = inlined_call_operand.hbm [shape: f32[8,128], index: 1, kind: output, shape index: {}]
  %s2 = sld [smem:[#allocation0]]
  $region18: #{tpu_custom_call.1} parent=0
    _
  %s4 = ssub.s32 1, %s2
  %s5 = scalar_select 0, %s4, %s2
  $region1: #{tpu_custom_call.1} parent=0
    #allocation2 [shape = 'u8[4096]{0}', space=vmem, size = 0x1000, scoped, tag = 'input window, operand 0, single buffered']
    #allocation3 [shape = 's32[1]{0}', space=sflag, size = 0x4, scoped, tag = 'scoped memory for tpu_custom_call.1']
    #allocation4 [shape = 's32[1]{0}', space=sflag, size = 0x4, scoped, tag = 'scoped memory for tpu_custom_call.1']
    #allocation5 [shape = 'u8[4096]{0}', space=vmem, size = 0x1000, scoped, tag = 'output window, operand 0, single buffered']
    %6 = vsyncpa [#allocation3], 0
    %7 = vsyncpa [#allocation4], 0
    // Predicated region
    $region2: #{tpu_custom_call.1} parent=1 // pred_check
      _
    $region3: #{tpu_custom_call.1} parent=1 // pred_check_branch
      %9 = sbr.rel (0) target = $region5
    $region4: #{tpu_custom_call.1} parent=1 // pred_region
      %s11 = ssub.s32 128, 128
      %12 = vsyncadd [#allocation3], %s11
      %s14 = sshll.u32 [#allocation2], 4
      %s15 = int_to_ptr.vmem [resolvable:$true] %s14
      %17 = dma.hbm_to_vmem [thread:$0]  %s0, 128, %s15, [#allocation3]
    $region5: #{tpu_custom_call.1} parent=1 // pred_fallthru
      _
    // Predicated region
    $region6: #{tpu_custom_call.1} parent=1 // pred_check
      _
    $region7: #{tpu_custom_call.1} parent=1 // pred_check_branch
      %19 = sbr.rel (0) target = $region9
    $region8: #{tpu_custom_call.1} parent=1 // pred_region
      %20 = dma.done [#allocation3], 128
    $region9: #{tpu_custom_call.1} parent=1 // pred_fallthru
      _
    %v21 = vld [vmem:[#allocation2] sm:$0xff]
    %22 = vst [vmem:[#allocation5] sm:$0xff] %v21
    // Predicated region
    $region10: #{tpu_custom_call.1} parent=1 // pred_check
      _
    $region11: #{tpu_custom_call.1} parent=1 // pred_check_branch
      %24 = sbr.rel (0) target = $region13
    $region12: #{tpu_custom_call.1} parent=1 // pred_region
      %s26 = ssub.s32 128, 128
      %27 = vsyncadd [#allocation4], %s26
      %s29 = sshll.u32 [#allocation5], 4
      %s30 = int_to_ptr.vmem [resolvable:$true] %s29
      %32 = dma.vmem_to_hbm [thread:$0]  %s30, 128, %s1, [#allocation4]
    $region13: #{tpu_custom_call.1} parent=1 // pred_fallthru
      _
    // Predicated region
    $region14: #{tpu_custom_call.1} parent=1 // pred_check
      _
    $region15: #{tpu_custom_call.1} parent=1 // pred_check_branch
      %34 = sbr.rel (0) target = $region17
    $region16: #{tpu_custom_call.1} parent=1 // pred_region
      %35 = dma.done [#allocation4], 128
    $region17: #{tpu_custom_call.1} parent=1 // pred_fallthru
      _
    %36 = vsyncpa [#allocation3], 1
    %37 = vsyncpa [#allocation4], 1

// kernel: audio_discriminator_forward.16
$region0: #{audio_discriminator_forward.16}
  #allocation0 [shape = 'u32[]', space=smem, size = 0x4, offset = 0x4, fixed_abs, tag = 'smem constant byte address 0x4 - core index']
  #allocation1 [shape = 'u32[144,128]{1,0:T(1,128)}', space=vmem, size = 0x12000, scoped, tag = 'internal scratch']
  %s0 = inlined_call_operand.vmem [shape: f32[4,256], index: 0, kind: input, shape index: {}, may-alias: {0,2}]
  %s1 = inlined_call_operand.vmem [shape: f32[4,256], index: 1, kind: input, shape index: {}, may-alias: {1,3}]
  %s2 = inlined_call_operand.vmem [shape: f32[4,256], index: 2, kind: input, shape index: {}, may-alias: {0,2}]
  %s3 = inlined_call_operand.vmem [shape: f32[4,256], index: 3, kind: input, shape index: {}, may-alias: {1,3}]
  %s4 = inlined_call_operand.vmem [shape: f32[4,128], index: 4, kind: output, shape index: {}]
  %s5 = sld [smem:[#allocation0]]
  $region26: #{audio_discriminator_forward.16} parent=0
    _
  %s7 = ssub.s32 1, %s5
  %s8 = scalar_select 0, %s7, %s5
  // Predicated region
  $region2: #{audio_discriminator_forward.16} parent=0 // pred_check
    _
  $region3: #{audio_discriminator_forward.16} parent=0 // pred_check_branch
    %10 = sbr.rel (0) target = $region5
  $region4: #{audio_discriminator_forward.16} parent=0 // pred_region
    _
  $region5: #{audio_discriminator_forward.16} parent=0 // pred_fallthru
    _
  // Predicated region
  $region6: #{audio_discriminator_forward.16} parent=0 // pred_check
    _
  $region7: #{audio_discriminator_forward.16} parent=0 // pred_check_branch
    %12 = sbr.rel (0) target = $region9
  $region8: #{audio_discriminator_forward.16} parent=0 // pred_region
    _
  $region9: #{audio_discriminator_forward.16} parent=0 // pred_fallthru
    _
  // Predicated region
  $region10: #{audio_discriminator_forward.16} parent=0 // pred_check
    _
  $region11: #{audio_discriminator_forward.16} parent=0 // pred_check_branch
    %14 = sbr.rel (0) target = $region13
  $region12: #{audio_discriminator_forward.16} parent=0 // pred_region
    %s15 = sadd.s32 0, 1
    %p16 = scmp.lt.s32.totalorder %s15, 1
    %s17 = scalar_select %p16, %s15, 1
    %s18 = smul.addr %s17, 4
    %s19 = scalar_lea.vmem %s2, %s18
    %s20 = sadd.s32 0, 1
  $region13: #{audio_discriminator_forward.16} parent=0 // pred_fallthru
    _
  // Predicated region
  $region14: #{audio_discriminator_forward.16} parent=0 // pred_check
    _
  $region15: #{audio_discriminator_forward.16} parent=0 // pred_check_branch
    %22 = sbr.rel (0) target = $region17
  $region16: #{audio_discriminator_forward.16} parent=0 // pred_region
    %s23 = sadd.s32 0, 1
    %p24 = scmp.lt.s32.totalorder %s23, 1
    %s25 = scalar_select %p24, %s23, 1
    %s26 = smul.addr %s25, 4
    %s27 = scalar_lea.vmem %s3, %s26
    %s28 = sadd.s32 0, 1
  $region17: #{audio_discriminator_forward.16} parent=0 // pred_fallthru
    _
  %s29 = sadd.s32 0, 1
  %p30 = scmp.lt.s32.totalorder %s29, 1
  %s31 = scalar_select %p30, %s29, 1
  %s32 = smul.addr %s31, 4
  %s33 = scalar_lea.vmem %s2, %s32
  %s34 = sadd.s32 0, 1
  %p35 = scmp.lt.s32.totalorder %s34, 1
  %s36 = scalar_select %p35, %s34, 1
  %s37 = smul.addr %s36, 4
  %s38 = scalar_lea.vmem %s3, %s37
  %s39 = sadd.s32 0, 1
  %p40 = scmp.lt.s32.totalorder %s39, 1
  %s41 = scalar_select %p40, %s39, 1
  %s42 = smul.addr %s41, 4
  %s43 = scalar_lea.vmem %s2, %s42
  %s44 = sadd.s32 0, 1
  %s45 = sadd.s32 0, 1
  %p46 = scmp.lt.s32.totalorder %s45, 1
  %s47 = scalar_select %p46, %s45, 1
  %s48 = smul.addr %s47, 4
  %s49 = scalar_lea.vmem %s3, %s48
  %s50 = sadd.s32 0, 1
  %v51 = vld [vmem:[%s0] sm:$0xf]
  %v52 = vld [vmem:[%s43] sm:$0xf]
  %v53 = vld [vmem:[%s1] sm:$0xf]
  %v54 = vld [vmem:[%s49] sm:$0xf]
  %v55 = vadd.f32 %v51, %v53
  %58 = vrot.lane.b32.xlu0 %v51, 127
  %v59 = vpop.permute.xlu0 %58
  %60 = vrot.lane.b32.xlu0 %v52, 127
  %v61 = vpop.permute.xlu0 %60
  %vm62 = vcmask 1039360
  %v63 = vsel %vm62, %v59, %v61
  %v65 = vadd.f32 %v55, %v63
  %68 = vrot.lane.b32.xlu0 %v53, 127
  %v69 = vpop.permute.xlu0 %68
  %70 = vrot.lane.b32.xlu0 %v54, 127
  %v71 = vpop.permute.xlu0 %70
  %v72 = vsel %vm62, %v69, %v71
  %v74 = vadd.f32 %v65, %v72
  %s75 = smul.u32 0, 128
  %v76 = vlaneseq
  %v77 = vand.u32 %v76, 127
  %v78 = vstv %s75
  %v79 = vadd.s32 %v78, %v77
  %v80 = vmul.u32 %v79, 2
  %vm81 = vcmp.gt.s32.totalorder %v80, 1
  %v82 = vsel %vm81, %v80, 1
  %v83 = vadd.s32 %v80, 4
  %vm84 = vcmp.lt.s32.totalorder %v83, 65
  %v85 = vsel %vm84, %v83, 65
  %v86 = vsub.s32 %v85, %v82
  %vm87 = vcmp.gt.s32.totalorder %v86, 1
  %v88 = vsel %vm87, %v86, 1
  %v89 = vcvt.s32.f32 %v88
  %v90 = vrcp.pop %v89
  %v91 = vmul.f32 %v74, %v90
  %92 = vst [vmem:[%s4] sm:$0xf] %v91
  // Predicated region
  $region18: #{audio_discriminator_forward.16} parent=0 // pred_check
    _
  $region19: #{audio_discriminator_forward.16} parent=0 // pred_check_branch
    %94 = sbr.rel (0) target = $region21
  $region20: #{audio_discriminator_forward.16} parent=0 // pred_region
    _
  $region21: #{audio_discriminator_forward.16} parent=0 // pred_fallthru
    _
  // Predicated region
  $region22: #{audio_discriminator_forward.16} parent=0 // pred_check
    _
  $region23: #{audio_discriminator_forward.16} parent=0 // pred_check_branch
    %96 = sbr.rel (0) target = $region25
  $region24: #{audio_discriminator_forward.16} parent=0 // pred_region
    _
  $region25: #{audio_discriminator_forward.16} parent=0 // pred_fallthru
    _

// kernel: audio_discriminator_forward.17
$region0: #{audio_discriminator_forward.17}
  #allocation0 [shape = 'u32[]', space=smem, size = 0x4, offset = 0x4, fixed_abs, tag = 'smem constant byte address 0x4 - core index']
  #allocation1 [shape = 'u32[144,128]{1,0:T(1,128)}', space=vmem, size = 0x12000, scoped, tag = 'internal scratch']
  #allocation2 [shape = 'bf16[2,256]{1,0:T(2,128)(2,1)}', space=vmem, size = 0x400, scoped, tag = 'scratch operand']
  %s0 = inlined_call_operand.vmem [shape: bf16[1,15,16,2], index: 0, kind: input, shape index: {}]
  %s1 = inlined_call_operand.vmem [shape: f32[1,16,1], index: 1, kind: input, shape index: {}]
  %s2 = inlined_call_operand.vmem [shape: bf16[2,2,256], index: 2, kind: input, shape index: {}, may-alias: {2,3}]
  %s3 = inlined_call_operand.vmem [shape: bf16[2,2,256], index: 3, kind: input, shape index: {}, may-alias: {2,3}]
  %s4 = inlined_call_operand.vmem [shape: bf16[2,16,128], index: 4, kind: output, shape index: {}]
  %s5 = sld [smem:[#allocation0]]
  $region49: #{audio_discriminator_forward.17} parent=0
    _
  %s7 = ssub.s32 1, %s5
  %s8 = scalar_select 0, %s7, %s5
  loop: start=0, step=1, limit=4
  $region2: #{audio_discriminator_forward.17} parent=0 // loop_pre_header
    _
  $region3: #{audio_discriminator_forward.17} parent=0 // loop_header
    %s10 = sphi 0, %s14
    %p11 = scmp.ge.s32.totalorder %s10, 4
    %s17 = sphi 0, %s36
    %s18 = sphi 0, %s32
    %s19 = sphi 0, %s28
    %s20 = sphi 0, %s17
    %s21 = sphi 0, %s18
    %s22 = sphi 0, %s19
    %s23 = sphi 0, %s20
    %s24 = sphi 0, %s21
    %s25 = sphi 0, %s22
    %s39 = sphi 0, %s41
    %s42 = sphi 0, %s39
    %s43 = sphi 0, %s42
    %s59 = sphi 0, %s43
    %s65 = sphi 0, %s67
    %s68 = sphi 0, %s65
    %s69 = sphi 0, %s68
    %s85 = sphi 0, %s69
    %s93 = sphi 0, %s95
    %s96 = sphi 0, %s93
    %s97 = sphi 0, %s96
    %s113 = sphi 0, %s97
    %s123 = sphi 0, %s125
    %s126 = sphi 0, %s123
    %s127 = sphi 0, %s126
    %s143 = sphi 0, %s127
    %s153 = sphi 0, %s155
    %s156 = sphi 0, %s153
    %s157 = sphi 0, %s156
    %s173 = sphi 0, %s157
  $region4: #{audio_discriminator_forward.17} parent=0 // loop_header_branch
    %13 = sbr.rel (%p11) target = $region8
  $region5: #{audio_discriminator_forward.17} parent=0 // loop_body
    %s15 = ssub.s32 %s10, 1
    %s16 = ssub.s32 %s10, 2
    %s26 = sadd.s32 1, %s19
    %p27 = scmp.ge.s32.totalorder %s26, 1
    %s28 = scalar_select %p27, 0, %s26
    %s29 = sadd.s32 1, %s18
    %s30 = scalar_select %p27, %s29, %s18
    %p31 = scmp.ge.s32.totalorder %s30, 2
    %s32 = scalar_select %p31, 0, %s30
    %s33 = sadd.s32 1, %s17
    %s34 = scalar_select %p31, %s33, %s17
    %p35 = scmp.ge.s32.totalorder %s34, 1
    %s36 = scalar_select %p35, 0, %s34
    %s37 = ssub.s32 %s17, %s36
    %p38 = scmp.eq.s32.totalorder %s37, 0
    %s40 = sadd.s32 %s39, 1
    %s41 = scalar_select %p38, %s39, %s40
    %p44 = pneg %p38
    %p45 = scmp.eq.s32.totalorder %s10, 1
    %p46 = por %p44, %p45
    %p47 = scmp.ne.s32.totalorder %s39, %s42
    %p48 = scmp.eq.s32.totalorder %s10, 0
    %p49 = por %p47, %p48
    %p50 = scmp.ne.s32.totalorder %s39, %s42
    %p51 = scmp.eq.s32.totalorder %s15, 1
    %p52 = por %p50, %p51
    %p53 = scmp.ne.s32.totalorder %s42, %s43
    %p54 = scmp.eq.s32.totalorder %s15, 0
    %p55 = por %p53, %p54
    %p56 = scmp.ne.s32.totalorder %s42, %s43
    %p57 = scmp.eq.s32.totalorder %s16, 1
    %p58 = por %p56, %p57
    %p60 = scmp.ne.s32.totalorder %s43, %s59
    %p61 = scmp.eq.s32.totalorder %s16, 0
    %p62 = por %p60, %p61
    %s63 = ssub.s32 %s17, %s36
    %p64 = scmp.eq.s32.totalorder %s63, 0
    %s66 = sadd.s32 %s65, 1
    %s67 = scalar_select %p64, %s65, %s66
    %p70 = pneg %p64
    %p71 = scmp.eq.s32.totalorder %s10, 1
    %p72 = por %p70, %p71
    %p73 = scmp.ne.s32.totalorder %s65, %s68
    %p74 = scmp.eq.s32.totalorder %s10, 0
    %p75 = por %p73, %p74
    %p76 = scmp.ne.s32.totalorder %s65, %s68
    %p77 = scmp.eq.s32.totalorder %s15, 1
    %p78 = por %p76, %p77
    %p79 = scmp.ne.s32.totalorder %s68, %s69
    %p80 = scmp.eq.s32.totalorder %s15, 0
    %p81 = por %p79, %p80
    %p82 = scmp.ne.s32.totalorder %s68, %s69
    %p83 = scmp.eq.s32.totalorder %s16, 1
    %p84 = por %p82, %p83
    %p86 = scmp.ne.s32.totalorder %s69, %s85
    %p87 = scmp.eq.s32.totalorder %s16, 0
    %p88 = por %p86, %p87
    %s89 = ssub.s32 %s18, %s32
    %s90 = ssub.s32 %s19, %s28
    %s91 = sor.u32 %s89, %s90
    %p92 = scmp.eq.s32.totalorder %s91, 0
    %s94 = sadd.s32 %s93, 1
    %s95 = scalar_select %p92, %s93, %s94
    %p98 = pneg %p92
    %p99 = scmp.eq.s32.totalorder %s10, 1
    %p100 = por %p98, %p99
    %p101 = scmp.ne.s32.totalorder %s93, %s96
    %p102 = scmp.eq.s32.totalorder %s10, 0
    %p103 = por %p101, %p102
    %p104 = scmp.ne.s32.totalorder %s93, %s96
    %p105 = scmp.eq.s32.totalorder %s15, 1
    %p106 = por %p104, %p105
    %p107 = scmp.ne.s32.totalorder %s96, %s97
    %p108 = scmp.eq.s32.totalorder %s15, 0
    %p109 = por %p107, %p108
    %p110 = scmp.ne.s32.totalorder %s96, %s97
    %p111 = scmp.eq.s32.totalorder %s16, 1
    %p112 = por %p110, %p111
    %p114 = scmp.ne.s32.totalorder %s97, %s113
    %p115 = scmp.eq.s32.totalorder %s16, 0
    %p116 = por %p114, %p115
    %s117 = sadd.s32 %s19, 1
    %s118 = sadd.s32 %s28, 1
    %s119 = ssub.s32 %s18, %s32
    %s120 = ssub.s32 %s117, %s118
    %s121 = sor.u32 %s119, %s120
    %p122 = scmp.eq.s32.totalorder %s121, 0
    %s124 = sadd.s32 %s123, 1
    %s125 = scalar_select %p122, %s123, %s124
    %p128 = pneg %p122
    %p129 = scmp.eq.s32.totalorder %s10, 1
    %p130 = por %p128, %p129
    %p131 = scmp.ne.s32.totalorder %s123, %s126
    %p132 = scmp.eq.s32.totalorder %s10, 0
    %p133 = por %p131, %p132
    %p134 = scmp.ne.s32.totalorder %s123, %s126
    %p135 = scmp.eq.s32.totalorder %s15, 1
    %p136 = por %p134, %p135
    %p137 = scmp.ne.s32.totalorder %s126, %s127
    %p138 = scmp.eq.s32.totalorder %s15, 0
    %p139 = por %p137, %p138
    %p140 = scmp.ne.s32.totalorder %s126, %s127
    %p141 = scmp.eq.s32.totalorder %s16, 1
    %p142 = por %p140, %p141
    %p144 = scmp.ne.s32.totalorder %s127, %s143
    %p145 = scmp.eq.s32.totalorder %s16, 0
    %p146 = por %p144, %p145
    %s147 = ssub.s32 %s18, %s32
    %s148 = ssub.s32 %s17, %s36
    %s149 = sor.u32 %s147, %s148
    %s150 = ssub.s32 %s19, %s28
    %s151 = sor.u32 %s149, %s150
    %p152 = scmp.eq.s32.totalorder %s151, 0
    %s154 = sadd.s32 %s153, 1
    %s155 = scalar_select %p152, %s153, %s154
    %p158 = pneg %p152
    %p159 = scmp.eq.s32.totalorder %s10, 1
    %p160 = por %p158, %p159
    %p161 = scmp.ne.s32.totalorder %s153, %s156
    %p162 = scmp.eq.s32.totalorder %s10, 0
    %p163 = por %p161, %p162
    %p164 = scmp.ne.s32.totalorder %s153, %s156
    %p165 = scmp.eq.s32.totalorder %s15, 1
    %p166 = por %p164, %p165
    %p167 = scmp.ne.s32.totalorder %s156, %s157
    %p168 = scmp.eq.s32.totalorder %s15, 0
    %p169 = por %p167, %p168
    %p170 = scmp.ne.s32.totalorder %s156, %s157
    %p171 = scmp.eq.s32.totalorder %s16, 1
    %p172 = por %p170, %p171
    %p174 = scmp.ne.s32.totalorder %s157, %s173
    %p175 = scmp.eq.s32.totalorder %s16, 0
    %p176 = por %p174, %p175
    %p177 = scmp.le.s32.totalorder 1, %s10
    %p178 = scmp.lt.s32.totalorder %s10, 3
    %p179 = pnand %p177, %p178
    %p180 = pneg %p179
    // Predicated region
    $region9: #{audio_discriminator_forward.17} parent=5 // pred_check
      _
    $region10: #{audio_discriminator_forward.17} parent=5 // pred_check_branch
      %182 = sbr.rel (%p179) target = $region12
    $region11: #{audio_discriminator_forward.17} parent=5 // pred_region
      %s183 = ssub.s32 %s10, 1
      // Predicated region
      $region13: #{audio_discriminator_forward.17} parent=11 // pred_check
        %p184 = pneg %p55
      $region14: #{audio_discriminator_forward.17} parent=11 // pred_check_branch
        %186 = sbr.rel (%p184) target = $region16
      $region15: #{audio_discriminator_forward.17} parent=11 // pred_region
        %p187 = scmp.lt.s32.totalorder %s20, 0
        %s188 = scalar_select %p187, %s20, 0
        %s189 = smul.addr %s188, 30
        %s190 = smul.addr %s189, 4
        %s191 = scalar_lea.vmem %s0, %s190
      $region16: #{audio_discriminator_forward.17} parent=11 // pred_fallthru
        _
      // Predicated region
      $region17: #{audio_discriminator_forward.17} parent=11 // pred_check
        %p192 = pneg %p81
      $region18: #{audio_discriminator_forward.17} parent=11 // pred_check_branch
        %194 = sbr.rel (%p192) target = $region20
      $region19: #{audio_discriminator_forward.17} parent=11 // pred_region
        %p195 = scmp.lt.s32.totalorder %s20, 0
        %s196 = scalar_select %p195, %s20, 0
        %s197 = smul.addr %s196, 2
        %s198 = smul.addr %s197, 8
        %s199 = scalar_lea.vmem %s1, %s198
      $region20: #{audio_discriminator_forward.17} parent=11 // pred_fallthru
        _
    $region12: #{audio_discriminator_forward.17} parent=5 // pred_fallthru
      _
    %p200 = scmp.lt.s32.totalorder %s10, 2
    // Predicated region
    $region21: #{audio_discriminator_forward.17} parent=5 // pred_check
      %p201 = pneg %p200
    $region22: #{audio_discriminator_forward.17} parent=5 // pred_check_branch
      %203 = sbr.rel (%p201) target = $region24
    $region23: #{audio_discriminator_forward.17} parent=5 // pred_region
      // Predicated region
      $region25: #{audio_discriminator_forward.17} parent=23 // pred_check
        %p204 = pneg %p103
      $region26: #{audio_discriminator_forward.17} parent=23 // pred_check_branch
        %206 = sbr.rel (%p204) target = $region28
      $region27: #{audio_discriminator_forward.17} parent=23 // pred_region
        %p207 = scmp.lt.s32.totalorder %s18, 1
        %s208 = scalar_select %p207, %s18, 1
        %p209 = scmp.lt.s32.totalorder %s19, 1
        %s210 = scalar_select %p209, %s19, 1
        %s211 = smul.addr %s208, 2
        %s212 = sadd.s32 %s210, %s211
        %s213 = scalar_lea.vmem %s2, %s212
      $region28: #{audio_discriminator_forward.17} parent=23 // pred_fallthru
        _
      // Predicated region
      $region29: #{audio_discriminator_forward.17} parent=23 // pred_check
        %p214 = pneg %p133
      $region30: #{audio_discriminator_forward.17} parent=23 // pred_check_branch
        %216 = sbr.rel (%p214) target = $region32
      $region31: #{audio_discriminator_forward.17} parent=23 // pred_region
        %s217 = sadd.s32 %s19, 1
        %p218 = scmp.lt.s32.totalorder %s18, 1
        %s219 = scalar_select %p218, %s18, 1
        %p220 = scmp.lt.s32.totalorder %s217, 1
        %s221 = scalar_select %p220, %s217, 1
        %s222 = smul.addr %s219, 2
        %s223 = sadd.s32 %s221, %s222
        %s224 = scalar_lea.vmem %s3, %s223
        %s225 = sadd.s32 %s19, 1
      $region32: #{audio_discriminator_forward.17} parent=23 // pred_fallthru
        _
    $region24: #{audio_discriminator_forward.17} parent=5 // pred_fallthru
      _
    %p226 = scmp.le.s32.totalorder 1, %s10
    %p227 = scmp.lt.s32.totalorder %s10, 3
    %p228 = pnand %p226, %p227
    %p229 = pneg %p228
    // Predicated region
    $region33: #{audio_discriminator_forward.17} parent=5 // pred_check
      _
    $region34: #{audio_discriminator_forward.17} parent=5 // pred_check_branch
      %231 = sbr.rel (%p228) target = $region36
    $region35: #{audio_discriminator_forward.17} parent=5 // pred_region
      %s232 = ssub.s32 %s10, 1
      %p233 = scmp.lt.s32.totalorder %s20, 0
      %s234 = scalar_select %p233, %s20, 0
      %s235 = smul.addr %s234, 30
      %s236 = smul.addr %s235, 4
      %s237 = scalar_lea.vmem %s0, %s236
      %p238 = pneg %p55
      %p239 = pneg %p52
      %p240 = scmp.lt.s32.totalorder %s20, 0
      %s241 = scalar_select %p240, %s20, 0
      %s242 = smul.addr %s241, 2
      %s243 = smul.addr %s242, 8
      %s244 = scalar_lea.vmem %s1, %s243
      %p245 = pneg %p81
      %p246 = pneg %p78
      %p247 = scmp.lt.s32.totalorder %s21, 1
      %s248 = scalar_select %p247, %s21, 1
      %p249 = scmp.lt.s32.totalorder %s22, 1
      %s250 = scalar_select %p249, %s22, 1
      %s251 = smul.addr %s248, 2
      %s252 = sadd.s32 %s250, %s251
      %s253 = scalar_lea.vmem %s2, %s252
      %p254 = pneg %p109
      %p255 = pneg %p106
      %s256 = sadd.s32 %s22, 1
      %p257 = scmp.lt.s32.totalorder %s21, 1
      %s258 = scalar_select %p257, %s21, 1
      %p259 = scmp.lt.s32.totalorder %s256, 1
      %s260 = scalar_select %p259, %s256, 1
      %s261 = smul.addr %s258, 2
      %s262 = sadd.s32 %s260, %s261
      %s263 = scalar_lea.vmem %s3, %s262
      %p264 = pneg %p139
      %p265 = pneg %p136
      %p266 = pneg %p169
      %p267 = pneg %p166
      %s268 = smul.u32 2, %s20
      %p269 = scmp.lt.s32.totalorder %s21, 1
      %s270 = scalar_select %p269, %s21, 1
      %p271 = scmp.lt.s32.totalorder %s268, 1
      %s272 = scalar_select %p271, %s268, 1
      %p273 = scmp.lt.s32.totalorder %s22, 0
      %s274 = scalar_select %p273, %s22, 0
      %s275 = sadd.s32 %s274, %s272
      %s276 = smul.addr %s270, 2
      %s277 = sadd.s32 %s275, %s276
      %s278 = smul.addr %s277, 4
      %s279 = scalar_lea.vmem %s4, %s278
      %p280 = scmp.lt.s32.totalorder %s20, 0
      %s281 = scalar_select %p280, %s20, 0
      %s282 = smul.addr %s281, 30
      %s283 = smul.addr %s282, 4
      %s284 = scalar_lea.vmem %s0, %s283
      %p285 = scmp.lt.s32.totalorder %s20, 0
      %s286 = scalar_select %p285, %s20, 0
      %s287 = smul.addr %s286, 2
      %s288 = smul.addr %s287, 8
      %s289 = scalar_lea.vmem %s1, %s288
      %p290 = scmp.lt.s32.totalorder %s21, 1
      %s291 = scalar_select %p290, %s21, 1
      %p292 = scmp.lt.s32.totalorder %s22, 1
      %s293 = scalar_select %p292, %s22, 1
      %s294 = smul.addr %s291, 2
      %s295 = sadd.s32 %s293, %s294
      %s296 = scalar_lea.vmem %s2, %s295
      %s297 = sadd.s32 %s22, 1
      %p298 = scmp.lt.s32.totalorder %s21, 1
      %s299 = scalar_select %p298, %s21, 1
      %p300 = scmp.lt.s32.totalorder %s297, 1
      %s301 = scalar_select %p300, %s297, 1
      %s302 = smul.addr %s299, 2
      %s303 = sadd.s32 %s301, %s302
      %s304 = scalar_lea.vmem %s3, %s303
      %s305 = sadd.s32 %s22, 1
      %s306 = smul.u32 2, %s20
      %p307 = scmp.lt.s32.totalorder %s21, 1
      %s308 = scalar_select %p307, %s21, 1
      %p309 = scmp.lt.s32.totalorder %s306, 1
      %s310 = scalar_select %p309, %s306, 1
      %p311 = scmp.lt.s32.totalorder %s22, 0
      %s312 = scalar_select %p311, %s22, 0
      %s313 = sadd.s32 %s312, %s310
      %s314 = smul.addr %s308, 2
      %s315 = sadd.s32 %s313, %s314
      %s316 = smul.addr %s315, 4
      %s317 = scalar_lea.vmem %s4, %s316
      %s318 = smul.u32 2, %s20
      %v320 = vld [vmem:[%s296] sm:$0x1]
      %321 = vst [vmem:[#allocation2] sm:$0x1] %v320
      %v322 = vld [vmem:[%s304] sm:$0x1]
      %323 = vst [vmem:[#allocation2 + $0x1] sm:$0x1] %v322
      %v324 = vld [vmem:[%s284] sm:$0xf]
      %v325 = vld [vmem:[%s284 + $0x4] sm:$0xf]
      %v326 = vld [vmem:[#allocation2] sm:$0x1]
      %s327 = scalar_lea.vmem %s284, 8
      %v328 = vld [vmem:[%s327] sm:$0xf]
      %v329 = vld [vmem:[%s327 + $0x4] sm:$0xf]
      %v330 = vld [vmem:[#allocation2] sm:$0x3]
      %v333 = vunpack.c.l.b16 %v328
      %v334 = vunpack.c.l.b16 %v329
      %v335 = vpack.c.b16 %v334, %v333
      %v338 = vunpack.c.l.s4 1966171168
      %v339 = vunpack.c.0.s8 %v338
      %v340 = vlaneseq
      %v341 = vshrl.u32 %v340, 7
      %v342 = vsub.s32 %v339, %v341
      %v343 = vrot.slane %v330, %v342
      %v344 = vcombine.high %v343, %v343
      %v346 = vunpack.c.l.s4 1966171168
      %v347 = vunpack.c.0.s8 %v346
      %v348 = vlaneseq
      %v349 = vshrl.u32 %v348, 7
      %v350 = vsub.s32 %v347, %v349
      %v351 = vrot.slane %v343, %v350
      %v353 = vunpack.c.l.s4 1966171168
      %v354 = vunpack.c.0.s8 %v353
      %v355 = vlaneseq
      %v356 = vshrl.u32 %v355, 7
      %v357 = vsub.s32 %v354, %v356
      %v358 = vrot.slane %v344, %v357
      %359 = vrot.lane.b32.xlu0 %v351, 127
      %v360 = vpop.permute.xlu0 %359
      %361 = vrot.lane.b32.xlu0 %v358, 127
      %v362 = vpop.permute.xlu0 %361
      %vm363 = vcmask 1039360
      %v364 = vsel %vm363, %v360, %v362
      %vm365 = vcmask 15360
      %v367 = vsel %vm365, %v335, 0
      %vm369 = vcmask 1040384
      %v371 = vsel %vm369, %v364, 0
      %373 = vmatprep.subr.bf16.mxu0 0
      %374 = vmatpush1.bf16.msra.mxu0 %v371
      %375 = vmatprep.subr.bf16.mxu0 0
      %376 = vmatpush1.bf16.msra.mxu0 0
      %377 = vmatprep.subr.bf16.mxu0 0
      %378 = vmatpush1.bf16.msra.mxu0 0
      %379 = vmatprep.subr.bf16.mxu0 0
      %380 = vmatpush1.bf16.msra.mxu0 0
      %381 = vmatprep.subr.bf16.mxu0 0
      %382 = vmatpush1.bf16.msra.mxu0 0
      %383 = vmatprep.subr.bf16.mxu0 0
      %384 = vmatpush1.bf16.msra.mxu0 0
      %385 = vmatprep.subr.bf16.mxu0 0
      %386 = vmatpush1.bf16.msra.mxu0 0
      %387 = vmatprep.subr.bf16.mxu0 0
      %388 = vmatpush1.bf16.msra.mxu0 0
      %389 = vmatprep.subr.bf16.mxu0 0
      %390 = vmatpush1.bf16.msra.mxu0 0
      %391 = vmatprep.subr.bf16.mxu0 0
      %392 = vmatpush1.bf16.msra.mxu0 0
      %393 = vmatprep.subr.bf16.mxu0 0
      %394 = vmatpush1.bf16.msra.mxu0 0
      %395 = vmatprep.subr.bf16.mxu0 0
      %396 = vmatpush1.bf16.msra.mxu0 0
      %397 = vmatprep.subr.bf16.mxu0 0
      %398 = vmatpush1.bf16.msra.mxu0 0
      %399 = vmatprep.subr.bf16.mxu0 0
      %400 = vmatpush1.bf16.msra.mxu0 0
      %401 = vmatprep.subr.bf16.mxu0 0
      %402 = vmatpush1.bf16.msra.mxu0 0
      %403 = vmatprep.subr.bf16.mxu0 0
      %404 = vmatpush1.bf16.msra.mxu0 0
      %405 = vmatprep.mubr.bf16.mxu0 0
      %406 = vmatmul.mubr.bf16.gmra.mrb[0].mxu0 %v367
      %v407 = vpop.f32.mrb[0].mxu0
      %v408 = vadd.f32 0.0, %v407
      %v409 = vpop.f32.mrb[0].mxu0
      %v410 = vpop.f32.mrb[0].mxu0
      %v411 = vadd.f32 0.0, %v410
      %v412 = vpop.f32.mrb[0].mxu0
      %413 = vdwg.mxu0
      %v416 = vunpack.c.l.b16 %v324
      %v417 = vunpack.c.l.b16 %v325
      %v418 = vpack.c.b16 %v417, %v416
      %v420 = vsel %vm365, %v418, 0
      %v423 = vsel %vm369, %v326, 0
      %425 = vmatprep.subr.bf16.mxu0 0
      %426 = vmatpush1.bf16.msra.mxu0 %v423
      %427 = vmatprep.subr.bf16.mxu0 0
      %428 = vmatpush1.bf16.msra.mxu0 0
      %429 = vmatprep.subr.bf16.mxu0 0
      %430 = vmatpush1.bf16.msra.mxu0 0
      %431 = vmatprep.subr.bf16.mxu0 0
      %432 = vmatpush1.bf16.msra.mxu0 0
      %433 = vmatprep.subr.bf16.mxu0 0
      %434 = vmatpush1.bf16.msra.mxu0 0
      %435 = vmatprep.subr.bf16.mxu0 0
      %436 = vmatpush1.bf16.msra.mxu0 0
      %437 = vmatprep.subr.bf16.mxu0 0
      %438 = vmatpush1.bf16.msra.mxu0 0
      %439 = vmatprep.subr.bf16.mxu0 0
      %440 = vmatpush1.bf16.msra.mxu0 0
      %441 = vmatprep.subr.bf16.mxu0 0
      %442 = vmatpush1.bf16.msra.mxu0 0
      %443 = vmatprep.subr.bf16.mxu0 0
      %444 = vmatpush1.bf16.msra.mxu0 0
      %445 = vmatprep.subr.bf16.mxu0 0
      %446 = vmatpush1.bf16.msra.mxu0 0
      %447 = vmatprep.subr.bf16.mxu0 0
      %448 = vmatpush1.bf16.msra.mxu0 0
      %449 = vmatprep.subr.bf16.mxu0 0
      %450 = vmatpush1.bf16.msra.mxu0 0
      %451 = vmatprep.subr.bf16.mxu0 0
      %452 = vmatpush1.bf16.msra.mxu0 0
      %453 = vmatprep.subr.bf16.mxu0 0
      %454 = vmatpush1.bf16.msra.mxu0 0
      %455 = vmatprep.subr.bf16.mxu0 0
      %456 = vmatpush1.bf16.msra.mxu0 0
      %457 = vmatprep.mubr.bf16.mxu0 0
      %458 = vmatmul.mubr.bf16.gmra.mrb[0].mxu0 %v420
      %v459 = vpop.f32.mrb[0].mxu0
      %v460 = vadd.f32 %v408, %v459
      %v461 = vpop.f32.mrb[0].mxu0
      %v462 = vpop.f32.mrb[0].mxu0
      %v463 = vadd.f32 %v411, %v462
      %v464 = vpop.f32.mrb[0].mxu0
      %465 = vdwg.mxu0
      %s466 = scalar_lea.vmem %s284, 16
      %v467 = vld [vmem:[%s466] sm:$0xf]
      %v468 = vld [vmem:[%s466 + $0x4] sm:$0xf]
      %v469 = vld [vmem:[#allocation2] sm:$0x3]
      %v472 = vunpack.c.l.b16 %v467
      %v473 = vunpack.c.l.b16 %v468
      %v474 = vpack.c.b16 %v473, %v472
      %v477 = vunpack.c.l.s4 1966171168
      %v478 = vunpack.c.0.s8 %v477
      %v479 = vlaneseq
      %v480 = vshrl.u32 %v479, 7
      %v481 = vsub.s32 %v478, %v480
      %v482 = vrot.slane %v469, %v481
      %v483 = vcombine.high %v482, %v482
      %v485 = vunpack.c.l.s4 1966171168
      %v486 = vunpack.c.0.s8 %v485
      %v487 = vlaneseq
      %v488 = vshrl.u32 %v487, 7
      %v489 = vsub.s32 %v486, %v488
      %v490 = vrot.slane %v482, %v489
      %v492 = vunpack.c.l.s4 1966171168
      %v493 = vunpack.c.0.s8 %v492
      %v494 = vlaneseq
      %v495 = vshrl.u32 %v494, 7
      %v496 = vsub.s32 %v493, %v495
      %v497 = vrot.slane %v483, %v496
      %498 = vrot.lane.b32.xlu0 %v490, 126
      %v499 = vpop.permute.xlu0 %498
      %500 = vrot.lane.b32.xlu0 %v497, 126
      %v501 = vpop.permute.xlu0 %500
      %vm502 = vcmask 1031168
      %v503 = vsel %vm502, %v499, %v501
      %v505 = vsel %vm365, %v474, 0
      %v508 = vsel %vm369, %v503, 0
      %510 = vmatprep.subr.bf16.mxu0 0
      %511 = vmatpush1.bf16.msra.mxu0 %v508
      %512 = vmatprep.subr.bf16.mxu0 0
      %513 = vmatpush1.bf16.msra.mxu0 0
      %514 = vmatprep.subr.bf16.mxu0 0
      %515 = vmatpush1.bf16.msra.mxu0 0
      %516 = vmatprep.subr.bf16.mxu0 0
      %517 = vmatpush1.bf16.msra.mxu0 0
      %518 = vmatprep.subr.bf16.mxu0 0
      %519 = vmatpush1.bf16.msra.mxu0 0
      %520 = vmatprep.subr.bf16.mxu0 0
      %521 = vmatpush1.bf16.msra.mxu0 0
      %522 = vmatprep.subr.bf16.mxu0 0
      %523 = vmatpush1.bf16.msra.mxu0 0
      %524 = vmatprep.subr.bf16.mxu0 0
      %525 = vmatpush1.bf16.msra.mxu0 0
      %526 = vmatprep.subr.bf16.mxu0 0
      %527 = vmatpush1.bf16.msra.mxu0 0
      %528 = vmatprep.subr.bf16.mxu0 0
      %529 = vmatpush1.bf16.msra.mxu0 0
      %530 = vmatprep.subr.bf16.mxu0 0
      %531 = vmatpush1.bf16.msra.mxu0 0
      %532 = vmatprep.subr.bf16.mxu0 0
      %533 = vmatpush1.bf16.msra.mxu0 0
      %534 = vmatprep.subr.bf16.mxu0 0
      %535 = vmatpush1.bf16.msra.mxu0 0
      %536 = vmatprep.subr.bf16.mxu0 0
      %537 = vmatpush1.bf16.msra.mxu0 0
      %538 = vmatprep.subr.bf16.mxu0 0
      %539 = vmatpush1.bf16.msra.mxu0 0
      %540 = vmatprep.subr.bf16.mxu0 0
      %541 = vmatpush1.bf16.msra.mxu0 0
      %542 = vmatprep.mubr.bf16.mxu0 0
      %543 = vmatmul.mubr.bf16.gmra.mrb[0].mxu0 %v505
      %v544 = vpop.f32.mrb[0].mxu0
      %v545 = vadd.f32 0.0, %v544
      %v546 = vpop.f32.mrb[0].mxu0
      %v547 = vpop.f32.mrb[0].mxu0
      %v548 = vadd.f32 0.0, %v547
      %v549 = vpop.f32.mrb[0].mxu0
      %550 = vdwg.mxu0
      %v551 = vadd.f32 %v460, %v545
      %v552 = vadd.f32 %v463, %v548
      %s553 = scalar_lea.vmem %s284, 24
      %v554 = vld [vmem:[%s553] sm:$0xf]
      %v555 = vld [vmem:[%s553 + $0x4] sm:$0xf]
      %v556 = vld [vmem:[#allocation2] sm:$0x3]
      %v559 = vunpack.c.l.b16 %v554
      %v560 = vunpack.c.l.b16 %v555
      %v561 = vpack.c.b16 %v560, %v559
      %v564 = vunpack.c.l.s4 1966171168
      %v565 = vunpack.c.0.s8 %v564
      %v566 = vlaneseq
      %v567 = vshrl.u32 %v566, 7
      %v568 = vsub.s32 %v565, %v567
      %v569 = vrot.slane %v556, %v568
      %v570 = vcombine.high %v569, %v569
      %v572 = vunpack.c.l.s4 1966171168
      %v573 = vunpack.c.0.s8 %v572
      %v574 = vlaneseq
      %v575 = vshrl.u32 %v574, 7
      %v576 = vsub.s32 %v573, %v575
      %v577 = vrot.slane %v569, %v576
      %v579 = vunpack.c.l.s4 1966171168
      %v580 = vunpack.c.0.s8 %v579
      %v581 = vlaneseq
      %v582 = vshrl.u32 %v581, 7
      %v583 = vsub.s32 %v580, %v582
      %v584 = vrot.slane %v570, %v583
      %585 = vrot.lane.b32.xlu0 %v577, 125
      %v586 = vpop.permute.xlu0 %585
      %587 = vrot.lane.b32.xlu0 %v584, 125
      %v588 = vpop.permute.xlu0 %587
      %vm589 = vcmask 1022976
      %v590 = vsel %vm589, %v586, %v588
      %v592 = vsel %vm365, %v561, 0
      %v595 = vsel %vm369, %v590, 0
      %597 = vmatprep.subr.bf16.mxu0 0
      %598 = vmatpush1.bf16.msra.mxu0 %v595
      %599 = vmatprep.subr.bf16.mxu0 0
      %600 = vmatpush1.bf16.msra.mxu0 0
      %601 = vmatprep.subr.bf16.mxu0 0
      %602 = vmatpush1.bf16.msra.mxu0 0
      %603 = vmatprep.subr.bf16.mxu0 0
      %604 = vmatpush1.bf16.msra.mxu0 0
      %605 = vmatprep.subr.bf16.mxu0 0
      %606 = vmatpush1.bf16.msra.mxu0 0
      %607 = vmatprep.subr.bf16.mxu0 0
      %608 = vmatpush1.bf16.msra.mxu0 0
      %609 = vmatprep.subr.bf16.mxu0 0
      %610 = vmatpush1.bf16.msra.mxu0 0
      %611 = vmatprep.subr.bf16.mxu0 0
      %612 = vmatpush1.bf16.msra.mxu0 0
      %613 = vmatprep.subr.bf16.mxu0 0
      %614 = vmatpush1.bf16.msra.mxu0 0
      %615 = vmatprep.subr.bf16.mxu0 0
      %616 = vmatpush1.bf16.msra.mxu0 0
      %617 = vmatprep.subr.bf16.mxu0 0
      %618 = vmatpush1.bf16.msra.mxu0 0
      %619 = vmatprep.subr.bf16.mxu0 0
      %620 = vmatpush1.bf16.msra.mxu0 0
      %621 = vmatprep.subr.bf16.mxu0 0
      %622 = vmatpush1.bf16.msra.mxu0 0
      %623 = vmatprep.subr.bf16.mxu0 0
      %624 = vmatpush1.bf16.msra.mxu0 0
      %625 = vmatprep.subr.bf16.mxu0 0
      %626 = vmatpush1.bf16.msra.mxu0 0
      %627 = vmatprep.subr.bf16.mxu0 0
      %628 = vmatpush1.bf16.msra.mxu0 0
      %629 = vmatprep.mubr.bf16.mxu0 0
      %630 = vmatmul.mubr.bf16.gmra.mrb[0].mxu0 %v592
      %v631 = vpop.f32.mrb[0].mxu0
      %v632 = vadd.f32 0.0, %v631
      %v633 = vpop.f32.mrb[0].mxu0
      %v634 = vpop.f32.mrb[0].mxu0
      %v635 = vadd.f32 0.0, %v634
      %v636 = vpop.f32.mrb[0].mxu0
      %637 = vdwg.mxu0
      %v638 = vadd.f32 %v551, %v632
      %v639 = vadd.f32 %v552, %v635
      %s640 = scalar_lea.vmem %s284, 32
      %v641 = vld [vmem:[%s640] sm:$0xf]
      %v642 = vld [vmem:[%s640 + $0x4] sm:$0xf]
      %v643 = vld [vmem:[#allocation2] sm:$0x3]
      %v646 = vunpack.c.l.b16 %v641
      %v647 = vunpack.c.l.b16 %v642
      %v648 = vpack.c.b16 %v647, %v646
      %v651 = vunpack.c.l.s4 1966171168
      %v652 = vunpack.c.0.s8 %v651
      %v653 = vlaneseq
      %v654 = vshrl.u32 %v653, 7
      %v655 = vsub.s32 %v652, %v654
      %v656 = vrot.slane %v643, %v655
      %v657 = vcombine.high %v656, %v656
      %v659 = vunpack.c.l.s4 1966171168
      %v660 = vunpack.c.0.s8 %v659
      %v661 = vlaneseq
      %v662 = vshrl.u32 %v661, 7
      %v663 = vsub.s32 %v660, %v662
      %v664 = vrot.slane %v656, %v663
      %v666 = vunpack.c.l.s4 1966171168
      %v667 = vunpack.c.0.s8 %v666
      %v668 = vlaneseq
      %v669 = vshrl.u32 %v668, 7
      %v670 = vsub.s32 %v667, %v669
      %v671 = vrot.slane %v657, %v670
      %672 = vrot.lane.b32.xlu0 %v664, 124
      %v673 = vpop.permute.xlu0 %672
      %674 = vrot.lane.b32.xlu0 %v671, 124
      %v675 = vpop.permute.xlu0 %674
      %vm676 = vcmask 1014784
      %v677 = vsel %vm676, %v673, %v675
      %v679 = vsel %vm365, %v648, 0
      %v682 = vsel %vm369, %v677, 0
      %684 = vmatprep.subr.bf16.mxu0 0
      %685 = vmatpush1.bf16.msra.mxu0 %v682
      %686 = vmatprep.subr.bf16.mxu0 0
      %687 = vmatpush1.bf16.msra.mxu0 0
      %688 = vmatprep.subr.bf16.mxu0 0
      %689 = vmatpush1.bf16.msra.mxu0 0
      %690 = vmatprep.subr.bf16.mxu0 0
      %691 = vmatpush1.bf16.msra.mxu0 0
      %692 = vmatprep.subr.bf16.mxu0 0
      %693 = vmatpush1.bf16.msra.mxu0 0
      %694 = vmatprep.subr.bf16.mxu0 0
      %695 = vmatpush1.bf16.msra.mxu0 0
      %696 = vmatprep.subr.bf16.mxu0 0
      %697 = vmatpush1.bf16.msra.mxu0 0
      %698 = vmatprep.subr.bf16.mxu0 0
      %699 = vmatpush1.bf16.msra.mxu0 0
      %700 = vmatprep.subr.bf16.mxu0 0
      %701 = vmatpush1.bf16.msra.mxu0 0
      %702 = vmatprep.subr.bf16.mxu0 0
      %703 = vmatpush1.bf16.msra.mxu0 0
      %704 = vmatprep.subr.bf16.mxu0 0
      %705 = vmatpush1.bf16.msra.mxu0 0
      %706 = vmatprep.subr.bf16.mxu0 0
      %707 = vmatpush1.bf16.msra.mxu0 0
      %708 = vmatprep.subr.bf16.mxu0 0
      %709 = vmatpush1.bf16.msra.mxu0 0
      %710 = vmatprep.subr.bf16.mxu0 0
      %711 = vmatpush1.bf16.msra.mxu0 0
      %712 = vmatprep.subr.bf16.mxu0 0
      %713 = vmatpush1.bf16.msra.mxu0 0
      %714 = vmatprep.subr.bf16.mxu0 0
      %715 = vmatpush1.bf16.msra.mxu0 0
      %716 = vmatprep.mubr.bf16.mxu0 0
      %717 = vmatmul.mubr.bf16.gmra.mrb[0].mxu0 %v679
      %v718 = vpop.f32.mrb[0].mxu0
      %v719 = vadd.f32 0.0, %v718
      %v720 = vpop.f32.mrb[0].mxu0
      %v721 = vpop.f32.mrb[0].mxu0
      %v722 = vadd.f32 0.0, %v721
      %v723 = vpop.f32.mrb[0].mxu0
      %724 = vdwg.mxu0
      %v725 = vadd.f32 %v638, %v719
      %v726 = vadd.f32 %v639, %v722
      %s727 = scalar_lea.vmem %s284, 40
      %v728 = vld [vmem:[%s727] sm:$0xf]
      %v729 = vld [vmem:[%s727 + $0x4] sm:$0xf]
      %v730 = vld [vmem:[#allocation2] sm:$0x3]
      %v733 = vunpack.c.l.b16 %v728
      %v734 = vunpack.c.l.b16 %v729
      %v735 = vpack.c.b16 %v734, %v733
      %v738 = vunpack.c.l.s4 1966171168
      %v739 = vunpack.c.0.s8 %v738
      %v740 = vlaneseq
      %v741 = vshrl.u32 %v740, 7
      %v742 = vsub.s32 %v739, %v741
      %v743 = vrot.slane %v730, %v742
      %v744 = vcombine.high %v743, %v743
      %v746 = vunpack.c.l.s4 1966171168
      %v747 = vunpack.c.0.s8 %v746
      %v748 = vlaneseq
      %v749 = vshrl.u32 %v748, 7
      %v750 = vsub.s32 %v747, %v749
      %v751 = vrot.slane %v743, %v750
      %v753 = vunpack.c.l.s4 1966171168
      %v754 = vunpack.c.0.s8 %v753
      %v755 = vlaneseq
      %v756 = vshrl.u32 %v755, 7
      %v757 = vsub.s32 %v754, %v756
      %v758 = vrot.slane %v744, %v757
      %759 = vrot.lane.b32.xlu0 %v751, 123
      %v760 = vpop.permute.xlu0 %759
      %761 = vrot.lane.b32.xlu0 %v758, 123
      %v762 = vpop.permute.xlu0 %761
      %vm763 = vcmask 1006592
      %v764 = vsel %vm763, %v760, %v762
      %v766 = vsel %vm365, %v735, 0
      %v769 = vsel %vm369, %v764, 0
      %771 = vmatprep.subr.bf16.mxu0 0
      %772 = vmatpush1.bf16.msra.mxu0 %v769
      %773 = vmatprep.subr.bf16.mxu0 0
      %774 = vmatpush1.bf16.msra.mxu0 0
      %775 = vmatprep.subr.bf16.mxu0 0
      %776 = vmatpush1.bf16.msra.mxu0 0
      %777 = vmatprep.subr.bf16.mxu0 0
      %778 = vmatpush1.bf16.msra.mxu0 0
      %779 = vmatprep.subr.bf16.mxu0 0
      %780 = vmatpush1.bf16.msra.mxu0 0
      %781 = vmatprep.subr.bf16.mxu0 0
      %782 = vmatpush1.bf16.msra.mxu0 0
      %783 = vmatprep.subr.bf16.mxu0 0
      %784 = vmatpush1.bf16.msra.mxu0 0
      %785 = vmatprep.subr.bf16.mxu0 0
      %786 = vmatpush1.bf16.msra.mxu0 0
      %787 = vmatprep.subr.bf16.mxu0 0
      %788 = vmatpush1.bf16.msra.mxu0 0
      %789 = vmatprep.subr.bf16.mxu0 0
      %790 = vmatpush1.bf16.msra.mxu0 0
      %791 = vmatprep.subr.bf16.mxu0 0
      %792 = vmatpush1.bf16.msra.mxu0 0
      %793 = vmatprep.subr.bf16.mxu0 0
      %794 = vmatpush1.bf16.msra.mxu0 0
      %795 = vmatprep.subr.bf16.mxu0 0
      %796 = vmatpush1.bf16.msra.mxu0 0
      %797 = vmatprep.subr.bf16.mxu0 0
      %798 = vmatpush1.bf16.msra.mxu0 0
      %799 = vmatprep.subr.bf16.mxu0 0
      %800 = vmatpush1.bf16.msra.mxu0 0
      %801 = vmatprep.subr.bf16.mxu0 0
      %802 = vmatpush1.bf16.msra.mxu0 0
      %803 = vmatprep.mubr.bf16.mxu0 0
      %804 = vmatmul.mubr.bf16.gmra.mrb[0].mxu0 %v766
      %v805 = vpop.f32.mrb[0].mxu0
      %v806 = vadd.f32 0.0, %v805
      %v807 = vpop.f32.mrb[0].mxu0
      %v808 = vpop.f32.mrb[0].mxu0
      %v809 = vadd.f32 0.0, %v808
      %v810 = vpop.f32.mrb[0].mxu0
      %811 = vdwg.mxu0
      %v812 = vadd.f32 %v725, %v806
      %v813 = vadd.f32 %v726, %v809
      %s814 = scalar_lea.vmem %s284, 48
      %v815 = vld [vmem:[%s814] sm:$0xf]
      %v816 = vld [vmem:[%s814 + $0x4] sm:$0xf]
      %v817 = vld [vmem:[#allocation2] sm:$0x3]
      %v820 = vunpack.c.l.b16 %v815
      %v821 = vunpack.c.l.b16 %v816
      %v822 = vpack.c.b16 %v821, %v820
      %v825 = vunpack.c.l.s4 1966171168
      %v826 = vunpack.c.0.s8 %v825
      %v827 = vlaneseq
      %v828 = vshrl.u32 %v827, 7
      %v829 = vsub.s32 %v826, %v828
      %v830 = vrot.slane %v817, %v829
      %v831 = vcombine.high %v830, %v830
      %v833 = vunpack.c.l.s4 1966171168
      %v834 = vunpack.c.0.s8 %v833
      %v835 = vlaneseq
      %v836 = vshrl.u32 %v835, 7
      %v837 = vsub.s32 %v834, %v836
      %v838 = vrot.slane %v830, %v837
      %v840 = vunpack.c.l.s4 1966171168
      %v841 = vunpack.c.0.s8 %v840
      %v842 = vlaneseq
      %v843 = vshrl.u32 %v842, 7
      %v844 = vsub.s32 %v841, %v843
      %v845 = vrot.slane %v831, %v844
      %846 = vrot.lane.b32.xlu0 %v838, 122
      %v847 = vpop.permute.xlu0 %846
      %848 = vrot.lane.b32.xlu0 %v845, 122
      %v849 = vpop.permute.xlu0 %848
      %vm850 = vcmask 998400
      %v851 = vsel %vm850, %v847, %v849
      %v853 = vsel %vm365, %v822, 0
      %v856 = vsel %vm369, %v851, 0
      %858 = vmatprep.subr.bf16.mxu0 0
      %859 = vmatpush1.bf16.msra.mxu0 %v856
      %860 = vmatprep.subr.bf16.mxu0 0
      %861 = vmatpush1.bf16.msra.mxu0 0
      %862 = vmatprep.subr.bf16.mxu0 0
      %863 = vmatpush1.bf16.msra.mxu0 0
      %864 = vmatprep.subr.bf16.mxu0 0
      %865 = vmatpush1.bf16.msra.mxu0 0
      %866 = vmatprep.subr.bf16.mxu0 0
      %867 = vmatpush1.bf16.msra.mxu0 0
      %868 = vmatprep.subr.bf16.mxu0 0
      %869 = vmatpush1.bf16.msra.mxu0 0
      %870 = vmatprep.subr.bf16.mxu0 0
      %871 = vmatpush1.bf16.msra.mxu0 0
      %872 = vmatprep.subr.bf16.mxu0 0
      %873 = vmatpush1.bf16.msra.mxu0 0
      %874 = vmatprep.subr.bf16.mxu0 0
      %875 = vmatpush1.bf16.msra.mxu0 0
      %876 = vmatprep.subr.bf16.mxu0 0
      %877 = vmatpush1.bf16.msra.mxu0 0
      %878 = vmatprep.subr.bf16.mxu0 0
      %879 = vmatpush1.bf16.msra.mxu0 0
      %880 = vmatprep.subr.bf16.mxu0 0
      %881 = vmatpush1.bf16.msra.mxu0 0
      %882 = vmatprep.subr.bf16.mxu0 0
      %883 = vmatpush1.bf16.msra.mxu0 0
      %884 = vmatprep.subr.bf16.mxu0 0
      %885 = vmatpush1.bf16.msra.mxu0 0
      %886 = vmatprep.subr.bf16.mxu0 0
      %887 = vmatpush1.bf16.msra.mxu0 0
      %888 = vmatprep.subr.bf16.mxu0 0
      %889 = vmatpush1.bf16.msra.mxu0 0
      %890 = vmatprep.mubr.bf16.mxu0 0
      %891 = vmatmul.mubr.bf16.gmra.mrb[0].mxu0 %v853
      %v892 = vpop.f32.mrb[0].mxu0
      %v893 = vadd.f32 0.0, %v892
      %v894 = vpop.f32.mrb[0].mxu0
      %v895 = vpop.f32.mrb[0].mxu0
      %v896 = vadd.f32 0.0, %v895
      %v897 = vpop.f32.mrb[0].mxu0
      %898 = vdwg.mxu0
      %v899 = vadd.f32 %v812, %v893
      %v900 = vadd.f32 %v813, %v896
      %s901 = scalar_lea.vmem %s284, 56
      %v902 = vld [vmem:[%s901] sm:$0xf]
      %v903 = vld [vmem:[%s901 + $0x4] sm:$0xf]
      %v904 = vld [vmem:[#allocation2] sm:$0x3]
      %v907 = vunpack.c.l.b16 %v902
      %v908 = vunpack.c.l.b16 %v903
      %v909 = vpack.c.b16 %v908, %v907
      %v912 = vunpack.c.l.s4 1966171168
      %v913 = vunpack.c.0.s8 %v912
      %v914 = vlaneseq
      %v915 = vshrl.u32 %v914, 7
      %v916 = vsub.s32 %v913, %v915
      %v917 = vrot.slane %v904, %v916
      %v918 = vcombine.high %v917, %v917
      %v920 = vunpack.c.l.s4 1966171168
      %v921 = vunpack.c.0.s8 %v920
      %v922 = vlaneseq
      %v923 = vshrl.u32 %v922, 7
      %v924 = vsub.s32 %v921, %v923
      %v925 = vrot.slane %v917, %v924
      %v927 = vunpack.c.l.s4 1966171168
      %v928 = vunpack.c.0.s8 %v927
      %v929 = vlaneseq
      %v930 = vshrl.u32 %v929, 7
      %v931 = vsub.s32 %v928, %v930
      %v932 = vrot.slane %v918, %v931
      %933 = vrot.lane.b32.xlu0 %v925, 121
      %v934 = vpop.permute.xlu0 %933
      %935 = vrot.lane.b32.xlu0 %v932, 121
      %v936 = vpop.permute.xlu0 %935
      %vm937 = vcmask 990208
      %v938 = vsel %vm937, %v934, %v936
      %v940 = vsel %vm365, %v909, 0
      %v943 = vsel %vm369, %v938, 0
      %945 = vmatprep.subr.bf16.mxu0 0
      %946 = vmatpush1.bf16.msra.mxu0 %v943
      %947 = vmatprep.subr.bf16.mxu0 0
      %948 = vmatpush1.bf16.msra.mxu0 0
      %949 = vmatprep.subr.bf16.mxu0 0
      %950 = vmatpush1.bf16.msra.mxu0 0
      %951 = vmatprep.subr.bf16.mxu0 0
      %952 = vmatpush1.bf16.msra.mxu0 0
      %953 = vmatprep.subr.bf16.mxu0 0
      %954 = vmatpush1.bf16.msra.mxu0 0
      %955 = vmatprep.subr.bf16.mxu0 0
      %956 = vmatpush1.bf16.msra.mxu0 0
      %957 = vmatprep.subr.bf16.mxu0 0
      %958 = vmatpush1.bf16.msra.mxu0 0
      %959 = vmatprep.subr.bf16.mxu0 0
      %960 = vmatpush1.bf16.msra.mxu0 0
      %961 = vmatprep.subr.bf16.mxu0 0
      %962 = vmatpush1.bf16.msra.mxu0 0
      %963 = vmatprep.subr.bf16.mxu0 0
      %964 = vmatpush1.bf16.msra.mxu0 0
      %965 = vmatprep.subr.bf16.mxu0 0
      %966 = vmatpush1.bf16.msra.mxu0 0
      %967 = vmatprep.subr.bf16.mxu0 0
      %968 = vmatpush1.bf16.msra.mxu0 0
      %969 = vmatprep.subr.bf16.mxu0 0
      %970 = vmatpush1.bf16.msra.mxu0 0
      %971 = vmatprep.subr.bf16.mxu0 0
      %972 = vmatpush1.bf16.msra.mxu0 0
      %973 = vmatprep.subr.bf16.mxu0 0
      %974 = vmatpush1.bf16.msra.mxu0 0
      %975 = vmatprep.subr.bf16.mxu0 0
      %976 = vmatpush1.bf16.msra.mxu0 0
      %977 = vmatprep.mubr.bf16.mxu0 0
      %978 = vmatmul.mubr.bf16.gmra.mrb[0].mxu0 %v940
      %v979 = vpop.f32.mrb[0].mxu0
      %v980 = vadd.f32 0.0, %v979
      %v981 = vpop.f32.mrb[0].mxu0
      %v982 = vpop.f32.mrb[0].mxu0
      %v983 = vadd.f32 0.0, %v982
      %v984 = vpop.f32.mrb[0].mxu0
      %985 = vdwg.mxu0
      %v986 = vadd.f32 %v899, %v980
      %v987 = vadd.f32 %v900, %v983
      %s988 = scalar_lea.vmem %s284, 64
      %v989 = vld [vmem:[%s988] sm:$0xf]
      %v990 = vld [vmem:[%s988 + $0x4] sm:$0xf]
      %v991 = vld [vmem:[#allocation2] sm:$0x3]
      %v994 = vunpack.c.l.b16 %v989
      %v995 = vunpack.c.l.b16 %v990
      %v996 = vpack.c.b16 %v995, %v994
      %v999 = vunpack.c.l.s4 1966171168
      %v1000 = vunpack.c.0.s8 %v999
      %v1001 = vlaneseq
      %v1002 = vshrl.u32 %v1001, 7
      %v1003 = vsub.s32 %v1000, %v1002
      %v1004 = vrot.slane %v991, %v1003
      %v1005 = vcombine.high %v1004, %v1004
      %v1007 = vunpack.c.l.s4 1966171168
      %v1008 = vunpack.c.0.s8 %v1007
      %v1009 = vlaneseq
      %v1010 = vshrl.u32 %v1009, 7
      %v1011 = vsub.s32 %v1008, %v1010
      %v1012 = vrot.slane %v1004, %v1011
      %v1014 = vunpack.c.l.s4 1966171168
      %v1015 = vunpack.c.0.s8 %v1014
      %v1016 = vlaneseq
      %v1017 = vshrl.u32 %v1016, 7
      %v1018 = vsub.s32 %v1015, %v1017
      %v1019 = vrot.slane %v1005, %v1018
      %1020 = vrot.lane.b32.xlu0 %v1012, 120
      %v1021 = vpop.permute.xlu0 %1020
      %1022 = vrot.lane.b32.xlu0 %v1019, 120
      %v1023 = vpop.permute.xlu0 %1022
      %vm1024 = vcmask 982016
      %v1025 = vsel %vm1024, %v1021, %v1023
      %v1027 = vsel %vm365, %v996, 0
      %v1030 = vsel %vm369, %v1025, 0
      %1032 = vmatprep.subr.bf16.mxu0 0
      %1033 = vmatpush1.bf16.msra.mxu0 %v1030
      %1034 = vmatprep.subr.bf16.mxu0 0
      %1035 = vmatpush1.bf16.msra.mxu0 0
      %1036 = vmatprep.subr.bf16.mxu0 0
      %1037 = vmatpush1.bf16.msra.mxu0 0
      %1038 = vmatprep.subr.bf16.mxu0 0
      %1039 = vmatpush1.bf16.msra.mxu0 0
      %1040 = vmatprep.subr.bf16.mxu0 0
      %1041 = vmatpush1.bf16.msra.mxu0 0
      %1042 = vmatprep.subr.bf16.mxu0 0
      %1043 = vmatpush1.bf16.msra.mxu0 0
      %1044 = vmatprep.subr.bf16.mxu0 0
      %1045 = vmatpush1.bf16.msra.mxu0 0
      %1046 = vmatprep.subr.bf16.mxu0 0
      %1047 = vmatpush1.bf16.msra.mxu0 0
      %1048 = vmatprep.subr.bf16.mxu0 0
      %1049 = vmatpush1.bf16.msra.mxu0 0
      %1050 = vmatprep.subr.bf16.mxu0 0
      %1051 = vmatpush1.bf16.msra.mxu0 0
      %1052 = vmatprep.subr.bf16.mxu0 0
      %1053 = vmatpush1.bf16.msra.mxu0 0
      %1054 = vmatprep.subr.bf16.mxu0 0
      %1055 = vmatpush1.bf16.msra.mxu0 0
      %1056 = vmatprep.subr.bf16.mxu0 0
      %1057 = vmatpush1.bf16.msra.mxu0 0
      %1058 = vmatprep.subr.bf16.mxu0 0
      %1059 = vmatpush1.bf16.msra.mxu0 0
      %1060 = vmatprep.subr.bf16.mxu0 0
      %1061 = vmatpush1.bf16.msra.mxu0 0
      %1062 = vmatprep.subr.bf16.mxu0 0
      %1063 = vmatpush1.bf16.msra.mxu0 0
      %1064 = vmatprep.mubr.bf16.mxu0 0
      %1065 = vmatmul.mubr.bf16.gmra.mrb[0].mxu0 %v1027
      %v1066 = vpop.f32.mrb[0].mxu0
      %v1067 = vadd.f32 0.0, %v1066
      %v1068 = vpop.f32.mrb[0].mxu0
      %v1069 = vpop.f32.mrb[0].mxu0
      %v1070 = vadd.f32 0.0, %v1069
      %v1071 = vpop.f32.mrb[0].mxu0
      %1072 = vdwg.mxu0
      %v1073 = vadd.f32 %v986, %v1067
      %v1074 = vadd.f32 %v987, %v1070
      %s1075 = scalar_lea.vmem %s284, 72
      %v1076 = vld [vmem:[%s1075] sm:$0xf]
      %v1077 = vld [vmem:[%s1075 + $0x4] sm:$0xf]
      %v1078 = vld [vmem:[#allocation2] sm:$0x3]
      %v1081 = vunpack.c.l.b16 %v1076
      %v1082 = vunpack.c.l.b16 %v1077
      %v1083 = vpack.c.b16 %v1082, %v1081
      %v1086 = vunpack.c.l.s4 1966171168
      %v1087 = vunpack.c.0.s8 %v1086
      %v1088 = vlaneseq
      %v1089 = vshrl.u32 %v1088, 7
      %v1090 = vsub.s32 %v1087, %v1089
      %v1091 = vrot.slane %v1078, %v1090
      %v1092 = vcombine.high %v1091, %v1091
      %v1094 = vunpack.c.l.s4 1966171168
      %v1095 = vunpack.c.0.s8 %v1094
      %v1096 = vlaneseq
      %v1097 = vshrl.u32 %v1096, 7
      %v1098 = vsub.s32 %v1095, %v1097
      %v1099 = vrot.slane %v1091, %v1098
      %v1101 = vunpack.c.l.s4 1966171168
      %v1102 = vunpack.c.0.s8 %v1101
      %v1103 = vlaneseq
      %v1104 = vshrl.u32 %v1103, 7
      %v1105 = vsub.s32 %v1102, %v1104
      %v1106 = vrot.slane %v1092, %v1105
      %1107 = vrot.lane.b32.xlu0 %v1099, 119
      %v1108 = vpop.permute.xlu0 %1107
      %1109 = vrot.lane.b32.xlu0 %v1106, 119
      %v1110 = vpop.permute.xlu0 %1109
      %vm1111 = vcmask 973824
      %v1112 = vsel %vm1111, %v1108, %v1110
      %v1114 = vsel %vm365, %v1083, 0
      %v1117 = vsel %vm369, %v1112, 0
      %1119 = vmatprep.subr.bf16.mxu0 0
      %1120 = vmatpush1.bf16.msra.mxu0 %v1117
      %1121 = vmatprep.subr.bf16.mxu0 0
      %1122 = vmatpush1.bf16.msra.mxu0 0
      %1123 = vmatprep.subr.bf16.mxu0 0
      %1124 = vmatpush1.bf16.msra.mxu0 0
      %1125 = vmatprep.subr.bf16.mxu0 0
      %1126 = vmatpush1.bf16.msra.mxu0 0
      %1127 = vmatprep.subr.bf16.mxu0 0
      %1128 = vmatpush1.bf16.msra.mxu0 0
      %1129 = vmatprep.subr.bf16.mxu0 0
      %1130 = vmatpush1.bf16.msra.mxu0 0
      %1131 = vmatprep.subr.bf16.mxu0 0
      %1132 = vmatpush1.bf16.msra.mxu0 0
      %1133 = vmatprep.subr.bf16.mxu0 0
      %1134 = vmatpush1.bf16.msra.mxu0 0
      %1135 = vmatprep.subr.bf16.mxu0 0
      %1136 = vmatpush1.bf16.msra.mxu0 0
      %1137 = vmatprep.subr.bf16.mxu0 0
      %1138 = vmatpush1.bf16.msra.mxu0 0
      %1139 = vmatprep.subr.bf16.mxu0 0
      %1140 = vmatpush1.bf16.msra.mxu0 0
      %1141 = vmatprep.subr.bf16.mxu0 0
      %1142 = vmatpush1.bf16.msra.mxu0 0
      %1143 = vmatprep.subr.bf16.mxu0 0
      %1144 = vmatpush1.bf16.msra.mxu0 0
      %1145 = vmatprep.subr.bf16.mxu0 0
      %1146 = vmatpush1.bf16.msra.mxu0 0
      %1147 = vmatprep.subr.bf16.mxu0 0
      %1148 = vmatpush1.bf16.msra.mxu0 0
      %1149 = vmatprep.subr.bf16.mxu0 0
      %1150 = vmatpush1.bf16.msra.mxu0 0
      %1151 = vmatprep.mubr.bf16.mxu0 0
      %1152 = vmatmul.mubr.bf16.gmra.mrb[0].mxu0 %v1114
      %v1153 = vpop.f32.mrb[0].mxu0
      %v1154 = vadd.f32 0.0, %v1153
      %v1155 = vpop.f32.mrb[0].mxu0
      %v1156 = vpop.f32.mrb[0].mxu0
      %v1157 = vadd.f32 0.0, %v1156
      %v1158 = vpop.f32.mrb[0].mxu0
      %1159 = vdwg.mxu0
      %v1160 = vadd.f32 %v1073, %v1154
      %v1161 = vadd.f32 %v1074, %v1157
      %s1162 = scalar_lea.vmem %s284, 80
      %v1163 = vld [vmem:[%s1162] sm:$0xf]
      %v1164 = vld [vmem:[%s1162 + $0x4] sm:$0xf]
      %v1165 = vld [vmem:[#allocation2] sm:$0x3]
      %v1168 = vunpack.c.l.b16 %v1163
      %v1169 = vunpack.c.l.b16 %v1164
      %v1170 = vpack.c.b16 %v1169, %v1168
      %v1173 = vunpack.c.l.s4 1966171168
      %v1174 = vunpack.c.0.s8 %v1173
      %v1175 = vlaneseq
      %v1176 = vshrl.u32 %v1175, 7
      %v1177 = vsub.s32 %v1174, %v1176
      %v1178 = vrot.slane %v1165, %v1177
      %v1179 = vcombine.high %v1178, %v1178
      %v1181 = vunpack.c.l.s4 1966171168
      %v1182 = vunpack.c.0.s8 %v1181
      %v1183 = vlaneseq
      %v1184 = vshrl.u32 %v1183, 7
      %v1185 = vsub.s32 %v1182, %v1184
      %v1186 = vrot.slane %v1178, %v1185
      %v1188 = vunpack.c.l.s4 1966171168
      %v1189 = vunpack.c.0.s8 %v1188
      %v1190 = vlaneseq
      %v1191 = vshrl.u32 %v1190, 7
      %v1192 = vsub.s32 %v1189, %v1191
      %v1193 = vrot.slane %v1179, %v1192
      %1194 = vrot.lane.b32.xlu0 %v1186, 118
      %v1195 = vpop.permute.xlu0 %1194
      %1196 = vrot.lane.b32.xlu0 %v1193, 118
      %v1197 = vpop.permute.xlu0 %1196
      %vm1198 = vcmask 965632
      %v1199 = vsel %vm1198, %v1195, %v1197
      %v1201 = vsel %vm365, %v1170, 0
      %v1204 = vsel %vm369, %v1199, 0
      %1206 = vmatprep.subr.bf16.mxu0 0
      %1207 = vmatpush1.bf16.msra.mxu0 %v1204
      %1208 = vmatprep.subr.bf16.mxu0 0
      %1209 = vmatpush1.bf16.msra.mxu0 0
      %1210 = vmatprep.subr.bf16.mxu0 0
      %1211 = vmatpush1.bf16.msra.mxu0 0
      %1212 = vmatprep.subr.bf16.mxu0 0
      %1213 = vmatpush1.bf16.msra.mxu0 0
      %1214 = vmatprep.subr.bf16.mxu0 0
      %1215 = vmatpush1.bf16.msra.mxu0 0
      %1216 = vmatprep.subr.bf16.mxu0 0
      %1217 = vmatpush1.bf16.msra.mxu0 0
      %1218 = vmatprep.subr.bf16.mxu0 0
      %1219 = vmatpush1.bf16.msra.mxu0 0
      %1220 = vmatprep.subr.bf16.mxu0 0
      %1221 = vmatpush1.bf16.msra.mxu0 0
      %1222 = vmatprep.subr.bf16.mxu0 0
      %1223 = vmatpush1.bf16.msra.mxu0 0
      %1224 = vmatprep.subr.bf16.mxu0 0
      %1225 = vmatpush1.bf16.msra.mxu0 0
      %1226 = vmatprep.subr.bf16.mxu0 0
      %1227 = vmatpush1.bf16.msra.mxu0 0
      %1228 = vmatprep.subr.bf16.mxu0 0
      %1229 = vmatpush1.bf16.msra.mxu0 0
      %1230 = vmatprep.subr.bf16.mxu0 0
      %1231 = vmatpush1.bf16.msra.mxu0 0
      %1232 = vmatprep.subr.bf16.mxu0 0
      %1233 = vmatpush1.bf16.msra.mxu0 0
      %1234 = vmatprep.subr.bf16.mxu0 0
      %1235 = vmatpush1.bf16.msra.mxu0 0
      %1236 = vmatprep.subr.bf16.mxu0 0
      %1237 = vmatpush1.bf16.msra.mxu0 0
      %1238 = vmatprep.mubr.bf16.mxu0 0
      %1239 = vmatmul.mubr.bf16.gmra.mrb[0].mxu0 %v1201
      %v1240 = vpop.f32.mrb[0].mxu0
      %v1241 = vadd.f32 0.0, %v1240
      %v1242 = vpop.f32.mrb[0].mxu0
      %v1243 = vpop.f32.mrb[0].mxu0
      %v1244 = vadd.f32 0.0, %v1243
      %v1245 = vpop.f32.mrb[0].mxu0
      %1246 = vdwg.mxu0
      %v1247 = vadd.f32 %v1160, %v1241
      %v1248 = vadd.f32 %v1161, %v1244
      %s1249 = scalar_lea.vmem %s284, 88
      %v1250 = vld [vmem:[%s1249] sm:$0xf]
      %v1251 = vld [vmem:[%s1249 + $0x4] sm:$0xf]
      %v1252 = vld [vmem:[#allocation2] sm:$0x3]
      %v1255 = vunpack.c.l.b16 %v1250
      %v1256 = vunpack.c.l.b16 %v1251
      %v1257 = vpack.c.b16 %v1256, %v1255
      %v1260 = vunpack.c.l.s4 1966171168
      %v1261 = vunpack.c.0.s8 %v1260
      %v1262 = vlaneseq
      %v1263 = vshrl.u32 %v1262, 7
      %v1264 = vsub.s32 %v1261, %v1263
      %v1265 = vrot.slane %v1252, %v1264
      %v1266 = vcombine.high %v1265, %v1265
      %v1268 = vunpack.c.l.s4 1966171168
      %v1269 = vunpack.c.0.s8 %v1268
      %v1270 = vlaneseq
      %v1271 = vshrl.u32 %v1270, 7
      %v1272 = vsub.s32 %v1269, %v1271
      %v1273 = vrot.slane %v1265, %v1272
      %v1275 = vunpack.c.l.s4 1966171168
      %v1276 = vunpack.c.0.s8 %v1275
      %v1277 = vlaneseq
      %v1278 = vshrl.u32 %v1277, 7
      %v1279 = vsub.s32 %v1276, %v1278
      %v1280 = vrot.slane %v1266, %v1279
      %1281 = vrot.lane.b32.xlu0 %v1273, 117
      %v1282 = vpop.permute.xlu0 %1281
      %1283 = vrot.lane.b32.xlu0 %v1280, 117
      %v1284 = vpop.permute.xlu0 %1283
      %vm1285 = vcmask 957440
      %v1286 = vsel %vm1285, %v1282, %v1284
      %v1288 = vsel %vm365, %v1257, 0
      %v1291 = vsel %vm369, %v1286, 0
      %1293 = vmatprep.subr.bf16.mxu0 0
      %1294 = vmatpush1.bf16.msra.mxu0 %v1291
      %1295 = vmatprep.subr.bf16.mxu0 0
      %1296 = vmatpush1.bf16.msra.mxu0 0
      %1297 = vmatprep.subr.bf16.mxu0 0
      %1298 = vmatpush1.bf16.msra.mxu0 0
      %1299 = vmatprep.subr.bf16.mxu0 0
      %1300 = vmatpush1.bf16.msra.mxu0 0
      %1301 = vmatprep.subr.bf16.mxu0 0
      %1302 = vmatpush1.bf16.msra.mxu0 0
      %1303 = vmatprep.subr.bf16.mxu0 0
      %1304 = vmatpush1.bf16.msra.mxu0 0
      %1305 = vmatprep.subr.bf16.mxu0 0
      %1306 = vmatpush1.bf16.msra.mxu0 0
      %1307 = vmatprep.subr.bf16.mxu0 0
      %1308 = vmatpush1.bf16.msra.mxu0 0
      %1309 = vmatprep.subr.bf16.mxu0 0
      %1310 = vmatpush1.bf16.msra.mxu0 0
      %1311 = vmatprep.subr.bf16.mxu0 0
      %1312 = vmatpush1.bf16.msra.mxu0 0
      %1313 = vmatprep.subr.bf16.mxu0 0
      %1314 = vmatpush1.bf16.msra.mxu0 0
      %1315 = vmatprep.subr.bf16.mxu0 0
      %1316 = vmatpush1.bf16.msra.mxu0 0
      %1317 = vmatprep.subr.bf16.mxu0 0
      %1318 = vmatpush1.bf16.msra.mxu0 0
      %1319 = vmatprep.subr.bf16.mxu0 0
      %1320 = vmatpush1.bf16.msra.mxu0 0
      %1321 = vmatprep.subr.bf16.mxu0 0
      %1322 = vmatpush1.bf16.msra.mxu0 0
      %1323 = vmatprep.subr.bf16.mxu0 0
      %1324 = vmatpush1.bf16.msra.mxu0 0
      %1325 = vmatprep.mubr.bf16.mxu0 0
      %1326 = vmatmul.mubr.bf16.gmra.mrb[0].mxu0 %v1288
      %v1327 = vpop.f32.mrb[0].mxu0
      %v1328 = vadd.f32 0.0, %v1327
      %v1329 = vpop.f32.mrb[0].mxu0
      %v1330 = vpop.f32.mrb[0].mxu0
      %v1331 = vadd.f32 0.0, %v1330
      %v1332 = vpop.f32.mrb[0].mxu0
      %1333 = vdwg.mxu0
      %v1334 = vadd.f32 %v1247, %v1328
      %v1335 = vadd.f32 %v1248, %v1331
      %s1336 = scalar_lea.vmem %s284, 96
      %v1337 = vld [vmem:[%s1336] sm:$0xf]
      %v1338 = vld [vmem:[%s1336 + $0x4] sm:$0xf]
      %v1339 = vld [vmem:[#allocation2] sm:$0x3]
      %v1342 = vunpack.c.l.b16 %v1337
      %v1343 = vunpack.c.l.b16 %v1338
      %v1344 = vpack.c.b16 %v1343, %v1342
      %v1347 = vunpack.c.l.s4 1966171168
      %v1348 = vunpack.c.0.s8 %v1347
      %v1349 = vlaneseq
      %v1350 = vshrl.u32 %v1349, 7
      %v1351 = vsub.s32 %v1348, %v1350
      %v1352 = vrot.slane %v1339, %v1351
      %v1353 = vcombine.high %v1352, %v1352
      %v1355 = vunpack.c.l.s4 1966171168
      %v1356 = vunpack.c.0.s8 %v1355
      %v1357 = vlaneseq
      %v1358 = vshrl.u32 %v1357, 7
      %v1359 = vsub.s32 %v1356, %v1358
      %v1360 = vrot.slane %v1352, %v1359
      %v1362 = vunpack.c.l.s4 1966171168
      %v1363 = vunpack.c.0.s8 %v1362
      %v1364 = vlaneseq
      %v1365 = vshrl.u32 %v1364, 7
      %v1366 = vsub.s32 %v1363, %v1365
      %v1367 = vrot.slane %v1353, %v1366
      %1368 = vrot.lane.b32.xlu0 %v1360, 116
      %v1369 = vpop.permute.xlu0 %1368
      %1370 = vrot.lane.b32.xlu0 %v1367, 116
      %v1371 = vpop.permute.xlu0 %1370
      %vm1372 = vcmask 949248
      %v1373 = vsel %vm1372, %v1369, %v1371
      %v1375 = vsel %vm365, %v1344, 0
      %v1378 = vsel %vm369, %v1373, 0
      %1380 = vmatprep.subr.bf16.mxu0 0
      %1381 = vmatpush1.bf16.msra.mxu0 %v1378
      %1382 = vmatprep.subr.bf16.mxu0 0
      %1383 = vmatpush1.bf16.msra.mxu0 0
      %1384 = vmatprep.subr.bf16.mxu0 0
      %1385 = vmatpush1.bf16.msra.mxu0 0
      %1386 = vmatprep.subr.bf16.mxu0 0
      %1387 = vmatpush1.bf16.msra.mxu0 0
      %1388 = vmatprep.subr.bf16.mxu0 0
      %1389 = vmatpush1.bf16.msra.mxu0 0
      %1390 = vmatprep.subr.bf16.mxu0 0
      %1391 = vmatpush1.bf16.msra.mxu0 0
      %1392 = vmatprep.subr.bf16.mxu0 0
      %1393 = vmatpush1.bf16.msra.mxu0 0
      %1394 = vmatprep.subr.bf16.mxu0 0
      %1395 = vmatpush1.bf16.msra.mxu0 0
      %1396 = vmatprep.subr.bf16.mxu0 0
      %1397 = vmatpush1.bf16.msra.mxu0 0
      %1398 = vmatprep.subr.bf16.mxu0 0
      %1399 = vmatpush1.bf16.msra.mxu0 0
      %1400 = vmatprep.subr.bf16.mxu0 0
      %1401 = vmatpush1.bf16.msra.mxu0 0
      %1402 = vmatprep.subr.bf16.mxu0 0
      %1403 = vmatpush1.bf16.msra.mxu0 0
      %1404 = vmatprep.subr.bf16.mxu0 0
      %1405 = vmatpush1.bf16.msra.mxu0 0
      %1406 = vmatprep.subr.bf16.mxu0 0
      %1407 = vmatpush1.bf16.msra.mxu0 0
      %1408 = vmatprep.subr.bf16.mxu0 0
      %1409 = vmatpush1.bf16.msra.mxu0 0
      %1410 = vmatprep.subr.bf16.mxu0 0
      %1411 = vmatpush1.bf16.msra.mxu0 0
      %1412 = vmatprep.mubr.bf16.mxu0 0
      %1413 = vmatmul.mubr.bf16.gmra.mrb[0].mxu0 %v1375
      %v1414 = vpop.f32.mrb[0].mxu0
      %v1415 = vadd.f32 0.0, %v1414
      %v1416 = vpop.f32.mrb[0].mxu0
      %v1417 = vpop.f32.mrb[0].mxu0
      %v1418 = vadd.f32 0.0, %v1417
      %v1419 = vpop.f32.mrb[0].mxu0
      %1420 = vdwg.mxu0
      %v1421 = vadd.f32 %v1334, %v1415
      %v1422 = vadd.f32 %v1335, %v1418
      %s1423 = scalar_lea.vmem %s284, 104
      %v1424 = vld [vmem:[%s1423] sm:$0xf]
      %v1425 = vld [vmem:[%s1423 + $0x4] sm:$0xf]
      %v1426 = vld [vmem:[#allocation2] sm:$0x3]
      %v1429 = vunpack.c.l.b16 %v1424
      %v1430 = vunpack.c.l.b16 %v1425
      %v1431 = vpack.c.b16 %v1430, %v1429
      %v1434 = vunpack.c.l.s4 1966171168
      %v1435 = vunpack.c.0.s8 %v1434
      %v1436 = vlaneseq
      %v1437 = vshrl.u32 %v1436, 7
      %v1438 = vsub.s32 %v1435, %v1437
      %v1439 = vrot.slane %v1426, %v1438
      %v1440 = vcombine.high %v1439, %v1439
      %v1442 = vunpack.c.l.s4 1966171168
      %v1443 = vunpack.c.0.s8 %v1442
      %v1444 = vlaneseq
      %v1445 = vshrl.u32 %v1444, 7
      %v1446 = vsub.s32 %v1443, %v1445
      %v1447 = vrot.slane %v1439, %v1446
      %v1449 = vunpack.c.l.s4 1966171168
      %v1450 = vunpack.c.0.s8 %v1449
      %v1451 = vlaneseq
      %v1452 = vshrl.u32 %v1451, 7
      %v1453 = vsub.s32 %v1450, %v1452
      %v1454 = vrot.slane %v1440, %v1453
      %1455 = vrot.lane.b32.xlu0 %v1447, 115
      %v1456 = vpop.permute.xlu0 %1455
      %1457 = vrot.lane.b32.xlu0 %v1454, 115
      %v1458 = vpop.permute.xlu0 %1457
      %vm1459 = vcmask 941056
      %v1460 = vsel %vm1459, %v1456, %v1458
      %v1462 = vsel %vm365, %v1431, 0
      %v1465 = vsel %vm369, %v1460, 0
      %1467 = vmatprep.subr.bf16.mxu0 0
      %1468 = vmatpush1.bf16.msra.mxu0 %v1465
      %1469 = vmatprep.subr.bf16.mxu0 0
      %1470 = vmatpush1.bf16.msra.mxu0 0
      %1471 = vmatprep.subr.bf16.mxu0 0
      %1472 = vmatpush1.bf16.msra.mxu0 0
      %1473 = vmatprep.subr.bf16.mxu0 0
      %1474 = vmatpush1.bf16.msra.mxu0 0
      %1475 = vmatprep.subr.bf16.mxu0 0
      %1476 = vmatpush1.bf16.msra.mxu0 0
      %1477 = vmatprep.subr.bf16.mxu0 0
      %1478 = vmatpush1.bf16.msra.mxu0 0
      %1479 = vmatprep.subr.bf16.mxu0 0
      %1480 = vmatpush1.bf16.msra.mxu0 0
      %1481 = vmatprep.subr.bf16.mxu0 0
      %1482 = vmatpush1.bf16.msra.mxu0 0
      %1483 = vmatprep.subr.bf16.mxu0 0
      %1484 = vmatpush1.bf16.msra.mxu0 0
      %1485 = vmatprep.subr.bf16.mxu0 0
      %1486 = vmatpush1.bf16.msra.mxu0 0
      %1487 = vmatprep.subr.bf16.mxu0 0
      %1488 = vmatpush1.bf16.msra.mxu0 0
      %1489 = vmatprep.subr.bf16.mxu0 0
      %1490 = vmatpush1.bf16.msra.mxu0 0
      %1491 = vmatprep.subr.bf16.mxu0 0
      %1492 = vmatpush1.bf16.msra.mxu0 0
      %1493 = vmatprep.subr.bf16.mxu0 0
      %1494 = vmatpush1.bf16.msra.mxu0 0
      %1495 = vmatprep.subr.bf16.mxu0 0
      %1496 = vmatpush1.bf16.msra.mxu0 0
      %1497 = vmatprep.subr.bf16.mxu0 0
      %1498 = vmatpush1.bf16.msra.mxu0 0
      %1499 = vmatprep.mubr.bf16.mxu0 0
      %1500 = vmatmul.mubr.bf16.gmra.mrb[0].mxu0 %v1462
      %v1501 = vpop.f32.mrb[0].mxu0
      %v1502 = vadd.f32 0.0, %v1501
      %v1503 = vpop.f32.mrb[0].mxu0
      %v1504 = vpop.f32.mrb[0].mxu0
      %v1505 = vadd.f32 0.0, %v1504
      %v1506 = vpop.f32.mrb[0].mxu0
      %1507 = vdwg.mxu0
      %v1508 = vadd.f32 %v1421, %v1502
      %v1509 = vadd.f32 %v1422, %v1505
      %s1510 = scalar_lea.vmem %s284, 112
      %v1511 = vld [vmem:[%s1510] sm:$0xf]
      %v1512 = vld [vmem:[%s1510 + $0x4] sm:$0xf]
      %v1513 = vld [vmem:[#allocation2] sm:$0x3]
      %v1516 = vunpack.c.l.b16 %v1511
      %v1517 = vunpack.c.l.b16 %v1512
      %v1518 = vpack.c.b16 %v1517, %v1516
      %v1521 = vunpack.c.l.s4 1966171168
      %v1522 = vunpack.c.0.s8 %v1521
      %v1523 = vlaneseq
      %v1524 = vshrl.u32 %v1523, 7
      %v1525 = vsub.s32 %v1522, %v1524
      %v1526 = vrot.slane %v1513, %v1525
      %v1527 = vcombine.high %v1526, %v1526
      %v1529 = vunpack.c.l.s4 1966171168
      %v1530 = vunpack.c.0.s8 %v1529
      %v1531 = vlaneseq
      %v1532 = vshrl.u32 %v1531, 7
      %v1533 = vsub.s32 %v1530, %v1532
      %v1534 = vrot.slane %v1526, %v1533
      %v1536 = vunpack.c.l.s4 1966171168
      %v1537 = vunpack.c.0.s8 %v1536
      %v1538 = vlaneseq
      %v1539 = vshrl.u32 %v1538, 7
      %v1540 = vsub.s32 %v1537, %v1539
      %v1541 = vrot.slane %v1527, %v1540
      %1542 = vrot.lane.b32.xlu0 %v1534, 114
      %v1543 = vpop.permute.xlu0 %1542
      %1544 = vrot.lane.b32.xlu0 %v1541, 114
      %v1545 = vpop.permute.xlu0 %1544
      %vm1546 = vcmask 932864
      %v1547 = vsel %vm1546, %v1543, %v1545
      %v1549 = vsel %vm365, %v1518, 0
      %v1552 = vsel %vm369, %v1547, 0
      %1554 = vmatprep.subr.bf16.mxu0 0
      %1555 = vmatpush1.bf16.msra.mxu0 %v1552
      %1556 = vmatprep.subr.bf16.mxu0 0
      %1557 = vmatpush1.bf16.msra.mxu0 0
      %1558 = vmatprep.subr.bf16.mxu0 0
      %1559 = vmatpush1.bf16.msra.mxu0 0
      %1560 = vmatprep.subr.bf16.mxu0 0
      %1561 = vmatpush1.bf16.msra.mxu0 0
      %1562 = vmatprep.subr.bf16.mxu0 0
      %1563 = vmatpush1.bf16.msra.mxu0 0
      %1564 = vmatprep.subr.bf16.mxu0 0
      %1565 = vmatpush1.bf16.msra.mxu0 0
      %1566 = vmatprep.subr.bf16.mxu0 0
      %1567 = vmatpush1.bf16.msra.mxu0 0
      %1568 = vmatprep.subr.bf16.mxu0 0
      %1569 = vmatpush1.bf16.msra.mxu0 0
      %1570 = vmatprep.subr.bf16.mxu0 0
      %1571 = vmatpush1.bf16.msra.mxu0 0
      %1572 = vmatprep.subr.bf16.mxu0 0
      %1573 = vmatpush1.bf16.msra.mxu0 0
      %1574 = vmatprep.subr.bf16.mxu0 0
      %1575 = vmatpush1.bf16.msra.mxu0 0
      %1576 = vmatprep.subr.bf16.mxu0 0
      %1577 = vmatpush1.bf16.msra.mxu0 0
      %1578 = vmatprep.subr.bf16.mxu0 0
      %1579 = vmatpush1.bf16.msra.mxu0 0
      %1580 = vmatprep.subr.bf16.mxu0 0
      %1581 = vmatpush1.bf16.msra.mxu0 0
      %1582 = vmatprep.subr.bf16.mxu0 0
      %1583 = vmatpush1.bf16.msra.mxu0 0
      %1584 = vmatprep.subr.bf16.mxu0 0
      %1585 = vmatpush1.bf16.msra.mxu0 0
      %1586 = vmatprep.mubr.bf16.mxu0 0
      %1587 = vmatmul.mubr.bf16.gmra.mrb[0].mxu0 %v1549
      %v1588 = vpop.f32.mrb[0].mxu0
      %v1589 = vadd.f32 0.0, %v1588
      %v1590 = vpop.f32.mrb[0].mxu0
      %v1591 = vpop.f32.mrb[0].mxu0
      %v1592 = vadd.f32 0.0, %v1591
      %v1593 = vpop.f32.mrb[0].mxu0
      %1594 = vdwg.mxu0
      %v1595 = vadd.f32 %v1508, %v1589
      %v1596 = vadd.f32 %v1509, %v1592
      %v1597 = vld [vmem:[%s289] sm:$0xff]
      %v1598 = vld [vmem:[%s289 + $0x8] sm:$0xff]
      %1600 = vset.pattern.permute.xlu0 0
      %1601 = vperm.xlu0 %1600, %v1597
      %v1602 = vpop.permute.xlu0 %1601
      %1605 = vset.pattern.permute.xlu0 0
      %1606 = vperm.xlu0 %1605, %v1598
      %v1607 = vpop.permute.xlu0 %1606
      %v1609 = vadd.f32 %v1595, %v1602
      %v1610 = vadd.f32 %v1596, %v1607
      %vm1611 = vcmp.ge.f32.partialorder %v1609, 0.0
      %vm1612 = vcmp.ge.f32.partialorder %v1610, 0.0
      %v1613 = vmul.f32 %v1609, 0.2
      %v1614 = vmul.f32 %v1610, 0.2
      %v1615 = vsel %vm1611, %v1609, %v1613
      %v1616 = vsel %vm1612, %v1610, %v1614
      %v1617 = vpack.c.bf16 %v1616, %v1615
      %v1619 = vunpack.c.l.b16 %v1617
      %v1620 = vunpack.c.h.b16 %v1617
      %v1621 = vpack.c.b16 %v1619, %v1619
      %v1622 = vpack.c.b16 %v1620, %v1620
      %1625 = vst [vmem:[%s317] sm:$0xf] %v1621
      %1626 = vst [vmem:[%s317 + $0x4] sm:$0xf] %v1622
      %s1627 = smul.u32 2, %s20
      %p1628 = scmp.lt.s32.totalorder %s21, 1
      %s1629 = scalar_select %p1628, %s21, 1
      %p1630 = scmp.lt.s32.totalorder %s1627, 1
      %s1631 = scalar_select %p1630, %s1627, 1
      %p1632 = scmp.lt.s32.totalorder %s22, 0
      %s1633 = scalar_select %p1632, %s22, 0
      %s1634 = sadd.s32 %s1633, %s1631
      %s1635 = smul.addr %s1629, 2
      %s1636 = sadd.s32 %s1634, %s1635
      %s1637 = smul.addr %s1636, 4
      %s1638 = scalar_lea.vmem %s4, %s1637
      // Predicated region
      $region37: #{audio_discriminator_forward.17} parent=35 // pred_check
        %p1639 = pneg %p166
      $region38: #{audio_discriminator_forward.17} parent=35 // pred_check_branch
        %1641 = sbr.rel (%p1639) target = $region40
      $region39: #{audio_discriminator_forward.17} parent=35 // pred_region
        %s1642 = smul.u32 2, %s20
      $region40: #{audio_discriminator_forward.17} parent=35 // pred_fallthru
        _
    $region36: #{audio_discriminator_forward.17} parent=5 // pred_fallthru
      _
    %p1643 = scmp.le.s32.totalorder 2, %s10
    // Predicated region
    $region41: #{audio_discriminator_forward.17} parent=5 // pred_check
      %p1644 = pneg %p1643
    $region42: #{audio_discriminator_forward.17} parent=5 // pred_check_branch
      %1646 = sbr.rel (%p1644) target = $region44
    $region43: #{audio_discriminator_forward.17} parent=5 // pred_region
      %s1647 = ssub.s32 %s10, 2
      // Predicated region
      $region45: #{audio_discriminator_forward.17} parent=43 // pred_check
        %p1648 = pneg %p172
      $region46: #{audio_discriminator_forward.17} parent=43 // pred_check_branch
        %1650 = sbr.rel (%p1648) target = $region48
      $region47: #{audio_discriminator_forward.17} parent=43 // pred_region
        %s1651 = smul.u32 2, %s23
        %p1652 = scmp.lt.s32.totalorder %s24, 1
        %s1653 = scalar_select %p1652, %s24, 1
        %p1654 = scmp.lt.s32.totalorder %s1651, 1
        %s1655 = scalar_select %p1654, %s1651, 1
        %p1656 = scmp.lt.s32.totalorder %s25, 0
        %s1657 = scalar_select %p1656, %s25, 0
        %s1658 = sadd.s32 %s1657, %s1655
        %s1659 = smul.addr %s1653, 2
        %s1660 = sadd.s32 %s1658, %s1659
        %s1661 = smul.addr %s1660, 4
        %s1662 = scalar_lea.vmem %s4, %s1661
      $region48: #{audio_discriminator_forward.17} parent=43 // pred_fallthru
        _
    $region44: #{audio_discriminator_forward.17} parent=5 // pred_fallthru
      _
  $region6: #{audio_discriminator_forward.17} parent=0 // loop_footer
    %s14 = sadd.s32 1, %s10
  $region7: #{audio_discriminator_forward.17} parent=0 // loop_footer_branch
    %9 = sbr.rel target = $region3
  $region8: #{audio_discriminator_forward.17} parent=0 // loop_exit
    _

// kernel: audio_discriminator_forward.18
$region0: #{audio_discriminator_forward.18}
  #allocation0 [shape = 'u32[]', space=smem, size = 0x4, offset = 0x4, fixed_abs, tag = 'smem constant byte address 0x4 - core index']
  #allocation1 [shape = 'u32[144,128]{1,0:T(1,128)}', space=vmem, size = 0x12000, scoped, tag = 'internal scratch']
  #allocation2 [shape = 'bf16[16,256]{1,0:T(16,128)(2,1)}', space=vmem, size = 0x2000, scoped, tag = 'scratch operand']
  %s0 = inlined_call_operand.vmem [shape: bf16[1,11,16,16], index: 0, kind: input, shape index: {}]
  %s1 = inlined_call_operand.vmem [shape: f32[1,16,1], index: 1, kind: input, shape index: {}]
  %s2 = inlined_call_operand.vmem [shape: bf16[2,16,256], index: 2, kind: input, shape index: {}, may-alias: {2,3}]
  %s3 = inlined_call_operand.vmem [shape: bf16[2,16,256], index: 3, kind: input, shape index: {}, may-alias: {2,3}]
  %s4 = inlined_call_operand.vmem [shape: bf16[2,16,128], index: 4, kind: output, shape index: {}]
  %s5 = sld [smem:[#allocation0]]
  $region131: #{audio_discriminator_forward.18} parent=0
    _
  %s7 = ssub.s32 1, %s5
  %s8 = scalar_select 0, %s7, %s5
  $region1: #{audio_discriminator_forward.18} parent=0
    #allocation3 [shape = 'u8[8192]{0}', space=vmem, size = 0x2000, scoped, tag = 'input window, operand 2']
    #allocation4 [shape = 'u8[8192]{0}', space=vmem, size = 0x2000, scoped, tag = 'input window, operand 3']
    loop: start=0, step=1, limit=4
    $region2: #{audio_discriminator_forward.18} parent=1 // loop_pre_header
      _
    $region3: #{audio_discriminator_forward.18} parent=1 // loop_header
      %s10 = sphi 0, %s14
      %p11 = scmp.ge.s32.totalorder %s10, 4
      %s17 = sphi 0, %s36
      %s18 = sphi 0, %s32
      %s19 = sphi 0, %s28
      %s20 = sphi 0, %s17
      %s21 = sphi 0, %s18
      %s22 = sphi 0, %s19
      %s23 = sphi 0, %s20
      %s24 = sphi 0, %s21
      %s25 = sphi 0, %s22
      %s39 = sphi 0, %s41
      %s42 = sphi 0, %s39
      %s43 = sphi 0, %s42
      %s59 = sphi 0, %s43
      %s65 = sphi 0, %s67
      %s68 = sphi 0, %s65
      %s69 = sphi 0, %s68
      %s85 = sphi 0, %s69
      %s95 = sphi 0, %s97
      %s98 = sphi 0, %s95
      %s99 = sphi 0, %s98
      %s115 = sphi 0, %s99
      %s127 = sphi 0, %s129
      %s130 = sphi 0, %s127
      %s131 = sphi 0, %s130
      %s147 = sphi 0, %s131
      %s157 = sphi 0, %s159
      %s160 = sphi 0, %s157
      %s161 = sphi 0, %s160
      %s177 = sphi 0, %s161
    $region4: #{audio_discriminator_forward.18} parent=1 // loop_header_branch
      %13 = sbr.rel (%p11) target = $region8
    $region5: #{audio_discriminator_forward.18} parent=1 // loop_body
      %s15 = ssub.s32 %s10, 1
      %s16 = ssub.s32 %s10, 2
      %s26 = sadd.s32 1, %s19
      %p27 = scmp.ge.s32.totalorder %s26, 1
      %s28 = scalar_select %p27, 0, %s26
      %s29 = sadd.s32 1, %s18
      %s30 = scalar_select %p27, %s29, %s18
      %p31 = scmp.ge.s32.totalorder %s30, 2
      %s32 = scalar_select %p31, 0, %s30
      %s33 = sadd.s32 1, %s17
      %s34 = scalar_select %p31, %s33, %s17
      %p35 = scmp.ge.s32.totalorder %s34, 1
      %s36 = scalar_select %p35, 0, %s34
      %s37 = ssub.s32 %s17, %s36
      %p38 = scmp.eq.s32.totalorder %s37, 0
      %s40 = sadd.s32 %s39, 1
      %s41 = scalar_select %p38, %s39, %s40
      %p44 = pneg %p38
      %p45 = scmp.eq.s32.totalorder %s10, 1
      %p46 = por %p44, %p45
      %p47 = scmp.ne.s32.totalorder %s39, %s42
      %p48 = scmp.eq.s32.totalorder %s10, 0
      %p49 = por %p47, %p48
      %p50 = scmp.ne.s32.totalorder %s39, %s42
      %p51 = scmp.eq.s32.totalorder %s15, 1
      %p52 = por %p50, %p51
      %p53 = scmp.ne.s32.totalorder %s42, %s43
      %p54 = scmp.eq.s32.totalorder %s15, 0
      %p55 = por %p53, %p54
      %p56 = scmp.ne.s32.totalorder %s42, %s43
      %p57 = scmp.eq.s32.totalorder %s16, 1
      %p58 = por %p56, %p57
      %p60 = scmp.ne.s32.totalorder %s43, %s59
      %p61 = scmp.eq.s32.totalorder %s16, 0
      %p62 = por %p60, %p61
      %s63 = ssub.s32 %s17, %s36
      %p64 = scmp.eq.s32.totalorder %s63, 0
      %s66 = sadd.s32 %s65, 1
      %s67 = scalar_select %p64, %s65, %s66
      %p70 = pneg %p64
      %p71 = scmp.eq.s32.totalorder %s10, 1
      %p72 = por %p70, %p71
      %p73 = scmp.ne.s32.totalorder %s65, %s68
      %p74 = scmp.eq.s32.totalorder %s10, 0
      %p75 = por %p73, %p74
      %p76 = scmp.ne.s32.totalorder %s65, %s68
      %p77 = scmp.eq.s32.totalorder %s15, 1
      %p78 = por %p76, %p77
      %p79 = scmp.ne.s32.totalorder %s68, %s69
      %p80 = scmp.eq.s32.totalorder %s15, 0
      %p81 = por %p79, %p80
      %p82 = scmp.ne.s32.totalorder %s68, %s69
      %p83 = scmp.eq.s32.totalorder %s16, 1
      %p84 = por %p82, %p83
      %p86 = scmp.ne.s32.totalorder %s69, %s85
      %p87 = scmp.eq.s32.totalorder %s16, 0
      %p88 = por %p86, %p87
      %s89 = ssub.s32 %s18, %s32
      %s90 = ssub.s32 %s17, %s36
      %s91 = sor.u32 %s89, %s90
      %s92 = ssub.s32 %s19, %s28
      %s93 = sor.u32 %s91, %s92
      %p94 = scmp.eq.s32.totalorder %s93, 0
      %s96 = sadd.s32 %s95, 1
      %s97 = scalar_select %p94, %s95, %s96
      %p100 = pneg %p94
      %p101 = scmp.eq.s32.totalorder %s10, 1
      %p102 = por %p100, %p101
      %p103 = scmp.ne.s32.totalorder %s95, %s98
      %p104 = scmp.eq.s32.totalorder %s10, 0
      %p105 = por %p103, %p104
      %p106 = scmp.ne.s32.totalorder %s95, %s98
      %p107 = scmp.eq.s32.totalorder %s15, 1
      %p108 = por %p106, %p107
      %p109 = scmp.ne.s32.totalorder %s98, %s99
      %p110 = scmp.eq.s32.totalorder %s15, 0
      %p111 = por %p109, %p110
      %p112 = scmp.ne.s32.totalorder %s98, %s99
      %p113 = scmp.eq.s32.totalorder %s16, 1
      %p114 = por %p112, %p113
      %p116 = scmp.ne.s32.totalorder %s99, %s115
      %p117 = scmp.eq.s32.totalorder %s16, 0
      %p118 = por %p116, %p117
      %s119 = sadd.s32 %s19, 1
      %s120 = sadd.s32 %s28, 1
      %s121 = ssub.s32 %s18, %s32
      %s122 = ssub.s32 %s17, %s36
      %s123 = sor.u32 %s121, %s122
      %s124 = ssub.s32 %s119, %s120
      %s125 = sor.u32 %s123, %s124
      %p126 = scmp.eq.s32.totalorder %s125, 0
      %s128 = sadd.s32 %s127, 1
      %s129 = scalar_select %p126, %s127, %s128
      %p132 = pneg %p126
      %p133 = scmp.eq.s32.totalorder %s10, 1
      %p134 = por %p132, %p133
      %p135 = scmp.ne.s32.totalorder %s127, %s130
      %p136 = scmp.eq.s32.totalorder %s10, 0
      %p137 = por %p135, %p136
      %p138 = scmp.ne.s32.totalorder %s127, %s130
      %p139 = scmp.eq.s32.totalorder %s15, 1
      %p140 = por %p138, %p139
      %p141 = scmp.ne.s32.totalorder %s130, %s131
      %p142 = scmp.eq.s32.totalorder %s15, 0
      %p143 = por %p141, %p142
      %p144 = scmp.ne.s32.totalorder %s130, %s131
      %p145 = scmp.eq.s32.totalorder %s16, 1
      %p146 = por %p144, %p145
      %p148 = scmp.ne.s32.totalorder %s131, %s147
      %p149 = scmp.eq.s32.totalorder %s16, 0
      %p150 = por %p148, %p149
      %s151 = ssub.s32 %s18, %s32
      %s152 = ssub.s32 %s17, %s36
      %s153 = sor.u32 %s151, %s152
      %s154 = ssub.s32 %s19, %s28
      %s155 = sor.u32 %s153, %s154
      %p156 = scmp.eq.s32.totalorder %s155, 0
      %s158 = sadd.s32 %s157, 1
      %s159 = scalar_select %p156, %s157, %s158
      %p162 = pneg %p156
      %p163 = scmp.eq.s32.totalorder %s10, 1
      %p164 = por %p162, %p163
      %p165 = scmp.ne.s32.totalorder %s157, %s160
      %p166 = scmp.eq.s32.totalorder %s10, 0
      %p167 = por %p165, %p166
      %p168 = scmp.ne.s32.totalorder %s157, %s160
      %p169 = scmp.eq.s32.totalorder %s15, 1
      %p170 = por %p168, %p169
      %p171 = scmp.ne.s32.totalorder %s160, %s161
      %p172 = scmp.eq.s32.totalorder %s15, 0
      %p173 = por %p171, %p172
      %p174 = scmp.ne.s32.totalorder %s160, %s161
      %p175 = scmp.eq.s32.totalorder %s16, 1
      %p176 = por %p174, %p175
      %p178 = scmp.ne.s32.totalorder %s161, %s177
      %p179 = scmp.eq.s32.totalorder %s16, 0
      %p180 = por %p178, %p179
      %p181 = scmp.le.s32.totalorder 1, %s10
      %p182 = scmp.lt.s32.totalorder %s10, 3
      %p183 = pnand %p181, %p182
      %p184 = pneg %p183
      // Predicated region
      $region9: #{audio_discriminator_forward.18} parent=5 // pred_check
        _
      $region10: #{audio_discriminator_forward.18} parent=5 // pred_check_branch
        %186 = sbr.rel (%p183) target = $region12
      $region11: #{audio_discriminator_forward.18} parent=5 // pred_region
        %s187 = ssub.s32 %s10, 1
        // Predicated region
        $region13: #{audio_discriminator_forward.18} parent=11 // pred_check
          %p188 = pneg %p55
        $region14: #{audio_discriminator_forward.18} parent=11 // pred_check_branch
          %190 = sbr.rel (%p188) target = $region16
        $region15: #{audio_discriminator_forward.18} parent=11 // pred_region
          %p191 = scmp.lt.s32.totalorder %s20, 0
          %s192 = scalar_select %p191, %s20, 0
          %s193 = smul.addr %s192, 22
          %s194 = smul.addr %s193, 4
          %s195 = scalar_lea.vmem %s0, %s194
        $region16: #{audio_discriminator_forward.18} parent=11 // pred_fallthru
          _
        // Predicated region
        $region17: #{audio_discriminator_forward.18} parent=11 // pred_check
          %p196 = pneg %p81
        $region18: #{audio_discriminator_forward.18} parent=11 // pred_check_branch
          %198 = sbr.rel (%p196) target = $region20
        $region19: #{audio_discriminator_forward.18} parent=11 // pred_region
          %p199 = scmp.lt.s32.totalorder %s20, 0
          %s200 = scalar_select %p199, %s20, 0
          %s201 = smul.addr %s200, 2
          %s202 = smul.addr %s201, 8
          %s203 = scalar_lea.vmem %s1, %s202
        $region20: #{audio_discriminator_forward.18} parent=11 // pred_fallthru
          _
      $region12: #{audio_discriminator_forward.18} parent=5 // pred_fallthru
        _
      %p204 = scmp.lt.s32.totalorder %s10, 2
      // Predicated region
      $region21: #{audio_discriminator_forward.18} parent=5 // pred_check
        %p205 = pneg %p204
      $region22: #{audio_discriminator_forward.18} parent=5 // pred_check_branch
        %207 = sbr.rel (%p205) target = $region24
      $region23: #{audio_discriminator_forward.18} parent=5 // pred_region
        // Predicated region
        $region25: #{audio_discriminator_forward.18} parent=23 // pred_check
          %p208 = pneg %p105
        $region26: #{audio_discriminator_forward.18} parent=23 // pred_check_branch
          %210 = sbr.rel (%p208) target = $region28
        $region27: #{audio_discriminator_forward.18} parent=23 // pred_region
          %s211 = sand.u32 %s95, 1
          %s212 = sand.u32 %s95, 1
          %s213 = smul.addr %s212, 8
          %s214 = scalar_lea.vmem [#allocation3], %s213
          %s215 = smul.u32 2, %s17
          %s216 = smul.addr %s215, 2
          %s217 = sadd.s32 %s19, %s216
          %s218 = smul.addr %s18, 4
          %s219 = sadd.s32 %s217, %s218
          %s220 = smul.addr %s219, 4
          %s221 = scalar_lea.vmem %s2, %s220
          // Predicated region
          $region29: #{audio_discriminator_forward.18} parent=27 // pred_check
            _
          $region30: #{audio_discriminator_forward.18} parent=27 // pred_check_branch
            %223 = sbr.rel (0) target = $region32
          $region31: #{audio_discriminator_forward.18} parent=27 // pred_region
            // Predicated region
            $region33: #{audio_discriminator_forward.18} parent=31 // pred_check
              _
            $region34: #{audio_discriminator_forward.18} parent=31 // pred_check_branch
              %225 = sbr.rel target = $region36
            $region35: #{audio_discriminator_forward.18} parent=31 // pred_region
              // Predicated region
              $region48: #{audio_discriminator_forward.18} parent=35 // pred_check
                _
              $region49: #{audio_discriminator_forward.18} parent=35 // pred_check_branch
                %242 = sbr.rel (0) target = $region51
              $region50: #{audio_discriminator_forward.18} parent=35 // pred_region
                loop: start=0, step=1, limit=1
                $region52: #{audio_discriminator_forward.18} parent=50 // loop_pre_header
                  _
                $region53: #{audio_discriminator_forward.18} parent=50 // loop_header
                  %s244 = sphi 0, %s248
                  %p245 = scmp.ge.s32.totalorder %s244, 1
                  %s249 = sphi %s221, %s221
                  %s250 = sphi %s214, %s214
                $region54: #{audio_discriminator_forward.18} parent=50 // loop_header_branch
                  %247 = sbr.rel (%p245) target = $region58
                $region55: #{audio_discriminator_forward.18} parent=50 // loop_body
                  _
                $region56: #{audio_discriminator_forward.18} parent=50 // loop_footer
                  %s248 = sadd.s32 1, %s244
                $region57: #{audio_discriminator_forward.18} parent=50 // loop_footer_branch
                  %243 = sbr.rel target = $region53
                $region58: #{audio_discriminator_forward.18} parent=50 // loop_exit
                  _
                loop: start=0, step=1, limit=1
                $region59: #{audio_discriminator_forward.18} parent=50 // loop_pre_header
                  _
                $region60: #{audio_discriminator_forward.18} parent=50 // loop_header
                  %s253 = sphi 0, %s257
                  %p254 = scmp.ge.s32.totalorder %s253, 1
                  %s258 = sphi %s221, %s221
                  %s259 = sphi %s214, %s214
                $region61: #{audio_discriminator_forward.18} parent=50 // loop_header_branch
                  %256 = sbr.rel (%p254) target = $region65
                $region62: #{audio_discriminator_forward.18} parent=50 // loop_body
                  %v260 = vld [vmem:[%s258] sm:$0xf]
                  %261 = vst [vmem:[%s259] sm:$0xf] %v260
                  %v262 = vld [vmem:[%s258 + $0x8] sm:$0xf]
                  %263 = vst [vmem:[%s259 + $0x4] sm:$0xf] %v262
                $region63: #{audio_discriminator_forward.18} parent=50 // loop_footer
                  %s257 = sadd.s32 1, %s253
                $region64: #{audio_discriminator_forward.18} parent=50 // loop_footer_branch
                  %252 = sbr.rel target = $region60
                $region65: #{audio_discriminator_forward.18} parent=50 // loop_exit
                  _
              $region51: #{audio_discriminator_forward.18} parent=35 // pred_fallthru
                _
            $region36: #{audio_discriminator_forward.18} parent=31 // pred_fallthru
              _
            // Predicated region
            $region37: #{audio_discriminator_forward.18} parent=31 // pred_check
              _
            $region38: #{audio_discriminator_forward.18} parent=31 // pred_check_branch
              %227 = sbr.rel (0) target = $region40
            $region39: #{audio_discriminator_forward.18} parent=31 // pred_region
              loop: start=0, step=1, limit=1
              $region41: #{audio_discriminator_forward.18} parent=39 // loop_pre_header
                _
              $region42: #{audio_discriminator_forward.18} parent=39 // loop_header
                %s230 = sphi 0, %s234
                %p231 = scmp.ge.s32.totalorder %s230, 1
                %s235 = sphi %s221, %s221
                %s236 = sphi %s214, %s214
              $region43: #{audio_discriminator_forward.18} parent=39 // loop_header_branch
                %233 = sbr.rel (%p231) target = $region47
              $region44: #{audio_discriminator_forward.18} parent=39 // loop_body
                %v237 = vld [vmem:[%s235] sm:$0xf]
                %238 = vst [vmem:[%s236] sm:$0xf] %v237
                %v239 = vld [vmem:[%s235 + $0x8] sm:$0xf]
                %240 = vst [vmem:[%s236 + $0x4] sm:$0xf] %v239
              $region45: #{audio_discriminator_forward.18} parent=39 // loop_footer
                %s234 = sadd.s32 1, %s230
              $region46: #{audio_discriminator_forward.18} parent=39 // loop_footer_branch
                %229 = sbr.rel target = $region42
              $region47: #{audio_discriminator_forward.18} parent=39 // loop_exit
                _
            $region40: #{audio_discriminator_forward.18} parent=31 // pred_fallthru
              _
          $region32: #{audio_discriminator_forward.18} parent=27 // pred_fallthru
            _
          %264 = vnop
        $region28: #{audio_discriminator_forward.18} parent=23 // pred_fallthru
          _
        // Predicated region
        $region66: #{audio_discriminator_forward.18} parent=23 // pred_check
          %p265 = pneg %p137
        $region67: #{audio_discriminator_forward.18} parent=23 // pred_check_branch
          %267 = sbr.rel (%p265) target = $region69
        $region68: #{audio_discriminator_forward.18} parent=23 // pred_region
          %s268 = sand.u32 %s127, 1
          %s269 = sand.u32 %s127, 1
          %s270 = smul.addr %s269, 8
          %s271 = scalar_lea.vmem [#allocation4], %s270
          %s272 = sadd.s32 %s19, 1
          %s273 = smul.u32 2, %s17
          %s274 = smul.addr %s273, 2
          %s275 = sadd.s32 %s272, %s274
          %s276 = smul.addr %s18, 4
          %s277 = sadd.s32 %s275, %s276
          %s278 = smul.addr %s277, 4
          %s279 = scalar_lea.vmem %s3, %s278
          // Predicated region
          $region70: #{audio_discriminator_forward.18} parent=68 // pred_check
            _
          $region71: #{audio_discriminator_forward.18} parent=68 // pred_check_branch
            %281 = sbr.rel (0) target = $region73
          $region72: #{audio_discriminator_forward.18} parent=68 // pred_region
            // Predicated region
            $region74: #{audio_discriminator_forward.18} parent=72 // pred_check
              _
            $region75: #{audio_discriminator_forward.18} parent=72 // pred_check_branch
              %283 = sbr.rel target = $region77
            $region76: #{audio_discriminator_forward.18} parent=72 // pred_region
              // Predicated region
              $region89: #{audio_discriminator_forward.18} parent=76 // pred_check
                _
              $region90: #{audio_discriminator_forward.18} parent=76 // pred_check_branch
                %300 = sbr.rel (0) target = $region92
              $region91: #{audio_discriminator_forward.18} parent=76 // pred_region
                loop: start=0, step=1, limit=1
                $region93: #{audio_discriminator_forward.18} parent=91 // loop_pre_header
                  _
                $region94: #{audio_discriminator_forward.18} parent=91 // loop_header
                  %s302 = sphi 0, %s306
                  %p303 = scmp.ge.s32.totalorder %s302, 1
                  %s307 = sphi %s279, %s279
                  %s308 = sphi %s271, %s271
                $region95: #{audio_discriminator_forward.18} parent=91 // loop_header_branch
                  %305 = sbr.rel (%p303) target = $region99
                $region96: #{audio_discriminator_forward.18} parent=91 // loop_body
                  _
                $region97: #{audio_discriminator_forward.18} parent=91 // loop_footer
                  %s306 = sadd.s32 1, %s302
                $region98: #{audio_discriminator_forward.18} parent=91 // loop_footer_branch
                  %301 = sbr.rel target = $region94
                $region99: #{audio_discriminator_forward.18} parent=91 // loop_exit
                  _
                loop: start=0, step=1, limit=1
                $region100: #{audio_discriminator_forward.18} parent=91 // loop_pre_header
                  _
                $region101: #{audio_discriminator_forward.18} parent=91 // loop_header
                  %s311 = sphi 0, %s315
                  %p312 = scmp.ge.s32.totalorder %s311, 1
                  %s316 = sphi %s279, %s279
                  %s317 = sphi %s271, %s271
                $region102: #{audio_discriminator_forward.18} parent=91 // loop_header_branch
                  %314 = sbr.rel (%p312) target = $region106
                $region103: #{audio_discriminator_forward.18} parent=91 // loop_body
                  %v318 = vld [vmem:[%s316] sm:$0xf]
                  %319 = vst [vmem:[%s317] sm:$0xf] %v318
                  %v320 = vld [vmem:[%s316 + $0x8] sm:$0xf]
                  %321 = vst [vmem:[%s317 + $0x4] sm:$0xf] %v320
                $region104: #{audio_discriminator_forward.18} parent=91 // loop_footer
                  %s315 = sadd.s32 1, %s311
                $region105: #{audio_discriminator_forward.18} parent=91 // loop_footer_branch
                  %310 = sbr.rel target = $region101
                $region106: #{audio_discriminator_forward.18} parent=91 // loop_exit
                  _
              $region92: #{audio_discriminator_forward.18} parent=76 // pred_fallthru
                _
            $region77: #{audio_discriminator_forward.18} parent=72 // pred_fallthru
              _
            // Predicated region
            $region78: #{audio_discriminator_forward.18} parent=72 // pred_check
              _
            $region79: #{audio_discriminator_forward.18} parent=72 // pred_check_branch
              %285 = sbr.rel (0) target = $region81
            $region80: #{audio_discriminator_forward.18} parent=72 // pred_region
              loop: start=0, step=1, limit=1
              $region82: #{audio_discriminator_forward.18} parent=80 // loop_pre_header
                _
              $region83: #{audio_discriminator_forward.18} parent=80 // loop_header
                %s288 = sphi 0, %s292
                %p289 = scmp.ge.s32.totalorder %s288, 1
                %s293 = sphi %s279, %s279
                %s294 = sphi %s271, %s271
              $region84: #{audio_discriminator_forward.18} parent=80 // loop_header_branch
                %291 = sbr.rel (%p289) target = $region88
              $region85: #{audio_discriminator_forward.18} parent=80 // loop_body
                %v295 = vld [vmem:[%s293] sm:$0xf]
                %296 = vst [vmem:[%s294] sm:$0xf] %v295
                %v297 = vld [vmem:[%s293 + $0x8] sm:$0xf]
                %298 = vst [vmem:[%s294 + $0x4] sm:$0xf] %v297
              $region86: #{audio_discriminator_forward.18} parent=80 // loop_footer
                %s292 = sadd.s32 1, %s288
              $region87: #{audio_discriminator_forward.18} parent=80 // loop_footer_branch
                %287 = sbr.rel target = $region83
              $region88: #{audio_discriminator_forward.18} parent=80 // loop_exit
                _
            $region81: #{audio_discriminator_forward.18} parent=72 // pred_fallthru
              _
          $region73: #{audio_discriminator_forward.18} parent=68 // pred_fallthru
            _
          %322 = vnop
        $region69: #{audio_discriminator_forward.18} parent=23 // pred_fallthru
          _
      $region24: #{audio_discriminator_forward.18} parent=5 // pred_fallthru
        _
      %p323 = scmp.le.s32.totalorder 1, %s10
      %p324 = scmp.lt.s32.totalorder %s10, 3
      %p325 = pnand %p323, %p324
      %p326 = pneg %p325
      // Predicated region
      $region107: #{audio_discriminator_forward.18} parent=5 // pred_check
        _
      $region108: #{audio_discriminator_forward.18} parent=5 // pred_check_branch
        %328 = sbr.rel (%p325) target = $region110
      $region109: #{audio_discriminator_forward.18} parent=5 // pred_region
        %s329 = ssub.s32 %s10, 1
        %s330 = sand.u32 %s98, 1
        %s331 = sand.u32 %s98, 1
        %s332 = smul.addr %s331, 8
        %s333 = scalar_lea.vmem [#allocation3], %s332
        // Predicated region
        $region111: #{audio_discriminator_forward.18} parent=109 // pred_check
          %p334 = pneg %p111
        $region112: #{audio_discriminator_forward.18} parent=109 // pred_check_branch
          %336 = sbr.rel (%p334) target = $region114
        $region113: #{audio_discriminator_forward.18} parent=109 // pred_region
          _
        $region114: #{audio_discriminator_forward.18} parent=109 // pred_fallthru
          _
        %s337 = sand.u32 %s130, 1
        %s338 = sand.u32 %s130, 1
        %s339 = smul.addr %s338, 8
        %s340 = scalar_lea.vmem [#allocation4], %s339
        // Predicated region
        $region115: #{audio_discriminator_forward.18} parent=109 // pred_check
          %p341 = pneg %p143
        $region116: #{audio_discriminator_forward.18} parent=109 // pred_check_branch
          %343 = sbr.rel (%p341) target = $region118
        $region117: #{audio_discriminator_forward.18} parent=109 // pred_region
          _
        $region118: #{audio_discriminator_forward.18} parent=109 // pred_fallthru
          _
        %p344 = scmp.lt.s32.totalorder %s20, 0
        %s345 = scalar_select %p344, %s20, 0
        %s346 = smul.addr %s345, 22
        %s347 = smul.addr %s346, 4
        %s348 = scalar_lea.vmem %s0, %s347
        %p349 = pneg %p55
        %p350 = pneg %p52
        %p351 = scmp.lt.s32.totalorder %s20, 0
        %s352 = scalar_select %p351, %s20, 0
        %s353 = smul.addr %s352, 2
        %s354 = smul.addr %s353, 8
        %s355 = scalar_lea.vmem %s1, %s354
        %p356 = pneg %p81
        %p357 = pneg %p78
        %s358 = sand.u32 %s98, 1
        %s359 = sand.u32 %s98, 1
        %s360 = smul.addr %s359, 8
        %s361 = scalar_lea.vmem [#allocation3], %s360
        %p362 = pneg %p111
        %p363 = pneg %p108
        %s364 = sand.u32 %s130, 1
        %s365 = sand.u32 %s130, 1
        %s366 = smul.addr %s365, 8
        %s367 = scalar_lea.vmem [#allocation4], %s366
        %p368 = pneg %p143
        %p369 = pneg %p140
        %p370 = pneg %p173
        %p371 = pneg %p170
        %s372 = smul.u32 2, %s20
        %p373 = scmp.lt.s32.totalorder %s21, 1
        %s374 = scalar_select %p373, %s21, 1
        %p375 = scmp.lt.s32.totalorder %s372, 1
        %s376 = scalar_select %p375, %s372, 1
        %p377 = scmp.lt.s32.totalorder %s22, 0
        %s378 = scalar_select %p377, %s22, 0
        %s379 = sadd.s32 %s378, %s376
        %s380 = smul.addr %s374, 2
        %s381 = sadd.s32 %s379, %s380
        %s382 = smul.addr %s381, 4
        %s383 = scalar_lea.vmem %s4, %s382
        %p384 = scmp.lt.s32.totalorder %s20, 0
        %s385 = scalar_select %p384, %s20, 0
        %s386 = smul.addr %s385, 22
        %s387 = smul.addr %s386, 4
        %s388 = scalar_lea.vmem %s0, %s387
        %p389 = scmp.lt.s32.totalorder %s20, 0
        %s390 = scalar_select %p389, %s20, 0
        %s391 = smul.addr %s390, 2
        %s392 = smul.addr %s391, 8
        %s393 = scalar_lea.vmem %s1, %s392
        %s394 = smul.u32 2, %s20
        %s395 = sadd.s32 %s22, 1
        %s396 = smul.u32 2, %s20
        %s397 = smul.u32 2, %s20
        %p398 = scmp.lt.s32.totalorder %s21, 1
        %s399 = scalar_select %p398, %s21, 1
        %p400 = scmp.lt.s32.totalorder %s397, 1
        %s401 = scalar_select %p400, %s397, 1
        %p402 = scmp.lt.s32.totalorder %s22, 0
        %s403 = scalar_select %p402, %s22, 0
        %s404 = sadd.s32 %s403, %s401
        %s405 = smul.addr %s399, 2
        %s406 = sadd.s32 %s404, %s405
        %s407 = smul.addr %s406, 4
        %s408 = scalar_lea.vmem %s4, %s407
        %s409 = smul.u32 2, %s20
        %v411 = vld [vmem:[%s333] sm:$0xf]
        %v412 = vld [vmem:[%s333 + $0x4] sm:$0xf]
        %v415 = vunpack.c.l.b16 %v411
        %v416 = vunpack.c.l.b16 %v412
        %v417 = vpack.c.b16 %v416, %v415
        %419 = vst [vmem:[#allocation2] sm:$0xff] %v417
        %v420 = vld [vmem:[%s340] sm:$0xf]
        %v421 = vld [vmem:[%s340 + $0x4] sm:$0xf]
        %v424 = vunpack.c.l.b16 %v420
        %v425 = vunpack.c.l.b16 %v421
        %v426 = vpack.c.b16 %v425, %v424
        %428 = vst [vmem:[#allocation2 + $0x8] sm:$0xff] %v426
        %v429 = vld [vmem:[%s388] sm:$0xf]
        %v430 = vld [vmem:[%s388 + $0x4] sm:$0xf]
        %v431 = vld [vmem:[#allocation2] sm:$0xff]
        %s432 = scalar_lea.vmem %s388, 8
        %v433 = vld [vmem:[%s432] sm:$0xf]
        %v434 = vld [vmem:[%s432 + $0x4] sm:$0xf]
        %v435 = vld [vmem:[#allocation2] sm:$0xff]
        %v436 = vld [vmem:[#allocation2 + $0x8] sm:$0xff]
        %v439 = vunpack.c.l.b16 %v433
        %v440 = vunpack.c.l.b16 %v434
        %v441 = vpack.c.b16 %v440, %v439
        %444 = vrot.lane.b32.xlu0 %v435, 127
        %v445 = vpop.permute.xlu0 %444
        %446 = vrot.lane.b32.xlu0 %v436, 127
        %v447 = vpop.permute.xlu0 %446
        %vm448 = vcmask 1039360
        %v449 = vsel %vm448, %v445, %v447
        %vm451 = vcmask 130048
        %v453 = vsel %vm451, %v441, 0
        %455 = vmatprep.subr.bf16.mxu0 0
        %456 = vmatpush1.bf16.msra.mxu0 %v449
        %457 = vmatprep.subr.bf16.mxu0 0
        %458 = vmatpush1.bf16.msra.mxu0 0
        %459 = vmatprep.subr.bf16.mxu0 0
        %460 = vmatpush1.bf16.msra.mxu0 0
        %461 = vmatprep.subr.bf16.mxu0 0
        %462 = vmatpush1.bf16.msra.mxu0 0
        %463 = vmatprep.subr.bf16.mxu0 0
        %464 = vmatpush1.bf16.msra.mxu0 0
        %465 = vmatprep.subr.bf16.mxu0 0
        %466 = vmatpush1.bf16.msra.mxu0 0
        %467 = vmatprep.subr.bf16.mxu0 0
        %468 = vmatpush1.bf16.msra.mxu0 0
        %469 = vmatprep.subr.bf16.mxu0 0
        %470 = vmatpush1.bf16.msra.mxu0 0
        %471 = vmatprep.subr.bf16.mxu0 0
        %472 = vmatpush1.bf16.msra.mxu0 0
        %473 = vmatprep.subr.bf16.mxu0 0
        %474 = vmatpush1.bf16.msra.mxu0 0
        %475 = vmatprep.subr.bf16.mxu0 0
        %476 = vmatpush1.bf16.msra.mxu0 0
        %477 = vmatprep.subr.bf16.mxu0 0
        %478 = vmatpush1.bf16.msra.mxu0 0
        %479 = vmatprep.subr.bf16.mxu0 0
        %480 = vmatpush1.bf16.msra.mxu0 0
        %481 = vmatprep.subr.bf16.mxu0 0
        %482 = vmatpush1.bf16.msra.mxu0 0
        %483 = vmatprep.subr.bf16.mxu0 0
        %484 = vmatpush1.bf16.msra.mxu0 0
        %485 = vmatprep.subr.bf16.mxu0 0
        %486 = vmatpush1.bf16.msra.mxu0 0
        %487 = vmatprep.mubr.bf16.mxu0 0
        %488 = vmatmul.mubr.bf16.gmra.mrb[0].mxu0 %v453
        %v489 = vpop.f32.mrb[0].mxu0
        %v490 = vadd.f32 0.0, %v489
        %v491 = vpop.f32.mrb[0].mxu0
        %v492 = vpop.f32.mrb[0].mxu0
        %v493 = vadd.f32 0.0, %v492
        %v494 = vpop.f32.mrb[0].mxu0
        %495 = vdwg.mxu0
        %v498 = vunpack.c.l.b16 %v429
        %v499 = vunpack.c.l.b16 %v430
        %v500 = vpack.c.b16 %v499, %v498
        %v502 = vsel %vm451, %v500, 0
        %504 = vmatprep.subr.bf16.mxu0 0
        %505 = vmatpush1.bf16.msra.mxu0 %v431
        %506 = vmatprep.subr.bf16.mxu0 0
        %507 = vmatpush1.bf16.msra.mxu0 0
        %508 = vmatprep.subr.bf16.mxu0 0
        %509 = vmatpush1.bf16.msra.mxu0 0
        %510 = vmatprep.subr.bf16.mxu0 0
        %511 = vmatpush1.bf16.msra.mxu0 0
        %512 = vmatprep.subr.bf16.mxu0 0
        %513 = vmatpush1.bf16.msra.mxu0 0
        %514 = vmatprep.subr.bf16.mxu0 0
        %515 = vmatpush1.bf16.msra.mxu0 0
        %516 = vmatprep.subr.bf16.mxu0 0
        %517 = vmatpush1.bf16.msra.mxu0 0
        %518 = vmatprep.subr.bf16.mxu0 0
        %519 = vmatpush1.bf16.msra.mxu0 0
        %520 = vmatprep.subr.bf16.mxu0 0
        %521 = vmatpush1.bf16.msra.mxu0 0
        %522 = vmatprep.subr.bf16.mxu0 0
        %523 = vmatpush1.bf16.msra.mxu0 0
        %524 = vmatprep.subr.bf16.mxu0 0
        %525 = vmatpush1.bf16.msra.mxu0 0
        %526 = vmatprep.subr.bf16.mxu0 0
        %527 = vmatpush1.bf16.msra.mxu0 0
        %528 = vmatprep.subr.bf16.mxu0 0
        %529 = vmatpush1.bf16.msra.mxu0 0
        %530 = vmatprep.subr.bf16.mxu0 0
        %531 = vmatpush1.bf16.msra.mxu0 0
        %532 = vmatprep.subr.bf16.mxu0 0
        %533 = vmatpush1.bf16.msra.mxu0 0
        %534 = vmatprep.subr.bf16.mxu0 0
        %535 = vmatpush1.bf16.msra.mxu0 0
        %536 = vmatprep.mubr.bf16.mxu0 0
        %537 = vmatmul.mubr.bf16.gmra.mrb[0].mxu0 %v502
        %v538 = vpop.f32.mrb[0].mxu0
        %v539 = vadd.f32 %v490, %v538
        %v540 = vpop.f32.mrb[0].mxu0
        %v541 = vpop.f32.mrb[0].mxu0
        %v542 = vadd.f32 %v493, %v541
        %v543 = vpop.f32.mrb[0].mxu0
        %544 = vdwg.mxu0
        %s545 = scalar_lea.vmem %s388, 16
        %v546 = vld [vmem:[%s545] sm:$0xf]
        %v547 = vld [vmem:[%s545 + $0x4] sm:$0xf]
        %v550 = vunpack.c.l.b16 %v546
        %v551 = vunpack.c.l.b16 %v547
        %v552 = vpack.c.b16 %v551, %v550
        %553 = vrot.lane.b32.xlu0 %v435, 126
        %v554 = vpop.permute.xlu0 %553
        %555 = vrot.lane.b32.xlu0 %v436, 126
        %v556 = vpop.permute.xlu0 %555
        %vm557 = vcmask 1031168
        %v558 = vsel %vm557, %v554, %v556
        %v561 = vsel %vm451, %v552, 0
        %563 = vmatprep.subr.bf16.mxu0 0
        %564 = vmatpush1.bf16.msra.mxu0 %v558
        %565 = vmatprep.subr.bf16.mxu0 0
        %566 = vmatpush1.bf16.msra.mxu0 0
        %567 = vmatprep.subr.bf16.mxu0 0
        %568 = vmatpush1.bf16.msra.mxu0 0
        %569 = vmatprep.subr.bf16.mxu0 0
        %570 = vmatpush1.bf16.msra.mxu0 0
        %571 = vmatprep.subr.bf16.mxu0 0
        %572 = vmatpush1.bf16.msra.mxu0 0
        %573 = vmatprep.subr.bf16.mxu0 0
        %574 = vmatpush1.bf16.msra.mxu0 0
        %575 = vmatprep.subr.bf16.mxu0 0
        %576 = vmatpush1.bf16.msra.mxu0 0
        %577 = vmatprep.subr.bf16.mxu0 0
        %578 = vmatpush1.bf16.msra.mxu0 0
        %579 = vmatprep.subr.bf16.mxu0 0
        %580 = vmatpush1.bf16.msra.mxu0 0
        %581 = vmatprep.subr.bf16.mxu0 0
        %582 = vmatpush1.bf16.msra.mxu0 0
        %583 = vmatprep.subr.bf16.mxu0 0
        %584 = vmatpush1.bf16.msra.mxu0 0
        %585 = vmatprep.subr.bf16.mxu0 0
        %586 = vmatpush1.bf16.msra.mxu0 0
        %587 = vmatprep.subr.bf16.mxu0 0
        %588 = vmatpush1.bf16.msra.mxu0 0
        %589 = vmatprep.subr.bf16.mxu0 0
        %590 = vmatpush1.bf16.msra.mxu0 0
        %591 = vmatprep.subr.bf16.mxu0 0
        %592 = vmatpush1.bf16.msra.mxu0 0
        %593 = vmatprep.subr.bf16.mxu0 0
        %594 = vmatpush1.bf16.msra.mxu0 0
        %595 = vmatprep.mubr.bf16.mxu0 0
        %596 = vmatmul.mubr.bf16.gmra.mrb[0].mxu0 %v561
        %v597 = vpop.f32.mrb[0].mxu0
        %v598 = vadd.f32 0.0, %v597
        %v599 = vpop.f32.mrb[0].mxu0
        %v600 = vpop.f32.mrb[0].mxu0
        %v601 = vadd.f32 0.0, %v600
        %v602 = vpop.f32.mrb[0].mxu0
        %603 = vdwg.mxu0
        %v604 = vadd.f32 %v539, %v598
        %v605 = vadd.f32 %v542, %v601
        %s606 = scalar_lea.vmem %s388, 24
        %v607 = vld [vmem:[%s606] sm:$0xf]
        %v608 = vld [vmem:[%s606 + $0x4] sm:$0xf]
        %v611 = vunpack.c.l.b16 %v607
        %v612 = vunpack.c.l.b16 %v608
        %v613 = vpack.c.b16 %v612, %v611
        %614 = vrot.lane.b32.xlu0 %v435, 125
        %v615 = vpop.permute.xlu0 %614
        %616 = vrot.lane.b32.xlu0 %v436, 125
        %v617 = vpop.permute.xlu0 %616
        %vm618 = vcmask 1022976
        %v619 = vsel %vm618, %v615, %v617
        %v622 = vsel %vm451, %v613, 0
        %624 = vmatprep.subr.bf16.mxu0 0
        %625 = vmatpush1.bf16.msra.mxu0 %v619
        %626 = vmatprep.subr.bf16.mxu0 0
        %627 = vmatpush1.bf16.msra.mxu0 0
        %628 = vmatprep.subr.bf16.mxu0 0
        %629 = vmatpush1.bf16.msra.mxu0 0
        %630 = vmatprep.subr.bf16.mxu0 0
        %631 = vmatpush1.bf16.msra.mxu0 0
        %632 = vmatprep.subr.bf16.mxu0 0
        %633 = vmatpush1.bf16.msra.mxu0 0
        %634 = vmatprep.subr.bf16.mxu0 0
        %635 = vmatpush1.bf16.msra.mxu0 0
        %636 = vmatprep.subr.bf16.mxu0 0
        %637 = vmatpush1.bf16.msra.mxu0 0
        %638 = vmatprep.subr.bf16.mxu0 0
        %639 = vmatpush1.bf16.msra.mxu0 0
        %640 = vmatprep.subr.bf16.mxu0 0
        %641 = vmatpush1.bf16.msra.mxu0 0
        %642 = vmatprep.subr.bf16.mxu0 0
        %643 = vmatpush1.bf16.msra.mxu0 0
        %644 = vmatprep.subr.bf16.mxu0 0
        %645 = vmatpush1.bf16.msra.mxu0 0
        %646 = vmatprep.subr.bf16.mxu0 0
        %647 = vmatpush1.bf16.msra.mxu0 0
        %648 = vmatprep.subr.bf16.mxu0 0
        %649 = vmatpush1.bf16.msra.mxu0 0
        %650 = vmatprep.subr.bf16.mxu0 0
        %651 = vmatpush1.bf16.msra.mxu0 0
        %652 = vmatprep.subr.bf16.mxu0 0
        %653 = vmatpush1.bf16.msra.mxu0 0
        %654 = vmatprep.subr.bf16.mxu0 0
        %655 = vmatpush1.bf16.msra.mxu0 0
        %656 = vmatprep.mubr.bf16.mxu0 0
        %657 = vmatmul.mubr.bf16.gmra.mrb[0].mxu0 %v622
        %v658 = vpop.f32.mrb[0].mxu0
        %v659 = vadd.f32 0.0, %v658
        %v660 = vpop.f32.mrb[0].mxu0
        %v661 = vpop.f32.mrb[0].mxu0
        %v662 = vadd.f32 0.0, %v661
        %v663 = vpop.f32.mrb[0].mxu0
        %664 = vdwg.mxu0
        %v665 = vadd.f32 %v604, %v659
        %v666 = vadd.f32 %v605, %v662
        %s667 = scalar_lea.vmem %s388, 32
        %v668 = vld [vmem:[%s667] sm:$0xf]
        %v669 = vld [vmem:[%s667 + $0x4] sm:$0xf]
        %v672 = vunpack.c.l.b16 %v668
        %v673 = vunpack.c.l.b16 %v669
        %v674 = vpack.c.b16 %v673, %v672
        %675 = vrot.lane.b32.xlu0 %v435, 124
        %v676 = vpop.permute.xlu0 %675
        %677 = vrot.lane.b32.xlu0 %v436, 124
        %v678 = vpop.permute.xlu0 %677
        %vm679 = vcmask 1014784
        %v680 = vsel %vm679, %v676, %v678
        %v683 = vsel %vm451, %v674, 0
        %685 = vmatprep.subr.bf16.mxu0 0
        %686 = vmatpush1.bf16.msra.mxu0 %v680
        %687 = vmatprep.subr.bf16.mxu0 0
        %688 = vmatpush1.bf16.msra.mxu0 0
        %689 = vmatprep.subr.bf16.mxu0 0
        %690 = vmatpush1.bf16.msra.mxu0 0
        %691 = vmatprep.subr.bf16.mxu0 0
        %692 = vmatpush1.bf16.msra.mxu0 0
        %693 = vmatprep.subr.bf16.mxu0 0
        %694 = vmatpush1.bf16.msra.mxu0 0
        %695 = vmatprep.subr.bf16.mxu0 0
        %696 = vmatpush1.bf16.msra.mxu0 0
        %697 = vmatprep.subr.bf16.mxu0 0
        %698 = vmatpush1.bf16.msra.mxu0 0
        %699 = vmatprep.subr.bf16.mxu0 0
        %700 = vmatpush1.bf16.msra.mxu0 0
        %701 = vmatprep.subr.bf16.mxu0 0
        %702 = vmatpush1.bf16.msra.mxu0 0
        %703 = vmatprep.subr.bf16.mxu0 0
        %704 = vmatpush1.bf16.msra.mxu0 0
        %705 = vmatprep.subr.bf16.mxu0 0
        %706 = vmatpush1.bf16.msra.mxu0 0
        %707 = vmatprep.subr.bf16.mxu0 0
        %708 = vmatpush1.bf16.msra.mxu0 0
        %709 = vmatprep.subr.bf16.mxu0 0
        %710 = vmatpush1.bf16.msra.mxu0 0
        %711 = vmatprep.subr.bf16.mxu0 0
        %712 = vmatpush1.bf16.msra.mxu0 0
        %713 = vmatprep.subr.bf16.mxu0 0
        %714 = vmatpush1.bf16.msra.mxu0 0
        %715 = vmatprep.subr.bf16.mxu0 0
        %716 = vmatpush1.bf16.msra.mxu0 0
        %717 = vmatprep.mubr.bf16.mxu0 0
        %718 = vmatmul.mubr.bf16.gmra.mrb[0].mxu0 %v683
        %v719 = vpop.f32.mrb[0].mxu0
        %v720 = vadd.f32 0.0, %v719
        %v721 = vpop.f32.mrb[0].mxu0
        %v722 = vpop.f32.mrb[0].mxu0
        %v723 = vadd.f32 0.0, %v722
        %v724 = vpop.f32.mrb[0].mxu0
        %725 = vdwg.mxu0
        %v726 = vadd.f32 %v665, %v720
        %v727 = vadd.f32 %v666, %v723
        %s728 = scalar_lea.vmem %s388, 40
        %v729 = vld [vmem:[%s728] sm:$0xf]
        %v730 = vld [vmem:[%s728 + $0x4] sm:$0xf]
        %v733 = vunpack.c.l.b16 %v729
        %v734 = vunpack.c.l.b16 %v730
        %v735 = vpack.c.b16 %v734, %v733
        %736 = vrot.lane.b32.xlu0 %v435, 123
        %v737 = vpop.permute.xlu0 %736
        %738 = vrot.lane.b32.xlu0 %v436, 123
        %v739 = vpop.permute.xlu0 %738
        %vm740 = vcmask 1006592
        %v741 = vsel %vm740, %v737, %v739
        %v744 = vsel %vm451, %v735, 0
        %746 = vmatprep.subr.bf16.mxu0 0
        %747 = vmatpush1.bf16.msra.mxu0 %v741
        %748 = vmatprep.subr.bf16.mxu0 0
        %749 = vmatpush1.bf16.msra.mxu0 0
        %750 = vmatprep.subr.bf16.mxu0 0
        %751 = vmatpush1.bf16.msra.mxu0 0
        %752 = vmatprep.subr.bf16.mxu0 0
        %753 = vmatpush1.bf16.msra.mxu0 0
        %754 = vmatprep.subr.bf16.mxu0 0
        %755 = vmatpush1.bf16.msra.mxu0 0
        %756 = vmatprep.subr.bf16.mxu0 0
        %757 = vmatpush1.bf16.msra.mxu0 0
        %758 = vmatprep.subr.bf16.mxu0 0
        %759 = vmatpush1.bf16.msra.mxu0 0
        %760 = vmatprep.subr.bf16.mxu0 0
        %761 = vmatpush1.bf16.msra.mxu0 0
        %762 = vmatprep.subr.bf16.mxu0 0
        %763 = vmatpush1.bf16.msra.mxu0 0
        %764 = vmatprep.subr.bf16.mxu0 0
        %765 = vmatpush1.bf16.msra.mxu0 0
        %766 = vmatprep.subr.bf16.mxu0 0
        %767 = vmatpush1.bf16.msra.mxu0 0
        %768 = vmatprep.subr.bf16.mxu0 0
        %769 = vmatpush1.bf16.msra.mxu0 0
        %770 = vmatprep.subr.bf16.mxu0 0
        %771 = vmatpush1.bf16.msra.mxu0 0
        %772 = vmatprep.subr.bf16.mxu0 0
        %773 = vmatpush1.bf16.msra.mxu0 0
        %774 = vmatprep.subr.bf16.mxu0 0
        %775 = vmatpush1.bf16.msra.mxu0 0
        %776 = vmatprep.subr.bf16.mxu0 0
        %777 = vmatpush1.bf16.msra.mxu0 0
        %778 = vmatprep.mubr.bf16.mxu0 0
        %779 = vmatmul.mubr.bf16.gmra.mrb[0].mxu0 %v744
        %v780 = vpop.f32.mrb[0].mxu0
        %v781 = vadd.f32 0.0, %v780
        %v782 = vpop.f32.mrb[0].mxu0
        %v783 = vpop.f32.mrb[0].mxu0
        %v784 = vadd.f32 0.0, %v783
        %v785 = vpop.f32.mrb[0].mxu0
        %786 = vdwg.mxu0
        %v787 = vadd.f32 %v726, %v781
        %v788 = vadd.f32 %v727, %v784
        %s789 = scalar_lea.vmem %s388, 48
        %v790 = vld [vmem:[%s789] sm:$0xf]
        %v791 = vld [vmem:[%s789 + $0x4] sm:$0xf]
        %v794 = vunpack.c.l.b16 %v790
        %v795 = vunpack.c.l.b16 %v791
        %v796 = vpack.c.b16 %v795, %v794
        %797 = vrot.lane.b32.xlu0 %v435, 122
        %v798 = vpop.permute.xlu0 %797
        %799 = vrot.lane.b32.xlu0 %v436, 122
        %v800 = vpop.permute.xlu0 %799
        %vm801 = vcmask 998400
        %v802 = vsel %vm801, %v798, %v800
        %v805 = vsel %vm451, %v796, 0
        %807 = vmatprep.subr.bf16.mxu0 0
        %808 = vmatpush1.bf16.msra.mxu0 %v802
        %809 = vmatprep.subr.bf16.mxu0 0
        %810 = vmatpush1.bf16.msra.mxu0 0
        %811 = vmatprep.subr.bf16.mxu0 0
        %812 = vmatpush1.bf16.msra.mxu0 0
        %813 = vmatprep.subr.bf16.mxu0 0
        %814 = vmatpush1.bf16.msra.mxu0 0
        %815 = vmatprep.subr.bf16.mxu0 0
        %816 = vmatpush1.bf16.msra.mxu0 0
        %817 = vmatprep.subr.bf16.mxu0 0
        %818 = vmatpush1.bf16.msra.mxu0 0
        %819 = vmatprep.subr.bf16.mxu0 0
        %820 = vmatpush1.bf16.msra.mxu0 0
        %821 = vmatprep.subr.bf16.mxu0 0
        %822 = vmatpush1.bf16.msra.mxu0 0
        %823 = vmatprep.subr.bf16.mxu0 0
        %824 = vmatpush1.bf16.msra.mxu0 0
        %825 = vmatprep.subr.bf16.mxu0 0
        %826 = vmatpush1.bf16.msra.mxu0 0
        %827 = vmatprep.subr.bf16.mxu0 0
        %828 = vmatpush1.bf16.msra.mxu0 0
        %829 = vmatprep.subr.bf16.mxu0 0
        %830 = vmatpush1.bf16.msra.mxu0 0
        %831 = vmatprep.subr.bf16.mxu0 0
        %832 = vmatpush1.bf16.msra.mxu0 0
        %833 = vmatprep.subr.bf16.mxu0 0
        %834 = vmatpush1.bf16.msra.mxu0 0
        %835 = vmatprep.subr.bf16.mxu0 0
        %836 = vmatpush1.bf16.msra.mxu0 0
        %837 = vmatprep.subr.bf16.mxu0 0
        %838 = vmatpush1.bf16.msra.mxu0 0
        %839 = vmatprep.mubr.bf16.mxu0 0
        %840 = vmatmul.mubr.bf16.gmra.mrb[0].mxu0 %v805
        %v841 = vpop.f32.mrb[0].mxu0
        %v842 = vadd.f32 0.0, %v841
        %v843 = vpop.f32.mrb[0].mxu0
        %v844 = vpop.f32.mrb[0].mxu0
        %v845 = vadd.f32 0.0, %v844
        %v846 = vpop.f32.mrb[0].mxu0
        %847 = vdwg.mxu0
        %v848 = vadd.f32 %v787, %v842
        %v849 = vadd.f32 %v788, %v845
        %s850 = scalar_lea.vmem %s388, 56
        %v851 = vld [vmem:[%s850] sm:$0xf]
        %v852 = vld [vmem:[%s850 + $0x4] sm:$0xf]
        %v855 = vunpack.c.l.b16 %v851
        %v856 = vunpack.c.l.b16 %v852
        %v857 = vpack.c.b16 %v856, %v855
        %858 = vrot.lane.b32.xlu0 %v435, 121
        %v859 = vpop.permute.xlu0 %858
        %860 = vrot.lane.b32.xlu0 %v436, 121
        %v861 = vpop.permute.xlu0 %860
        %vm862 = vcmask 990208
        %v863 = vsel %vm862, %v859, %v861
        %v866 = vsel %vm451, %v857, 0
        %868 = vmatprep.subr.bf16.mxu0 0
        %869 = vmatpush1.bf16.msra.mxu0 %v863
        %870 = vmatprep.subr.bf16.mxu0 0
        %871 = vmatpush1.bf16.msra.mxu0 0
        %872 = vmatprep.subr.bf16.mxu0 0
        %873 = vmatpush1.bf16.msra.mxu0 0
        %874 = vmatprep.subr.bf16.mxu0 0
        %875 = vmatpush1.bf16.msra.mxu0 0
        %876 = vmatprep.subr.bf16.mxu0 0
        %877 = vmatpush1.bf16.msra.mxu0 0
        %878 = vmatprep.subr.bf16.mxu0 0
        %879 = vmatpush1.bf16.msra.mxu0 0
        %880 = vmatprep.subr.bf16.mxu0 0
        %881 = vmatpush1.bf16.msra.mxu0 0
        %882 = vmatprep.subr.bf16.mxu0 0
        %883 = vmatpush1.bf16.msra.mxu0 0
        %884 = vmatprep.subr.bf16.mxu0 0
        %885 = vmatpush1.bf16.msra.mxu0 0
        %886 = vmatprep.subr.bf16.mxu0 0
        %887 = vmatpush1.bf16.msra.mxu0 0
        %888 = vmatprep.subr.bf16.mxu0 0
        %889 = vmatpush1.bf16.msra.mxu0 0
        %890 = vmatprep.subr.bf16.mxu0 0
        %891 = vmatpush1.bf16.msra.mxu0 0
        %892 = vmatprep.subr.bf16.mxu0 0
        %893 = vmatpush1.bf16.msra.mxu0 0
        %894 = vmatprep.subr.bf16.mxu0 0
        %895 = vmatpush1.bf16.msra.mxu0 0
        %896 = vmatprep.subr.bf16.mxu0 0
        %897 = vmatpush1.bf16.msra.mxu0 0
        %898 = vmatprep.subr.bf16.mxu0 0
        %899 = vmatpush1.bf16.msra.mxu0 0
        %900 = vmatprep.mubr.bf16.mxu0 0
        %901 = vmatmul.mubr.bf16.gmra.mrb[0].mxu0 %v866
        %v902 = vpop.f32.mrb[0].mxu0
        %v903 = vadd.f32 0.0, %v902
        %v904 = vpop.f32.mrb[0].mxu0
        %v905 = vpop.f32.mrb[0].mxu0
        %v906 = vadd.f32 0.0, %v905
        %v907 = vpop.f32.mrb[0].mxu0
        %908 = vdwg.mxu0
        %v909 = vadd.f32 %v848, %v903
        %v910 = vadd.f32 %v849, %v906
        %s911 = scalar_lea.vmem %s388, 64
        %v912 = vld [vmem:[%s911] sm:$0xf]
        %v913 = vld [vmem:[%s911 + $0x4] sm:$0xf]
        %v916 = vunpack.c.l.b16 %v912
        %v917 = vunpack.c.l.b16 %v913
        %v918 = vpack.c.b16 %v917, %v916
        %919 = vrot.lane.b32.xlu0 %v435, 120
        %v920 = vpop.permute.xlu0 %919
        %921 = vrot.lane.b32.xlu0 %v436, 120
        %v922 = vpop.permute.xlu0 %921
        %vm923 = vcmask 982016
        %v924 = vsel %vm923, %v920, %v922
        %v927 = vsel %vm451, %v918, 0
        %929 = vmatprep.subr.bf16.mxu0 0
        %930 = vmatpush1.bf16.msra.mxu0 %v924
        %931 = vmatprep.subr.bf16.mxu0 0
        %932 = vmatpush1.bf16.msra.mxu0 0
        %933 = vmatprep.subr.bf16.mxu0 0
        %934 = vmatpush1.bf16.msra.mxu0 0
        %935 = vmatprep.subr.bf16.mxu0 0
        %936 = vmatpush1.bf16.msra.mxu0 0
        %937 = vmatprep.subr.bf16.mxu0 0
        %938 = vmatpush1.bf16.msra.mxu0 0
        %939 = vmatprep.subr.bf16.mxu0 0
        %940 = vmatpush1.bf16.msra.mxu0 0
        %941 = vmatprep.subr.bf16.mxu0 0
        %942 = vmatpush1.bf16.msra.mxu0 0
        %943 = vmatprep.subr.bf16.mxu0 0
        %944 = vmatpush1.bf16.msra.mxu0 0
        %945 = vmatprep.subr.bf16.mxu0 0
        %946 = vmatpush1.bf16.msra.mxu0 0
        %947 = vmatprep.subr.bf16.mxu0 0
        %948 = vmatpush1.bf16.msra.mxu0 0
        %949 = vmatprep.subr.bf16.mxu0 0
        %950 = vmatpush1.bf16.msra.mxu0 0
        %951 = vmatprep.subr.bf16.mxu0 0
        %952 = vmatpush1.bf16.msra.mxu0 0
        %953 = vmatprep.subr.bf16.mxu0 0
        %954 = vmatpush1.bf16.msra.mxu0 0
        %955 = vmatprep.subr.bf16.mxu0 0
        %956 = vmatpush1.bf16.msra.mxu0 0
        %957 = vmatprep.subr.bf16.mxu0 0
        %958 = vmatpush1.bf16.msra.mxu0 0
        %959 = vmatprep.subr.bf16.mxu0 0
        %960 = vmatpush1.bf16.msra.mxu0 0
        %961 = vmatprep.mubr.bf16.mxu0 0
        %962 = vmatmul.mubr.bf16.gmra.mrb[0].mxu0 %v927
        %v963 = vpop.f32.mrb[0].mxu0
        %v964 = vadd.f32 0.0, %v963
        %v965 = vpop.f32.mrb[0].mxu0
        %v966 = vpop.f32.mrb[0].mxu0
        %v967 = vadd.f32 0.0, %v966
        %v968 = vpop.f32.mrb[0].mxu0
        %969 = vdwg.mxu0
        %v970 = vadd.f32 %v909, %v964
        %v971 = vadd.f32 %v910, %v967
        %s972 = scalar_lea.vmem %s388, 72
        %v973 = vld [vmem:[%s972] sm:$0xf]
        %v974 = vld [vmem:[%s972 + $0x4] sm:$0xf]
        %v977 = vunpack.c.l.b16 %v973
        %v978 = vunpack.c.l.b16 %v974
        %v979 = vpack.c.b16 %v978, %v977
        %980 = vrot.lane.b32.xlu0 %v435, 119
        %v981 = vpop.permute.xlu0 %980
        %982 = vrot.lane.b32.xlu0 %v436, 119
        %v983 = vpop.permute.xlu0 %982
        %vm984 = vcmask 973824
        %v985 = vsel %vm984, %v981, %v983
        %v988 = vsel %vm451, %v979, 0
        %990 = vmatprep.subr.bf16.mxu0 0
        %991 = vmatpush1.bf16.msra.mxu0 %v985
        %992 = vmatprep.subr.bf16.mxu0 0
        %993 = vmatpush1.bf16.msra.mxu0 0
        %994 = vmatprep.subr.bf16.mxu0 0
        %995 = vmatpush1.bf16.msra.mxu0 0
        %996 = vmatprep.subr.bf16.mxu0 0
        %997 = vmatpush1.bf16.msra.mxu0 0
        %998 = vmatprep.subr.bf16.mxu0 0
        %999 = vmatpush1.bf16.msra.mxu0 0
        %1000 = vmatprep.subr.bf16.mxu0 0
        %1001 = vmatpush1.bf16.msra.mxu0 0
        %1002 = vmatprep.subr.bf16.mxu0 0
        %1003 = vmatpush1.bf16.msra.mxu0 0
        %1004 = vmatprep.subr.bf16.mxu0 0
        %1005 = vmatpush1.bf16.msra.mxu0 0
        %1006 = vmatprep.subr.bf16.mxu0 0
        %1007 = vmatpush1.bf16.msra.mxu0 0
        %1008 = vmatprep.subr.bf16.mxu0 0
        %1009 = vmatpush1.bf16.msra.mxu0 0
        %1010 = vmatprep.subr.bf16.mxu0 0
        %1011 = vmatpush1.bf16.msra.mxu0 0
        %1012 = vmatprep.subr.bf16.mxu0 0
        %1013 = vmatpush1.bf16.msra.mxu0 0
        %1014 = vmatprep.subr.bf16.mxu0 0
        %1015 = vmatpush1.bf16.msra.mxu0 0
        %1016 = vmatprep.subr.bf16.mxu0 0
        %1017 = vmatpush1.bf16.msra.mxu0 0
        %1018 = vmatprep.subr.bf16.mxu0 0
        %1019 = vmatpush1.bf16.msra.mxu0 0
        %1020 = vmatprep.subr.bf16.mxu0 0
        %1021 = vmatpush1.bf16.msra.mxu0 0
        %1022 = vmatprep.mubr.bf16.mxu0 0
        %1023 = vmatmul.mubr.bf16.gmra.mrb[0].mxu0 %v988
        %v1024 = vpop.f32.mrb[0].mxu0
        %v1025 = vadd.f32 0.0, %v1024
        %v1026 = vpop.f32.mrb[0].mxu0
        %v1027 = vpop.f32.mrb[0].mxu0
        %v1028 = vadd.f32 0.0, %v1027
        %v1029 = vpop.f32.mrb[0].mxu0
        %1030 = vdwg.mxu0
        %v1031 = vadd.f32 %v970, %v1025
        %v1032 = vadd.f32 %v971, %v1028
        %s1033 = scalar_lea.vmem %s388, 80
        %v1034 = vld [vmem:[%s1033] sm:$0xf]
        %v1035 = vld [vmem:[%s1033 + $0x4] sm:$0xf]
        %v1038 = vunpack.c.l.b16 %v1034
        %v1039 = vunpack.c.l.b16 %v1035
        %v1040 = vpack.c.b16 %v1039, %v1038
        %1041 = vrot.lane.b32.xlu0 %v435, 118
        %v1042 = vpop.permute.xlu0 %1041
        %1043 = vrot.lane.b32.xlu0 %v436, 118
        %v1044 = vpop.permute.xlu0 %1043
        %vm1045 = vcmask 965632
        %v1046 = vsel %vm1045, %v1042, %v1044
        %v1049 = vsel %vm451, %v1040, 0
        %1051 = vmatprep.subr.bf16.mxu0 0
        %1052 = vmatpush1.bf16.msra.mxu0 %v1046
        %1053 = vmatprep.subr.bf16.mxu0 0
        %1054 = vmatpush1.bf16.msra.mxu0 0
        %1055 = vmatprep.subr.bf16.mxu0 0
        %1056 = vmatpush1.bf16.msra.mxu0 0
        %1057 = vmatprep.subr.bf16.mxu0 0
        %1058 = vmatpush1.bf16.msra.mxu0 0
        %1059 = vmatprep.subr.bf16.mxu0 0
        %1060 = vmatpush1.bf16.msra.mxu0 0
        %1061 = vmatprep.subr.bf16.mxu0 0
        %1062 = vmatpush1.bf16.msra.mxu0 0
        %1063 = vmatprep.subr.bf16.mxu0 0
        %1064 = vmatpush1.bf16.msra.mxu0 0
        %1065 = vmatprep.subr.bf16.mxu0 0
        %1066 = vmatpush1.bf16.msra.mxu0 0
        %1067 = vmatprep.subr.bf16.mxu0 0
        %1068 = vmatpush1.bf16.msra.mxu0 0
        %1069 = vmatprep.subr.bf16.mxu0 0
        %1070 = vmatpush1.bf16.msra.mxu0 0
        %1071 = vmatprep.subr.bf16.mxu0 0
        %1072 = vmatpush1.bf16.msra.mxu0 0
        %1073 = vmatprep.subr.bf16.mxu0 0
        %1074 = vmatpush1.bf16.msra.mxu0 0
        %1075 = vmatprep.subr.bf16.mxu0 0
        %1076 = vmatpush1.bf16.msra.mxu0 0
        %1077 = vmatprep.subr.bf16.mxu0 0
        %1078 = vmatpush1.bf16.msra.mxu0 0
        %1079 = vmatprep.subr.bf16.mxu0 0
        %1080 = vmatpush1.bf16.msra.mxu0 0
        %1081 = vmatprep.subr.bf16.mxu0 0
        %1082 = vmatpush1.bf16.msra.mxu0 0
        %1083 = vmatprep.mubr.bf16.mxu0 0
        %1084 = vmatmul.mubr.bf16.gmra.mrb[0].mxu0 %v1049
        %v1085 = vpop.f32.mrb[0].mxu0
        %v1086 = vadd.f32 0.0, %v1085
        %v1087 = vpop.f32.mrb[0].mxu0
        %v1088 = vpop.f32.mrb[0].mxu0
        %v1089 = vadd.f32 0.0, %v1088
        %v1090 = vpop.f32.mrb[0].mxu0
        %1091 = vdwg.mxu0
        %v1092 = vadd.f32 %v1031, %v1086
        %v1093 = vadd.f32 %v1032, %v1089
        %v1094 = vld [vmem:[%s393] sm:$0xff]
        %v1095 = vld [vmem:[%s393 + $0x8] sm:$0xff]
        %1097 = vset.pattern.permute.xlu0 0
        %1098 = vperm.xlu0 %1097, %v1094
        %v1099 = vpop.permute.xlu0 %1098
        %1102 = vset.pattern.permute.xlu0 0
        %1103 = vperm.xlu0 %1102, %v1095
        %v1104 = vpop.permute.xlu0 %1103
        %v1106 = vadd.f32 %v1092, %v1099
        %v1107 = vadd.f32 %v1093, %v1104
        %vm1108 = vcmp.ge.f32.partialorder %v1106, 0.0
        %vm1109 = vcmp.ge.f32.partialorder %v1107, 0.0
        %v1110 = vmul.f32 %v1106, 0.2
        %v1111 = vmul.f32 %v1107, 0.2
        %v1112 = vsel %vm1108, %v1106, %v1110
        %v1113 = vsel %vm1109, %v1107, %v1111
        %v1114 = vpack.c.bf16 %v1113, %v1112
        %v1116 = vunpack.c.l.b16 %v1114
        %v1117 = vunpack.c.h.b16 %v1114
        %v1118 = vpack.c.b16 %v1116, %v1116
        %v1119 = vpack.c.b16 %v1117, %v1117
        %1122 = vst [vmem:[%s408] sm:$0xf] %v1118
        %1123 = vst [vmem:[%s408 + $0x4] sm:$0xf] %v1119
        %s1124 = smul.u32 2, %s20
        %p1125 = scmp.lt.s32.totalorder %s21, 1
        %s1126 = scalar_select %p1125, %s21, 1
        %p1127 = scmp.lt.s32.totalorder %s1124, 1
        %s1128 = scalar_select %p1127, %s1124, 1
        %p1129 = scmp.lt.s32.totalorder %s22, 0
        %s1130 = scalar_select %p1129, %s22, 0
        %s1131 = sadd.s32 %s1130, %s1128
        %s1132 = smul.addr %s1126, 2
        %s1133 = sadd.s32 %s1131, %s1132
        %s1134 = smul.addr %s1133, 4
        %s1135 = scalar_lea.vmem %s4, %s1134
        // Predicated region
        $region119: #{audio_discriminator_forward.18} parent=109 // pred_check
          %p1136 = pneg %p170
        $region120: #{audio_discriminator_forward.18} parent=109 // pred_check_branch
          %1138 = sbr.rel (%p1136) target = $region122
        $region121: #{audio_discriminator_forward.18} parent=109 // pred_region
          %s1139 = smul.u32 2, %s20
        $region122: #{audio_discriminator_forward.18} parent=109 // pred_fallthru
          _
      $region110: #{audio_discriminator_forward.18} parent=5 // pred_fallthru
        _
      %p1140 = scmp.le.s32.totalorder 2, %s10
      // Predicated region
      $region123: #{audio_discriminator_forward.18} parent=5 // pred_check
        %p1141 = pneg %p1140
      $region124: #{audio_discriminator_forward.18} parent=5 // pred_check_branch
        %1143 = sbr.rel (%p1141) target = $region126
      $region125: #{audio_discriminator_forward.18} parent=5 // pred_region
        %s1144 = ssub.s32 %s10, 2
        // Predicated region
        $region127: #{audio_discriminator_forward.18} parent=125 // pred_check
          %p1145 = pneg %p176
        $region128: #{audio_discriminator_forward.18} parent=125 // pred_check_branch
          %1147 = sbr.rel (%p1145) target = $region130
        $region129: #{audio_discriminator_forward.18} parent=125 // pred_region
          %s1148 = smul.u32 2, %s23
          %p1149 = scmp.lt.s32.totalorder %s24, 1
          %s1150 = scalar_select %p1149, %s24, 1
          %p1151 = scmp.lt.s32.totalorder %s1148, 1
          %s1152 = scalar_select %p1151, %s1148, 1
          %p1153 = scmp.lt.s32.totalorder %s25, 0
          %s1154 = scalar_select %p1153, %s25, 0
          %s1155 = sadd.s32 %s1154, %s1152
          %s1156 = smul.addr %s1150, 2
          %s1157 = sadd.s32 %s1155, %s1156
          %s1158 = smul.addr %s1157, 4
          %s1159 = scalar_lea.vmem %s4, %s1158
        $region130: #{audio_discriminator_forward.18} parent=125 // pred_fallthru
          _
      $region126: #{audio_discriminator_forward.18} parent=5 // pred_fallthru
        _
    $region6: #{audio_discriminator_forward.18} parent=1 // loop_footer
      %s14 = sadd.s32 1, %s10
    $region7: #{audio_discriminator_forward.18} parent=1 // loop_footer_branch
      %9 = sbr.rel target = $region3
    $region8: #{audio_discriminator_forward.18} parent=1 // loop_exit
      _

// kernel: audio_discriminator_forward.21
$region0: #{audio_discriminator_forward.21}
  #allocation0 [shape = 'u32[]', space=smem, size = 0x4, offset = 0x4, fixed_abs, tag = 'smem constant byte address 0x4 - core index']
  #allocation1 [shape = 'u32[144,128]{1,0:T(1,128)}', space=vmem, size = 0x12000, scoped, tag = 'internal scratch']
  #allocation2 [shape = 'bf16[32,256]{1,0:T(16,128)(2,1)}', space=vmem, size = 0x4000, scoped, tag = 'scratch operand']
  %s0 = inlined_call_operand.vmem [shape: bf16[1,3,16,32], index: 0, kind: input, shape index: {}]
  %s1 = inlined_call_operand.vmem [shape: f32[1,16,1], index: 1, kind: input, shape index: {}]
  %s2 = inlined_call_operand.vmem [shape: bf16[2,32,256], index: 2, kind: input, shape index: {}, may-alias: {2,3}]
  %s3 = inlined_call_operand.vmem [shape: bf16[2,32,256], index: 3, kind: input, shape index: {}, may-alias: {2,3}]
  %s4 = inlined_call_operand.vmem [shape: bf16[2,16,128], index: 4, kind: output, shape index: {}]
  %s5 = sld [smem:[#allocation0]]
  $region131: #{audio_discriminator_forward.21} parent=0
    _
  %s7 = ssub.s32 1, %s5
  %s8 = scalar_select 0, %s7, %s5
  $region1: #{audio_discriminator_forward.21} parent=0
    #allocation3 [shape = 'u8[16384]{0}', space=vmem, size = 0x4000, scoped, tag = 'input window, operand 2']
    #allocation4 [shape = 'u8[16384]{0}', space=vmem, size = 0x4000, scoped, tag = 'input window, operand 3']
    loop: start=0, step=1, limit=4
    $region2: #{audio_discriminator_forward.21} parent=1 // loop_pre_header
      _
    $region3: #{audio_discriminator_forward.21} parent=1 // loop_header
      %s10 = sphi 0, %s14
      %p11 = scmp.ge.s32.totalorder %s10, 4
      %s17 = sphi 0, %s36
      %s18 = sphi 0, %s32
      %s19 = sphi 0, %s28
      %s20 = sphi 0, %s17
      %s21 = sphi 0, %s18
      %s22 = sphi 0, %s19
      %s23 = sphi 0, %s20
      %s24 = sphi 0, %s21
      %s25 = sphi 0, %s22
      %s39 = sphi 0, %s41
      %s42 = sphi 0, %s39
      %s43 = sphi 0, %s42
      %s59 = sphi 0, %s43
      %s65 = sphi 0, %s67
      %s68 = sphi 0, %s65
      %s69 = sphi 0, %s68
      %s85 = sphi 0, %s69
      %s93 = sphi 0, %s95
      %s96 = sphi 0, %s93
      %s97 = sphi 0, %s96
      %s113 = sphi 0, %s97
      %s123 = sphi 0, %s125
      %s126 = sphi 0, %s123
      %s127 = sphi 0, %s126
      %s143 = sphi 0, %s127
      %s153 = sphi 0, %s155
      %s156 = sphi 0, %s153
      %s157 = sphi 0, %s156
      %s173 = sphi 0, %s157
    $region4: #{audio_discriminator_forward.21} parent=1 // loop_header_branch
      %13 = sbr.rel (%p11) target = $region8
    $region5: #{audio_discriminator_forward.21} parent=1 // loop_body
      %s15 = ssub.s32 %s10, 1
      %s16 = ssub.s32 %s10, 2
      %s26 = sadd.s32 1, %s19
      %p27 = scmp.ge.s32.totalorder %s26, 1
      %s28 = scalar_select %p27, 0, %s26
      %s29 = sadd.s32 1, %s18
      %s30 = scalar_select %p27, %s29, %s18
      %p31 = scmp.ge.s32.totalorder %s30, 2
      %s32 = scalar_select %p31, 0, %s30
      %s33 = sadd.s32 1, %s17
      %s34 = scalar_select %p31, %s33, %s17
      %p35 = scmp.ge.s32.totalorder %s34, 1
      %s36 = scalar_select %p35, 0, %s34
      %s37 = ssub.s32 %s17, %s36
      %p38 = scmp.eq.s32.totalorder %s37, 0
      %s40 = sadd.s32 %s39, 1
      %s41 = scalar_select %p38, %s39, %s40
      %p44 = pneg %p38
      %p45 = scmp.eq.s32.totalorder %s10, 1
      %p46 = por %p44, %p45
      %p47 = scmp.ne.s32.totalorder %s39, %s42
      %p48 = scmp.eq.s32.totalorder %s10, 0
      %p49 = por %p47, %p48
      %p50 = scmp.ne.s32.totalorder %s39, %s42
      %p51 = scmp.eq.s32.totalorder %s15, 1
      %p52 = por %p50, %p51
      %p53 = scmp.ne.s32.totalorder %s42, %s43
      %p54 = scmp.eq.s32.totalorder %s15, 0
      %p55 = por %p53, %p54
      %p56 = scmp.ne.s32.totalorder %s42, %s43
      %p57 = scmp.eq.s32.totalorder %s16, 1
      %p58 = por %p56, %p57
      %p60 = scmp.ne.s32.totalorder %s43, %s59
      %p61 = scmp.eq.s32.totalorder %s16, 0
      %p62 = por %p60, %p61
      %s63 = ssub.s32 %s17, %s36
      %p64 = scmp.eq.s32.totalorder %s63, 0
      %s66 = sadd.s32 %s65, 1
      %s67 = scalar_select %p64, %s65, %s66
      %p70 = pneg %p64
      %p71 = scmp.eq.s32.totalorder %s10, 1
      %p72 = por %p70, %p71
      %p73 = scmp.ne.s32.totalorder %s65, %s68
      %p74 = scmp.eq.s32.totalorder %s10, 0
      %p75 = por %p73, %p74
      %p76 = scmp.ne.s32.totalorder %s65, %s68
      %p77 = scmp.eq.s32.totalorder %s15, 1
      %p78 = por %p76, %p77
      %p79 = scmp.ne.s32.totalorder %s68, %s69
      %p80 = scmp.eq.s32.totalorder %s15, 0
      %p81 = por %p79, %p80
      %p82 = scmp.ne.s32.totalorder %s68, %s69
      %p83 = scmp.eq.s32.totalorder %s16, 1
      %p84 = por %p82, %p83
      %p86 = scmp.ne.s32.totalorder %s69, %s85
      %p87 = scmp.eq.s32.totalorder %s16, 0
      %p88 = por %p86, %p87
      %s89 = ssub.s32 %s18, %s32
      %s90 = ssub.s32 %s19, %s28
      %s91 = sor.u32 %s89, %s90
      %p92 = scmp.eq.s32.totalorder %s91, 0
      %s94 = sadd.s32 %s93, 1
      %s95 = scalar_select %p92, %s93, %s94
      %p98 = pneg %p92
      %p99 = scmp.eq.s32.totalorder %s10, 1
      %p100 = por %p98, %p99
      %p101 = scmp.ne.s32.totalorder %s93, %s96
      %p102 = scmp.eq.s32.totalorder %s10, 0
      %p103 = por %p101, %p102
      %p104 = scmp.ne.s32.totalorder %s93, %s96
      %p105 = scmp.eq.s32.totalorder %s15, 1
      %p106 = por %p104, %p105
      %p107 = scmp.ne.s32.totalorder %s96, %s97
      %p108 = scmp.eq.s32.totalorder %s15, 0
      %p109 = por %p107, %p108
      %p110 = scmp.ne.s32.totalorder %s96, %s97
      %p111 = scmp.eq.s32.totalorder %s16, 1
      %p112 = por %p110, %p111
      %p114 = scmp.ne.s32.totalorder %s97, %s113
      %p115 = scmp.eq.s32.totalorder %s16, 0
      %p116 = por %p114, %p115
      %s117 = sadd.s32 %s19, 1
      %s118 = sadd.s32 %s28, 1
      %s119 = ssub.s32 %s18, %s32
      %s120 = ssub.s32 %s117, %s118
      %s121 = sor.u32 %s119, %s120
      %p122 = scmp.eq.s32.totalorder %s121, 0
      %s124 = sadd.s32 %s123, 1
      %s125 = scalar_select %p122, %s123, %s124
      %p128 = pneg %p122
      %p129 = scmp.eq.s32.totalorder %s10, 1
      %p130 = por %p128, %p129
      %p131 = scmp.ne.s32.totalorder %s123, %s126
      %p132 = scmp.eq.s32.totalorder %s10, 0
      %p133 = por %p131, %p132
      %p134 = scmp.ne.s32.totalorder %s123, %s126
      %p135 = scmp.eq.s32.totalorder %s15, 1
      %p136 = por %p134, %p135
      %p137 = scmp.ne.s32.totalorder %s126, %s127
      %p138 = scmp.eq.s32.totalorder %s15, 0
      %p139 = por %p137, %p138
      %p140 = scmp.ne.s32.totalorder %s126, %s127
      %p141 = scmp.eq.s32.totalorder %s16, 1
      %p142 = por %p140, %p141
      %p144 = scmp.ne.s32.totalorder %s127, %s143
      %p145 = scmp.eq.s32.totalorder %s16, 0
      %p146 = por %p144, %p145
      %s147 = ssub.s32 %s18, %s32
      %s148 = ssub.s32 %s17, %s36
      %s149 = sor.u32 %s147, %s148
      %s150 = ssub.s32 %s19, %s28
      %s151 = sor.u32 %s149, %s150
      %p152 = scmp.eq.s32.totalorder %s151, 0
      %s154 = sadd.s32 %s153, 1
      %s155 = scalar_select %p152, %s153, %s154
      %p158 = pneg %p152
      %p159 = scmp.eq.s32.totalorder %s10, 1
      %p160 = por %p158, %p159
      %p161 = scmp.ne.s32.totalorder %s153, %s156
      %p162 = scmp.eq.s32.totalorder %s10, 0
      %p163 = por %p161, %p162
      %p164 = scmp.ne.s32.totalorder %s153, %s156
      %p165 = scmp.eq.s32.totalorder %s15, 1
      %p166 = por %p164, %p165
      %p167 = scmp.ne.s32.totalorder %s156, %s157
      %p168 = scmp.eq.s32.totalorder %s15, 0
      %p169 = por %p167, %p168
      %p170 = scmp.ne.s32.totalorder %s156, %s157
      %p171 = scmp.eq.s32.totalorder %s16, 1
      %p172 = por %p170, %p171
      %p174 = scmp.ne.s32.totalorder %s157, %s173
      %p175 = scmp.eq.s32.totalorder %s16, 0
      %p176 = por %p174, %p175
      %p177 = scmp.le.s32.totalorder 1, %s10
      %p178 = scmp.lt.s32.totalorder %s10, 3
      %p179 = pnand %p177, %p178
      %p180 = pneg %p179
      // Predicated region
      $region9: #{audio_discriminator_forward.21} parent=5 // pred_check
        _
      $region10: #{audio_discriminator_forward.21} parent=5 // pred_check_branch
        %182 = sbr.rel (%p179) target = $region12
      $region11: #{audio_discriminator_forward.21} parent=5 // pred_region
        %s183 = ssub.s32 %s10, 1
        // Predicated region
        $region13: #{audio_discriminator_forward.21} parent=11 // pred_check
          %p184 = pneg %p55
        $region14: #{audio_discriminator_forward.21} parent=11 // pred_check_branch
          %186 = sbr.rel (%p184) target = $region16
        $region15: #{audio_discriminator_forward.21} parent=11 // pred_region
          %p187 = scmp.lt.s32.totalorder %s20, 0
          %s188 = scalar_select %p187, %s20, 0
          %s189 = smul.addr %s188, 6
          %s190 = smul.addr %s189, 4
          %s191 = scalar_lea.vmem %s0, %s190
        $region16: #{audio_discriminator_forward.21} parent=11 // pred_fallthru
          _
        // Predicated region
        $region17: #{audio_discriminator_forward.21} parent=11 // pred_check
          %p192 = pneg %p81
        $region18: #{audio_discriminator_forward.21} parent=11 // pred_check_branch
          %194 = sbr.rel (%p192) target = $region20
        $region19: #{audio_discriminator_forward.21} parent=11 // pred_region
          %p195 = scmp.lt.s32.totalorder %s20, 0
          %s196 = scalar_select %p195, %s20, 0
          %s197 = smul.addr %s196, 2
          %s198 = smul.addr %s197, 8
          %s199 = scalar_lea.vmem %s1, %s198
        $region20: #{audio_discriminator_forward.21} parent=11 // pred_fallthru
          _
      $region12: #{audio_discriminator_forward.21} parent=5 // pred_fallthru
        _
      %p200 = scmp.lt.s32.totalorder %s10, 2
      // Predicated region
      $region21: #{audio_discriminator_forward.21} parent=5 // pred_check
        %p201 = pneg %p200
      $region22: #{audio_discriminator_forward.21} parent=5 // pred_check_branch
        %203 = sbr.rel (%p201) target = $region24
      $region23: #{audio_discriminator_forward.21} parent=5 // pred_region
        // Predicated region
        $region25: #{audio_discriminator_forward.21} parent=23 // pred_check
          %p204 = pneg %p103
        $region26: #{audio_discriminator_forward.21} parent=23 // pred_check_branch
          %206 = sbr.rel (%p204) target = $region28
        $region27: #{audio_discriminator_forward.21} parent=23 // pred_region
          %s207 = sand.u32 %s93, 1
          %s208 = sand.u32 %s93, 1
          %s209 = smul.addr %s208, 16
          %s210 = scalar_lea.vmem [#allocation3], %s209
          %s211 = smul.addr %s18, 8
          %s212 = sadd.s32 %s19, %s211
          %s213 = smul.addr %s212, 4
          %s214 = scalar_lea.vmem %s2, %s213
          // Predicated region
          $region29: #{audio_discriminator_forward.21} parent=27 // pred_check
            _
          $region30: #{audio_discriminator_forward.21} parent=27 // pred_check_branch
            %216 = sbr.rel (0) target = $region32
          $region31: #{audio_discriminator_forward.21} parent=27 // pred_region
            // Predicated region
            $region33: #{audio_discriminator_forward.21} parent=31 // pred_check
              _
            $region34: #{audio_discriminator_forward.21} parent=31 // pred_check_branch
              %218 = sbr.rel target = $region36
            $region35: #{audio_discriminator_forward.21} parent=31 // pred_region
              // Predicated region
              $region48: #{audio_discriminator_forward.21} parent=35 // pred_check
                _
              $region49: #{audio_discriminator_forward.21} parent=35 // pred_check_branch
                %239 = sbr.rel (0) target = $region51
              $region50: #{audio_discriminator_forward.21} parent=35 // pred_region
                loop: start=0, step=1, limit=1
                $region52: #{audio_discriminator_forward.21} parent=50 // loop_pre_header
                  _
                $region53: #{audio_discriminator_forward.21} parent=50 // loop_header
                  %s241 = sphi 0, %s245
                  %p242 = scmp.ge.s32.totalorder %s241, 1
                  %s246 = sphi %s214, %s214
                  %s247 = sphi %s210, %s210
                $region54: #{audio_discriminator_forward.21} parent=50 // loop_header_branch
                  %244 = sbr.rel (%p242) target = $region58
                $region55: #{audio_discriminator_forward.21} parent=50 // loop_body
                  _
                $region56: #{audio_discriminator_forward.21} parent=50 // loop_footer
                  %s245 = sadd.s32 1, %s241
                $region57: #{audio_discriminator_forward.21} parent=50 // loop_footer_branch
                  %240 = sbr.rel target = $region53
                $region58: #{audio_discriminator_forward.21} parent=50 // loop_exit
                  _
                loop: start=0, step=1, limit=1
                $region59: #{audio_discriminator_forward.21} parent=50 // loop_pre_header
                  _
                $region60: #{audio_discriminator_forward.21} parent=50 // loop_header
                  %s250 = sphi 0, %s254
                  %p251 = scmp.ge.s32.totalorder %s250, 1
                  %s255 = sphi %s214, %s214
                  %s256 = sphi %s210, %s210
                $region61: #{audio_discriminator_forward.21} parent=50 // loop_header_branch
                  %253 = sbr.rel (%p251) target = $region65
                $region62: #{audio_discriminator_forward.21} parent=50 // loop_body
                  %v257 = vld [vmem:[%s255] sm:$0xf]
                  %258 = vst [vmem:[%s256] sm:$0xf] %v257
                  %v259 = vld [vmem:[%s255 + $0x8] sm:$0xf]
                  %260 = vst [vmem:[%s256 + $0x4] sm:$0xf] %v259
                  %v261 = vld [vmem:[%s255 + $0x10] sm:$0xf]
                  %262 = vst [vmem:[%s256 + $0x8] sm:$0xf] %v261
                  %v263 = vld [vmem:[%s255 + $0x18] sm:$0xf]
                  %264 = vst [vmem:[%s256 + $0xc] sm:$0xf] %v263
                $region63: #{audio_discriminator_forward.21} parent=50 // loop_footer
                  %s254 = sadd.s32 1, %s250
                $region64: #{audio_discriminator_forward.21} parent=50 // loop_footer_branch
                  %249 = sbr.rel target = $region60
                $region65: #{audio_discriminator_forward.21} parent=50 // loop_exit
                  _
              $region51: #{audio_discriminator_forward.21} parent=35 // pred_fallthru
                _
            $region36: #{audio_discriminator_forward.21} parent=31 // pred_fallthru
              _
            // Predicated region
            $region37: #{audio_discriminator_forward.21} parent=31 // pred_check
              _
            $region38: #{audio_discriminator_forward.21} parent=31 // pred_check_branch
              %220 = sbr.rel (0) target = $region40
            $region39: #{audio_discriminator_forward.21} parent=31 // pred_region
              loop: start=0, step=1, limit=1
              $region41: #{audio_discriminator_forward.21} parent=39 // loop_pre_header
                _
              $region42: #{audio_discriminator_forward.21} parent=39 // loop_header
                %s223 = sphi 0, %s227
                %p224 = scmp.ge.s32.totalorder %s223, 1
                %s228 = sphi %s214, %s214
                %s229 = sphi %s210, %s210
              $region43: #{audio_discriminator_forward.21} parent=39 // loop_header_branch
                %226 = sbr.rel (%p224) target = $region47
              $region44: #{audio_discriminator_forward.21} parent=39 // loop_body
                %v230 = vld [vmem:[%s228] sm:$0xf]
                %231 = vst [vmem:[%s229] sm:$0xf] %v230
                %v232 = vld [vmem:[%s228 + $0x8] sm:$0xf]
                %233 = vst [vmem:[%s229 + $0x4] sm:$0xf] %v232
                %v234 = vld [vmem:[%s228 + $0x10] sm:$0xf]
                %235 = vst [vmem:[%s229 + $0x8] sm:$0xf] %v234
                %v236 = vld [vmem:[%s228 + $0x18] sm:$0xf]
                %237 = vst [vmem:[%s229 + $0xc] sm:$0xf] %v236
              $region45: #{audio_discriminator_forward.21} parent=39 // loop_footer
                %s227 = sadd.s32 1, %s223
              $region46: #{audio_discriminator_forward.21} parent=39 // loop_footer_branch
                %222 = sbr.rel target = $region42
              $region47: #{audio_discriminator_forward.21} parent=39 // loop_exit
                _
            $region40: #{audio_discriminator_forward.21} parent=31 // pred_fallthru
              _
          $region32: #{audio_discriminator_forward.21} parent=27 // pred_fallthru
            _
          %265 = vnop
        $region28: #{audio_discriminator_forward.21} parent=23 // pred_fallthru
          _
        // Predicated region
        $region66: #{audio_discriminator_forward.21} parent=23 // pred_check
          %p266 = pneg %p133
        $region67: #{audio_discriminator_forward.21} parent=23 // pred_check_branch
          %268 = sbr.rel (%p266) target = $region69
        $region68: #{audio_discriminator_forward.21} parent=23 // pred_region
          %s269 = sand.u32 %s123, 1
          %s270 = sand.u32 %s123, 1
          %s271 = smul.addr %s270, 16
          %s272 = scalar_lea.vmem [#allocation4], %s271
          %s273 = sadd.s32 %s19, 1
          %s274 = smul.addr %s18, 8
          %s275 = sadd.s32 %s273, %s274
          %s276 = smul.addr %s275, 4
          %s277 = scalar_lea.vmem %s3, %s276
          // Predicated region
          $region70: #{audio_discriminator_forward.21} parent=68 // pred_check
            _
          $region71: #{audio_discriminator_forward.21} parent=68 // pred_check_branch
            %279 = sbr.rel (0) target = $region73
          $region72: #{audio_discriminator_forward.21} parent=68 // pred_region
            // Predicated region
            $region74: #{audio_discriminator_forward.21} parent=72 // pred_check
              _
            $region75: #{audio_discriminator_forward.21} parent=72 // pred_check_branch
              %281 = sbr.rel target = $region77
            $region76: #{audio_discriminator_forward.21} parent=72 // pred_region
              // Predicated region
              $region89: #{audio_discriminator_forward.21} parent=76 // pred_check
                _
              $region90: #{audio_discriminator_forward.21} parent=76 // pred_check_branch
                %302 = sbr.rel (0) target = $region92
              $region91: #{audio_discriminator_forward.21} parent=76 // pred_region
                loop: start=0, step=1, limit=1
                $region93: #{audio_discriminator_forward.21} parent=91 // loop_pre_header
                  _
                $region94: #{audio_discriminator_forward.21} parent=91 // loop_header
                  %s304 = sphi 0, %s308
                  %p305 = scmp.ge.s32.totalorder %s304, 1
                  %s309 = sphi %s277, %s277
                  %s310 = sphi %s272, %s272
                $region95: #{audio_discriminator_forward.21} parent=91 // loop_header_branch
                  %307 = sbr.rel (%p305) target = $region99
                $region96: #{audio_discriminator_forward.21} parent=91 // loop_body
                  _
                $region97: #{audio_discriminator_forward.21} parent=91 // loop_footer
                  %s308 = sadd.s32 1, %s304
                $region98: #{audio_discriminator_forward.21} parent=91 // loop_footer_branch
                  %303 = sbr.rel target = $region94
                $region99: #{audio_discriminator_forward.21} parent=91 // loop_exit
                  _
                loop: start=0, step=1, limit=1
                $region100: #{audio_discriminator_forward.21} parent=91 // loop_pre_header
                  _
                $region101: #{audio_discriminator_forward.21} parent=91 // loop_header
                  %s313 = sphi 0, %s317
                  %p314 = scmp.ge.s32.totalorder %s313, 1
                  %s318 = sphi %s277, %s277
                  %s319 = sphi %s272, %s272
                $region102: #{audio_discriminator_forward.21} parent=91 // loop_header_branch
                  %316 = sbr.rel (%p314) target = $region106
                $region103: #{audio_discriminator_forward.21} parent=91 // loop_body
                  %v320 = vld [vmem:[%s318] sm:$0xf]
                  %321 = vst [vmem:[%s319] sm:$0xf] %v320
                  %v322 = vld [vmem:[%s318 + $0x8] sm:$0xf]
                  %323 = vst [vmem:[%s319 + $0x4] sm:$0xf] %v322
                  %v324 = vld [vmem:[%s318 + $0x10] sm:$0xf]
                  %325 = vst [vmem:[%s319 + $0x8] sm:$0xf] %v324
                  %v326 = vld [vmem:[%s318 + $0x18] sm:$0xf]
                  %327 = vst [vmem:[%s319 + $0xc] sm:$0xf] %v326
                $region104: #{audio_discriminator_forward.21} parent=91 // loop_footer
                  %s317 = sadd.s32 1, %s313
                $region105: #{audio_discriminator_forward.21} parent=91 // loop_footer_branch
                  %312 = sbr.rel target = $region101
                $region106: #{audio_discriminator_forward.21} parent=91 // loop_exit
                  _
              $region92: #{audio_discriminator_forward.21} parent=76 // pred_fallthru
                _
            $region77: #{audio_discriminator_forward.21} parent=72 // pred_fallthru
              _
            // Predicated region
            $region78: #{audio_discriminator_forward.21} parent=72 // pred_check
              _
            $region79: #{audio_discriminator_forward.21} parent=72 // pred_check_branch
              %283 = sbr.rel (0) target = $region81
            $region80: #{audio_discriminator_forward.21} parent=72 // pred_region
              loop: start=0, step=1, limit=1
              $region82: #{audio_discriminator_forward.21} parent=80 // loop_pre_header
                _
              $region83: #{audio_discriminator_forward.21} parent=80 // loop_header
                %s286 = sphi 0, %s290
                %p287 = scmp.ge.s32.totalorder %s286, 1
                %s291 = sphi %s277, %s277
                %s292 = sphi %s272, %s272
              $region84: #{audio_discriminator_forward.21} parent=80 // loop_header_branch
                %289 = sbr.rel (%p287) target = $region88
              $region85: #{audio_discriminator_forward.21} parent=80 // loop_body
                %v293 = vld [vmem:[%s291] sm:$0xf]
                %294 = vst [vmem:[%s292] sm:$0xf] %v293
                %v295 = vld [vmem:[%s291 + $0x8] sm:$0xf]
                %296 = vst [vmem:[%s292 + $0x4] sm:$0xf] %v295
                %v297 = vld [vmem:[%s291 + $0x10] sm:$0xf]
                %298 = vst [vmem:[%s292 + $0x8] sm:$0xf] %v297
                %v299 = vld [vmem:[%s291 + $0x18] sm:$0xf]
                %300 = vst [vmem:[%s292 + $0xc] sm:$0xf] %v299
              $region86: #{audio_discriminator_forward.21} parent=80 // loop_footer
                %s290 = sadd.s32 1, %s286
              $region87: #{audio_discriminator_forward.21} parent=80 // loop_footer_branch
                %285 = sbr.rel target = $region83
              $region88: #{audio_discriminator_forward.21} parent=80 // loop_exit
                _
            $region81: #{audio_discriminator_forward.21} parent=72 // pred_fallthru
              _
          $region73: #{audio_discriminator_forward.21} parent=68 // pred_fallthru
            _
          %328 = vnop
        $region69: #{audio_discriminator_forward.21} parent=23 // pred_fallthru
          _
      $region24: #{audio_discriminator_forward.21} parent=5 // pred_fallthru
        _
      %p329 = scmp.le.s32.totalorder 1, %s10
      %p330 = scmp.lt.s32.totalorder %s10, 3
      %p331 = pnand %p329, %p330
      %p332 = pneg %p331
      // Predicated region
      $region107: #{audio_discriminator_forward.21} parent=5 // pred_check
        _
      $region108: #{audio_discriminator_forward.21} parent=5 // pred_check_branch
        %334 = sbr.rel (%p331) target = $region110
      $region109: #{audio_discriminator_forward.21} parent=5 // pred_region
        %s335 = ssub.s32 %s10, 1
        %s336 = sand.u32 %s96, 1
        %s337 = sand.u32 %s96, 1
        %s338 = smul.addr %s337, 16
        %s339 = scalar_lea.vmem [#allocation3], %s338
        // Predicated region
        $region111: #{audio_discriminator_forward.21} parent=109 // pred_check
          %p340 = pneg %p109
        $region112: #{audio_discriminator_forward.21} parent=109 // pred_check_branch
          %342 = sbr.rel (%p340) target = $region114
        $region113: #{audio_discriminator_forward.21} parent=109 // pred_region
          _
        $region114: #{audio_discriminator_forward.21} parent=109 // pred_fallthru
          _
        %s343 = sand.u32 %s126, 1
        %s344 = sand.u32 %s126, 1
        %s345 = smul.addr %s344, 16
        %s346 = scalar_lea.vmem [#allocation4], %s345
        // Predicated region
        $region115: #{audio_discriminator_forward.21} parent=109 // pred_check
          %p347 = pneg %p139
        $region116: #{audio_discriminator_forward.21} parent=109 // pred_check_branch
          %349 = sbr.rel (%p347) target = $region118
        $region117: #{audio_discriminator_forward.21} parent=109 // pred_region
          _
        $region118: #{audio_discriminator_forward.21} parent=109 // pred_fallthru
          _
        %p350 = scmp.lt.s32.totalorder %s20, 0
        %s351 = scalar_select %p350, %s20, 0
        %s352 = smul.addr %s351, 6
        %s353 = smul.addr %s352, 4
        %s354 = scalar_lea.vmem %s0, %s353
        %p355 = pneg %p55
        %p356 = pneg %p52
        %p357 = scmp.lt.s32.totalorder %s20, 0
        %s358 = scalar_select %p357, %s20, 0
        %s359 = smul.addr %s358, 2
        %s360 = smul.addr %s359, 8
        %s361 = scalar_lea.vmem %s1, %s360
        %p362 = pneg %p81
        %p363 = pneg %p78
        %s364 = sand.u32 %s96, 1
        %s365 = sand.u32 %s96, 1
        %s366 = smul.addr %s365, 16
        %s367 = scalar_lea.vmem [#allocation3], %s366
        %p368 = pneg %p109
        %p369 = pneg %p106
        %s370 = sand.u32 %s126, 1
        %s371 = sand.u32 %s126, 1
        %s372 = smul.addr %s371, 16
        %s373 = scalar_lea.vmem [#allocation4], %s372
        %p374 = pneg %p139
        %p375 = pneg %p136
        %p376 = pneg %p169
        %p377 = pneg %p166
        %s378 = smul.u32 2, %s20
        %p379 = scmp.lt.s32.totalorder %s21, 1
        %s380 = scalar_select %p379, %s21, 1
        %p381 = scmp.lt.s32.totalorder %s378, 1
        %s382 = scalar_select %p381, %s378, 1
        %p383 = scmp.lt.s32.totalorder %s22, 0
        %s384 = scalar_select %p383, %s22, 0
        %s385 = sadd.s32 %s384, %s382
        %s386 = smul.addr %s380, 2
        %s387 = sadd.s32 %s385, %s386
        %s388 = smul.addr %s387, 4
        %s389 = scalar_lea.vmem %s4, %s388
        %p390 = scmp.lt.s32.totalorder %s20, 0
        %s391 = scalar_select %p390, %s20, 0
        %s392 = smul.addr %s391, 6
        %s393 = smul.addr %s392, 4
        %s394 = scalar_lea.vmem %s0, %s393
        %p395 = scmp.lt.s32.totalorder %s20, 0
        %s396 = scalar_select %p395, %s20, 0
        %s397 = smul.addr %s396, 2
        %s398 = smul.addr %s397, 8
        %s399 = scalar_lea.vmem %s1, %s398
        %s400 = sadd.s32 %s22, 1
        %s401 = smul.u32 2, %s20
        %p402 = scmp.lt.s32.totalorder %s21, 1
        %s403 = scalar_select %p402, %s21, 1
        %p404 = scmp.lt.s32.totalorder %s401, 1
        %s405 = scalar_select %p404, %s401, 1
        %p406 = scmp.lt.s32.totalorder %s22, 0
        %s407 = scalar_select %p406, %s22, 0
        %s408 = sadd.s32 %s407, %s405
        %s409 = smul.addr %s403, 2
        %s410 = sadd.s32 %s408, %s409
        %s411 = smul.addr %s410, 4
        %s412 = scalar_lea.vmem %s4, %s411
        %s413 = smul.u32 2, %s20
        %v415 = vld [vmem:[%s339] sm:$0xf]
        %v416 = vld [vmem:[%s339 + $0x4] sm:$0xf]
        %v417 = vld [vmem:[%s339 + $0x8] sm:$0xf]
        %v418 = vld [vmem:[%s339 + $0xc] sm:$0xf]
        %v423 = vunpack.c.l.b16 %v415
        %v424 = vunpack.c.l.b16 %v416
        %v425 = vunpack.c.l.b16 %v417
        %v426 = vunpack.c.l.b16 %v418
        %v427 = vpack.c.b16 %v424, %v423
        %v428 = vpack.c.b16 %v426, %v425
        %431 = vst [vmem:[#allocation2] sm:$0xff] %v427
        %432 = vst [vmem:[#allocation2 + $0x10] sm:$0xff] %v428
        %v433 = vld [vmem:[%s346] sm:$0xf]
        %v434 = vld [vmem:[%s346 + $0x4] sm:$0xf]
        %v435 = vld [vmem:[%s346 + $0x8] sm:$0xf]
        %v436 = vld [vmem:[%s346 + $0xc] sm:$0xf]
        %v441 = vunpack.c.l.b16 %v433
        %v442 = vunpack.c.l.b16 %v434
        %v443 = vunpack.c.l.b16 %v435
        %v444 = vunpack.c.l.b16 %v436
        %v445 = vpack.c.b16 %v442, %v441
        %v446 = vpack.c.b16 %v444, %v443
        %449 = vst [vmem:[#allocation2 + $0x8] sm:$0xff] %v445
        %450 = vst [vmem:[#allocation2 + $0x18] sm:$0xff] %v446
        %v451 = vld [vmem:[%s394] sm:$0xf]
        %v452 = vld [vmem:[%s394 + $0x4] sm:$0xf]
        %v453 = vld [vmem:[#allocation2] sm:$0xff]
        %v454 = vld [vmem:[#allocation2 + $0x10] sm:$0xff]
        %s455 = scalar_lea.vmem %s394, 8
        %v456 = vld [vmem:[%s455] sm:$0xf]
        %v457 = vld [vmem:[%s455 + $0x4] sm:$0xf]
        %v458 = vld [vmem:[#allocation2] sm:$0xff]
        %v459 = vld [vmem:[#allocation2 + $0x8] sm:$0xff]
        %v460 = vld [vmem:[#allocation2 + $0x10] sm:$0xff]
        %v461 = vld [vmem:[#allocation2 + $0x18] sm:$0xff]
        %v464 = vunpack.c.l.b16 %v456
        %v465 = vunpack.c.l.b16 %v457
        %v466 = vpack.c.b16 %v465, %v464
        %471 = vrot.lane.b32.xlu0 %v458, 127
        %v472 = vpop.permute.xlu0 %471
        %473 = vrot.lane.b32.xlu0 %v459, 127
        %v474 = vpop.permute.xlu0 %473
        %475 = vrot.lane.b32.xlu0 %v460, 127
        %v476 = vpop.permute.xlu0 %475
        %477 = vrot.lane.b32.xlu0 %v461, 127
        %v478 = vpop.permute.xlu0 %477
        %vm479 = vcmask 1039360
        %v480 = vsel %vm479, %v472, %v474
        %v481 = vsel %vm479, %v476, %v478
        %vm484 = vcmask 261120
        %v486 = vsel %vm484, %v466, 0
        %488 = vmatprep.subr.bf16.mxu0 0
        %489 = vmatpush1.bf16.msra.mxu0 %v480
        %490 = vmatprep.subr.bf16.mxu0 0
        %491 = vmatpush1.bf16.msra.mxu0 %v481
        %492 = vmatprep.subr.bf16.mxu0 0
        %493 = vmatpush1.bf16.msra.mxu0 0
        %494 = vmatprep.subr.bf16.mxu0 0
        %495 = vmatpush1.bf16.msra.mxu0 0
        %496 = vmatprep.subr.bf16.mxu0 0
        %497 = vmatpush1.bf16.msra.mxu0 0
        %498 = vmatprep.subr.bf16.mxu0 0
        %499 = vmatpush1.bf16.msra.mxu0 0
        %500 = vmatprep.subr.bf16.mxu0 0
        %501 = vmatpush1.bf16.msra.mxu0 0
        %502 = vmatprep.subr.bf16.mxu0 0
        %503 = vmatpush1.bf16.msra.mxu0 0
        %504 = vmatprep.subr.bf16.mxu0 0
        %505 = vmatpush1.bf16.msra.mxu0 0
        %506 = vmatprep.subr.bf16.mxu0 0
        %507 = vmatpush1.bf16.msra.mxu0 0
        %508 = vmatprep.subr.bf16.mxu0 0
        %509 = vmatpush1.bf16.msra.mxu0 0
        %510 = vmatprep.subr.bf16.mxu0 0
        %511 = vmatpush1.bf16.msra.mxu0 0
        %512 = vmatprep.subr.bf16.mxu0 0
        %513 = vmatpush1.bf16.msra.mxu0 0
        %514 = vmatprep.subr.bf16.mxu0 0
        %515 = vmatpush1.bf16.msra.mxu0 0
        %516 = vmatprep.subr.bf16.mxu0 0
        %517 = vmatpush1.bf16.msra.mxu0 0
        %518 = vmatprep.subr.bf16.mxu0 0
        %519 = vmatpush1.bf16.msra.mxu0 0
        %520 = vmatprep.mubr.bf16.mxu0 0
        %521 = vmatmul.mubr.bf16.gmra.mrb[0].mxu0 %v486
        %v522 = vpop.f32.mrb[0].mxu0
        %v523 = vadd.f32 0.0, %v522
        %v524 = vpop.f32.mrb[0].mxu0
        %v525 = vpop.f32.mrb[0].mxu0
        %v526 = vadd.f32 0.0, %v525
        %v527 = vpop.f32.mrb[0].mxu0
        %528 = vdwg.mxu0
        %v531 = vunpack.c.l.b16 %v451
        %v532 = vunpack.c.l.b16 %v452
        %v533 = vpack.c.b16 %v532, %v531
        %v535 = vsel %vm484, %v533, 0
        %537 = vmatprep.subr.bf16.mxu0 0
        %538 = vmatpush1.bf16.msra.mxu0 %v453
        %539 = vmatprep.subr.bf16.mxu0 0
        %540 = vmatpush1.bf16.msra.mxu0 %v454
        %541 = vmatprep.subr.bf16.mxu0 0
        %542 = vmatpush1.bf16.msra.mxu0 0
        %543 = vmatprep.subr.bf16.mxu0 0
        %544 = vmatpush1.bf16.msra.mxu0 0
        %545 = vmatprep.subr.bf16.mxu0 0
        %546 = vmatpush1.bf16.msra.mxu0 0
        %547 = vmatprep.subr.bf16.mxu0 0
        %548 = vmatpush1.bf16.msra.mxu0 0
        %549 = vmatprep.subr.bf16.mxu0 0
        %550 = vmatpush1.bf16.msra.mxu0 0
        %551 = vmatprep.subr.bf16.mxu0 0
        %552 = vmatpush1.bf16.msra.mxu0 0
        %553 = vmatprep.subr.bf16.mxu0 0
        %554 = vmatpush1.bf16.msra.mxu0 0
        %555 = vmatprep.subr.bf16.mxu0 0
        %556 = vmatpush1.bf16.msra.mxu0 0
        %557 = vmatprep.subr.bf16.mxu0 0
        %558 = vmatpush1.bf16.msra.mxu0 0
        %559 = vmatprep.subr.bf16.mxu0 0
        %560 = vmatpush1.bf16.msra.mxu0 0
        %561 = vmatprep.subr.bf16.mxu0 0
        %562 = vmatpush1.bf16.msra.mxu0 0
        %563 = vmatprep.subr.bf16.mxu0 0
        %564 = vmatpush1.bf16.msra.mxu0 0
        %565 = vmatprep.subr.bf16.mxu0 0
        %566 = vmatpush1.bf16.msra.mxu0 0
        %567 = vmatprep.subr.bf16.mxu0 0
        %568 = vmatpush1.bf16.msra.mxu0 0
        %569 = vmatprep.mubr.bf16.mxu0 0
        %570 = vmatmul.mubr.bf16.gmra.mrb[0].mxu0 %v535
        %v571 = vpop.f32.mrb[0].mxu0
        %v572 = vadd.f32 %v523, %v571
        %v573 = vpop.f32.mrb[0].mxu0
        %v574 = vpop.f32.mrb[0].mxu0
        %v575 = vadd.f32 %v526, %v574
        %v576 = vpop.f32.mrb[0].mxu0
        %577 = vdwg.mxu0
        %s578 = scalar_lea.vmem %s394, 16
        %v579 = vld [vmem:[%s578] sm:$0xf]
        %v580 = vld [vmem:[%s578 + $0x4] sm:$0xf]
        %v583 = vunpack.c.l.b16 %v579
        %v584 = vunpack.c.l.b16 %v580
        %v585 = vpack.c.b16 %v584, %v583
        %586 = vrot.lane.b32.xlu0 %v458, 126
        %v587 = vpop.permute.xlu0 %586
        %588 = vrot.lane.b32.xlu0 %v459, 126
        %v589 = vpop.permute.xlu0 %588
        %590 = vrot.lane.b32.xlu0 %v460, 126
        %v591 = vpop.permute.xlu0 %590
        %592 = vrot.lane.b32.xlu0 %v461, 126
        %v593 = vpop.permute.xlu0 %592
        %vm594 = vcmask 1031168
        %v595 = vsel %vm594, %v587, %v589
        %v596 = vsel %vm594, %v591, %v593
        %v600 = vsel %vm484, %v585, 0
        %602 = vmatprep.subr.bf16.mxu0 0
        %603 = vmatpush1.bf16.msra.mxu0 %v595
        %604 = vmatprep.subr.bf16.mxu0 0
        %605 = vmatpush1.bf16.msra.mxu0 %v596
        %606 = vmatprep.subr.bf16.mxu0 0
        %607 = vmatpush1.bf16.msra.mxu0 0
        %608 = vmatprep.subr.bf16.mxu0 0
        %609 = vmatpush1.bf16.msra.mxu0 0
        %610 = vmatprep.subr.bf16.mxu0 0
        %611 = vmatpush1.bf16.msra.mxu0 0
        %612 = vmatprep.subr.bf16.mxu0 0
        %613 = vmatpush1.bf16.msra.mxu0 0
        %614 = vmatprep.subr.bf16.mxu0 0
        %615 = vmatpush1.bf16.msra.mxu0 0
        %616 = vmatprep.subr.bf16.mxu0 0
        %617 = vmatpush1.bf16.msra.mxu0 0
        %618 = vmatprep.subr.bf16.mxu0 0
        %619 = vmatpush1.bf16.msra.mxu0 0
        %620 = vmatprep.subr.bf16.mxu0 0
        %621 = vmatpush1.bf16.msra.mxu0 0
        %622 = vmatprep.subr.bf16.mxu0 0
        %623 = vmatpush1.bf16.msra.mxu0 0
        %624 = vmatprep.subr.bf16.mxu0 0
        %625 = vmatpush1.bf16.msra.mxu0 0
        %626 = vmatprep.subr.bf16.mxu0 0
        %627 = vmatpush1.bf16.msra.mxu0 0
        %628 = vmatprep.subr.bf16.mxu0 0
        %629 = vmatpush1.bf16.msra.mxu0 0
        %630 = vmatprep.subr.bf16.mxu0 0
        %631 = vmatpush1.bf16.msra.mxu0 0
        %632 = vmatprep.subr.bf16.mxu0 0
        %633 = vmatpush1.bf16.msra.mxu0 0
        %634 = vmatprep.mubr.bf16.mxu0 0
        %635 = vmatmul.mubr.bf16.gmra.mrb[0].mxu0 %v600
        %v636 = vpop.f32.mrb[0].mxu0
        %v637 = vadd.f32 0.0, %v636
        %v638 = vpop.f32.mrb[0].mxu0
        %v639 = vpop.f32.mrb[0].mxu0
        %v640 = vadd.f32 0.0, %v639
        %v641 = vpop.f32.mrb[0].mxu0
        %642 = vdwg.mxu0
        %v643 = vadd.f32 %v572, %v637
        %v644 = vadd.f32 %v575, %v640
        %v645 = vld [vmem:[%s399] sm:$0xff]
        %v646 = vld [vmem:[%s399 + $0x8] sm:$0xff]
        %648 = vset.pattern.permute.xlu0 0
        %649 = vperm.xlu0 %648, %v645
        %v650 = vpop.permute.xlu0 %649
        %653 = vset.pattern.permute.xlu0 0
        %654 = vperm.xlu0 %653, %v646
        %v655 = vpop.permute.xlu0 %654
        %v657 = vadd.f32 %v643, %v650
        %v658 = vadd.f32 %v644, %v655
        %v659 = vpack.c.bf16 %v658, %v657
        %v661 = vunpack.c.l.b16 %v659
        %v662 = vunpack.c.h.b16 %v659
        %v663 = vpack.c.b16 %v661, %v661
        %v664 = vpack.c.b16 %v662, %v662
        %667 = vst [vmem:[%s412] sm:$0xf] %v663
        %668 = vst [vmem:[%s412 + $0x4] sm:$0xf] %v664
        %s669 = smul.u32 2, %s20
        %p670 = scmp.lt.s32.totalorder %s21, 1
        %s671 = scalar_select %p670, %s21, 1
        %p672 = scmp.lt.s32.totalorder %s669, 1
        %s673 = scalar_select %p672, %s669, 1
        %p674 = scmp.lt.s32.totalorder %s22, 0
        %s675 = scalar_select %p674, %s22, 0
        %s676 = sadd.s32 %s675, %s673
        %s677 = smul.addr %s671, 2
        %s678 = sadd.s32 %s676, %s677
        %s679 = smul.addr %s678, 4
        %s680 = scalar_lea.vmem %s4, %s679
        // Predicated region
        $region119: #{audio_discriminator_forward.21} parent=109 // pred_check
          %p681 = pneg %p166
        $region120: #{audio_discriminator_forward.21} parent=109 // pred_check_branch
          %683 = sbr.rel (%p681) target = $region122
        $region121: #{audio_discriminator_forward.21} parent=109 // pred_region
          %s684 = smul.u32 2, %s20
        $region122: #{audio_discriminator_forward.21} parent=109 // pred_fallthru
          _
      $region110: #{audio_discriminator_forward.21} parent=5 // pred_fallthru
        _
      %p685 = scmp.le.s32.totalorder 2, %s10
      // Predicated region
      $region123: #{audio_discriminator_forward.21} parent=5 // pred_check
        %p686 = pneg %p685
      $region124: #{audio_discriminator_forward.21} parent=5 // pred_check_branch
        %688 = sbr.rel (%p686) target = $region126
      $region125: #{audio_discriminator_forward.21} parent=5 // pred_region
        %s689 = ssub.s32 %s10, 2
        // Predicated region
        $region127: #{audio_discriminator_forward.21} parent=125 // pred_check
          %p690 = pneg %p172
        $region128: #{audio_discriminator_forward.21} parent=125 // pred_check_branch
          %692 = sbr.rel (%p690) target = $region130
        $region129: #{audio_discriminator_forward.21} parent=125 // pred_region
          %s693 = smul.u32 2, %s23
          %p694 = scmp.lt.s32.totalorder %s24, 1
          %s695 = scalar_select %p694, %s24, 1
          %p696 = scmp.lt.s32.totalorder %s693, 1
          %s697 = scalar_select %p696, %s693, 1
          %p698 = scmp.lt.s32.totalorder %s25, 0
          %s699 = scalar_select %p698, %s25, 0
          %s700 = sadd.s32 %s699, %s697
          %s701 = smul.addr %s695, 2
          %s702 = sadd.s32 %s700, %s701
          %s703 = smul.addr %s702, 4
          %s704 = scalar_lea.vmem %s4, %s703
        $region130: #{audio_discriminator_forward.21} parent=125 // pred_fallthru
          _
      $region126: #{audio_discriminator_forward.21} parent=5 // pred_fallthru
        _
    $region6: #{audio_discriminator_forward.21} parent=1 // loop_footer
      %s14 = sadd.s32 1, %s10
    $region7: #{audio_discriminator_forward.21} parent=1 // loop_footer_branch
      %9 = sbr.rel target = $region3
    $region8: #{audio_discriminator_forward.21} parent=1 // loop_exit
      _

// kernel: audio_discriminator_forward.20
$region0: #{audio_discriminator_forward.20}
  #allocation0 [shape = 'u32[]', space=smem, size = 0x4, offset = 0x4, fixed_abs, tag = 'smem constant byte address 0x4 - core index']
  #allocation1 [shape = 'u32[144,128]{1,0:T(1,128)}', space=vmem, size = 0x12000, scoped, tag = 'internal scratch']
  #allocation2 [shape = 'bf16[16,256]{1,0:T(16,128)(2,1)}', space=vmem, size = 0x2000, scoped, tag = 'scratch operand']
  %s0 = inlined_call_operand.vmem [shape: bf16[1,5,32,16], index: 0, kind: input, shape index: {}]
  %s1 = inlined_call_operand.vmem [shape: f32[1,32,1], index: 1, kind: input, shape index: {}]
  %s2 = inlined_call_operand.vmem [shape: bf16[2,16,256], index: 2, kind: input, shape index: {}, may-alias: {2,3}]
  %s3 = inlined_call_operand.vmem [shape: bf16[2,16,256], index: 3, kind: input, shape index: {}, may-alias: {2,3}]
  %s4 = inlined_call_operand.vmem [shape: bf16[2,32,128], index: 4, kind: output, shape index: {}]
  %s5 = sld [smem:[#allocation0]]
  $region131: #{audio_discriminator_forward.20} parent=0
    _
  %s7 = ssub.s32 1, %s5
  %s8 = scalar_select 0, %s7, %s5
  $region1: #{audio_discriminator_forward.20} parent=0
    #allocation3 [shape = 'u8[8192]{0}', space=vmem, size = 0x2000, scoped, tag = 'input window, operand 2']
    #allocation4 [shape = 'u8[8192]{0}', space=vmem, size = 0x2000, scoped, tag = 'input window, operand 3']
    loop: start=0, step=1, limit=4
    $region2: #{audio_discriminator_forward.20} parent=1 // loop_pre_header
      _
    $region3: #{audio_discriminator_forward.20} parent=1 // loop_header
      %s10 = sphi 0, %s14
      %p11 = scmp.ge.s32.totalorder %s10, 4
      %s17 = sphi 0, %s36
      %s18 = sphi 0, %s32
      %s19 = sphi 0, %s28
      %s20 = sphi 0, %s17
      %s21 = sphi 0, %s18
      %s22 = sphi 0, %s19
      %s23 = sphi 0, %s20
      %s24 = sphi 0, %s21
      %s25 = sphi 0, %s22
      %s39 = sphi 0, %s41
      %s42 = sphi 0, %s39
      %s43 = sphi 0, %s42
      %s59 = sphi 0, %s43
      %s65 = sphi 0, %s67
      %s68 = sphi 0, %s65
      %s69 = sphi 0, %s68
      %s85 = sphi 0, %s69
      %s93 = sphi 0, %s95
      %s96 = sphi 0, %s93
      %s97 = sphi 0, %s96
      %s113 = sphi 0, %s97
      %s123 = sphi 0, %s125
      %s126 = sphi 0, %s123
      %s127 = sphi 0, %s126
      %s143 = sphi 0, %s127
      %s153 = sphi 0, %s155
      %s156 = sphi 0, %s153
      %s157 = sphi 0, %s156
      %s173 = sphi 0, %s157
    $region4: #{audio_discriminator_forward.20} parent=1 // loop_header_branch
      %13 = sbr.rel (%p11) target = $region8
    $region5: #{audio_discriminator_forward.20} parent=1 // loop_body
      %s15 = ssub.s32 %s10, 1
      %s16 = ssub.s32 %s10, 2
      %s26 = sadd.s32 1, %s19
      %p27 = scmp.ge.s32.totalorder %s26, 1
      %s28 = scalar_select %p27, 0, %s26
      %s29 = sadd.s32 1, %s18
      %s30 = scalar_select %p27, %s29, %s18
      %p31 = scmp.ge.s32.totalorder %s30, 2
      %s32 = scalar_select %p31, 0, %s30
      %s33 = sadd.s32 1, %s17
      %s34 = scalar_select %p31, %s33, %s17
      %p35 = scmp.ge.s32.totalorder %s34, 1
      %s36 = scalar_select %p35, 0, %s34
      %s37 = ssub.s32 %s17, %s36
      %p38 = scmp.eq.s32.totalorder %s37, 0
      %s40 = sadd.s32 %s39, 1
      %s41 = scalar_select %p38, %s39, %s40
      %p44 = pneg %p38
      %p45 = scmp.eq.s32.totalorder %s10, 1
      %p46 = por %p44, %p45
      %p47 = scmp.ne.s32.totalorder %s39, %s42
      %p48 = scmp.eq.s32.totalorder %s10, 0
      %p49 = por %p47, %p48
      %p50 = scmp.ne.s32.totalorder %s39, %s42
      %p51 = scmp.eq.s32.totalorder %s15, 1
      %p52 = por %p50, %p51
      %p53 = scmp.ne.s32.totalorder %s42, %s43
      %p54 = scmp.eq.s32.totalorder %s15, 0
      %p55 = por %p53, %p54
      %p56 = scmp.ne.s32.totalorder %s42, %s43
      %p57 = scmp.eq.s32.totalorder %s16, 1
      %p58 = por %p56, %p57
      %p60 = scmp.ne.s32.totalorder %s43, %s59
      %p61 = scmp.eq.s32.totalorder %s16, 0
      %p62 = por %p60, %p61
      %s63 = ssub.s32 %s17, %s36
      %p64 = scmp.eq.s32.totalorder %s63, 0
      %s66 = sadd.s32 %s65, 1
      %s67 = scalar_select %p64, %s65, %s66
      %p70 = pneg %p64
      %p71 = scmp.eq.s32.totalorder %s10, 1
      %p72 = por %p70, %p71
      %p73 = scmp.ne.s32.totalorder %s65, %s68
      %p74 = scmp.eq.s32.totalorder %s10, 0
      %p75 = por %p73, %p74
      %p76 = scmp.ne.s32.totalorder %s65, %s68
      %p77 = scmp.eq.s32.totalorder %s15, 1
      %p78 = por %p76, %p77
      %p79 = scmp.ne.s32.totalorder %s68, %s69
      %p80 = scmp.eq.s32.totalorder %s15, 0
      %p81 = por %p79, %p80
      %p82 = scmp.ne.s32.totalorder %s68, %s69
      %p83 = scmp.eq.s32.totalorder %s16, 1
      %p84 = por %p82, %p83
      %p86 = scmp.ne.s32.totalorder %s69, %s85
      %p87 = scmp.eq.s32.totalorder %s16, 0
      %p88 = por %p86, %p87
      %s89 = ssub.s32 %s18, %s32
      %s90 = ssub.s32 %s19, %s28
      %s91 = sor.u32 %s89, %s90
      %p92 = scmp.eq.s32.totalorder %s91, 0
      %s94 = sadd.s32 %s93, 1
      %s95 = scalar_select %p92, %s93, %s94
      %p98 = pneg %p92
      %p99 = scmp.eq.s32.totalorder %s10, 1
      %p100 = por %p98, %p99
      %p101 = scmp.ne.s32.totalorder %s93, %s96
      %p102 = scmp.eq.s32.totalorder %s10, 0
      %p103 = por %p101, %p102
      %p104 = scmp.ne.s32.totalorder %s93, %s96
      %p105 = scmp.eq.s32.totalorder %s15, 1
      %p106 = por %p104, %p105
      %p107 = scmp.ne.s32.totalorder %s96, %s97
      %p108 = scmp.eq.s32.totalorder %s15, 0
      %p109 = por %p107, %p108
      %p110 = scmp.ne.s32.totalorder %s96, %s97
      %p111 = scmp.eq.s32.totalorder %s16, 1
      %p112 = por %p110, %p111
      %p114 = scmp.ne.s32.totalorder %s97, %s113
      %p115 = scmp.eq.s32.totalorder %s16, 0
      %p116 = por %p114, %p115
      %s117 = sadd.s32 %s19, 1
      %s118 = sadd.s32 %s28, 1
      %s119 = ssub.s32 %s18, %s32
      %s120 = ssub.s32 %s117, %s118
      %s121 = sor.u32 %s119, %s120
      %p122 = scmp.eq.s32.totalorder %s121, 0
      %s124 = sadd.s32 %s123, 1
      %s125 = scalar_select %p122, %s123, %s124
      %p128 = pneg %p122
      %p129 = scmp.eq.s32.totalorder %s10, 1
      %p130 = por %p128, %p129
      %p131 = scmp.ne.s32.totalorder %s123, %s126
      %p132 = scmp.eq.s32.totalorder %s10, 0
      %p133 = por %p131, %p132
      %p134 = scmp.ne.s32.totalorder %s123, %s126
      %p135 = scmp.eq.s32.totalorder %s15, 1
      %p136 = por %p134, %p135
      %p137 = scmp.ne.s32.totalorder %s126, %s127
      %p138 = scmp.eq.s32.totalorder %s15, 0
      %p139 = por %p137, %p138
      %p140 = scmp.ne.s32.totalorder %s126, %s127
      %p141 = scmp.eq.s32.totalorder %s16, 1
      %p142 = por %p140, %p141
      %p144 = scmp.ne.s32.totalorder %s127, %s143
      %p145 = scmp.eq.s32.totalorder %s16, 0
      %p146 = por %p144, %p145
      %s147 = ssub.s32 %s18, %s32
      %s148 = ssub.s32 %s17, %s36
      %s149 = sor.u32 %s147, %s148
      %s150 = ssub.s32 %s19, %s28
      %s151 = sor.u32 %s149, %s150
      %p152 = scmp.eq.s32.totalorder %s151, 0
      %s154 = sadd.s32 %s153, 1
      %s155 = scalar_select %p152, %s153, %s154
      %p158 = pneg %p152
      %p159 = scmp.eq.s32.totalorder %s10, 1
      %p160 = por %p158, %p159
      %p161 = scmp.ne.s32.totalorder %s153, %s156
      %p162 = scmp.eq.s32.totalorder %s10, 0
      %p163 = por %p161, %p162
      %p164 = scmp.ne.s32.totalorder %s153, %s156
      %p165 = scmp.eq.s32.totalorder %s15, 1
      %p166 = por %p164, %p165
      %p167 = scmp.ne.s32.totalorder %s156, %s157
      %p168 = scmp.eq.s32.totalorder %s15, 0
      %p169 = por %p167, %p168
      %p170 = scmp.ne.s32.totalorder %s156, %s157
      %p171 = scmp.eq.s32.totalorder %s16, 1
      %p172 = por %p170, %p171
      %p174 = scmp.ne.s32.totalorder %s157, %s173
      %p175 = scmp.eq.s32.totalorder %s16, 0
      %p176 = por %p174, %p175
      %p177 = scmp.le.s32.totalorder 1, %s10
      %p178 = scmp.lt.s32.totalorder %s10, 3
      %p179 = pnand %p177, %p178
      %p180 = pneg %p179
      // Predicated region
      $region9: #{audio_discriminator_forward.20} parent=5 // pred_check
        _
      $region10: #{audio_discriminator_forward.20} parent=5 // pred_check_branch
        %182 = sbr.rel (%p179) target = $region12
      $region11: #{audio_discriminator_forward.20} parent=5 // pred_region
        %s183 = ssub.s32 %s10, 1
        // Predicated region
        $region13: #{audio_discriminator_forward.20} parent=11 // pred_check
          %p184 = pneg %p55
        $region14: #{audio_discriminator_forward.20} parent=11 // pred_check_branch
          %186 = sbr.rel (%p184) target = $region16
        $region15: #{audio_discriminator_forward.20} parent=11 // pred_region
          %p187 = scmp.lt.s32.totalorder %s20, 0
          %s188 = scalar_select %p187, %s20, 0
          %s189 = smul.addr %s188, 20
          %s190 = smul.addr %s189, 4
          %s191 = scalar_lea.vmem %s0, %s190
        $region16: #{audio_discriminator_forward.20} parent=11 // pred_fallthru
          _
        // Predicated region
        $region17: #{audio_discriminator_forward.20} parent=11 // pred_check
          %p192 = pneg %p81
        $region18: #{audio_discriminator_forward.20} parent=11 // pred_check_branch
          %194 = sbr.rel (%p192) target = $region20
        $region19: #{audio_discriminator_forward.20} parent=11 // pred_region
          %p195 = scmp.lt.s32.totalorder %s20, 0
          %s196 = scalar_select %p195, %s20, 0
          %s197 = smul.addr %s196, 4
          %s198 = smul.addr %s197, 8
          %s199 = scalar_lea.vmem %s1, %s198
        $region20: #{audio_discriminator_forward.20} parent=11 // pred_fallthru
          _
      $region12: #{audio_discriminator_forward.20} parent=5 // pred_fallthru
        _
      %p200 = scmp.lt.s32.totalorder %s10, 2
      // Predicated region
      $region21: #{audio_discriminator_forward.20} parent=5 // pred_check
        %p201 = pneg %p200
      $region22: #{audio_discriminator_forward.20} parent=5 // pred_check_branch
        %203 = sbr.rel (%p201) target = $region24
      $region23: #{audio_discriminator_forward.20} parent=5 // pred_region
        // Predicated region
        $region25: #{audio_discriminator_forward.20} parent=23 // pred_check
          %p204 = pneg %p103
        $region26: #{audio_discriminator_forward.20} parent=23 // pred_check_branch
          %206 = sbr.rel (%p204) target = $region28
        $region27: #{audio_discriminator_forward.20} parent=23 // pred_region
          %s207 = sand.u32 %s93, 1
          %s208 = sand.u32 %s93, 1
          %s209 = smul.addr %s208, 8
          %s210 = scalar_lea.vmem [#allocation3], %s209
          %s211 = smul.addr %s18, 4
          %s212 = sadd.s32 %s19, %s211
          %s213 = smul.addr %s212, 4
          %s214 = scalar_lea.vmem %s2, %s213
          // Predicated region
          $region29: #{audio_discriminator_forward.20} parent=27 // pred_check
            _
          $region30: #{audio_discriminator_forward.20} parent=27 // pred_check_branch
            %216 = sbr.rel (0) target = $region32
          $region31: #{audio_discriminator_forward.20} parent=27 // pred_region
            // Predicated region
            $region33: #{audio_discriminator_forward.20} parent=31 // pred_check
              _
            $region34: #{audio_discriminator_forward.20} parent=31 // pred_check_branch
              %218 = sbr.rel target = $region36
            $region35: #{audio_discriminator_forward.20} parent=31 // pred_region
              // Predicated region
              $region48: #{audio_discriminator_forward.20} parent=35 // pred_check
                _
              $region49: #{audio_discriminator_forward.20} parent=35 // pred_check_branch
                %235 = sbr.rel (0) target = $region51
              $region50: #{audio_discriminator_forward.20} parent=35 // pred_region
                loop: start=0, step=1, limit=1
                $region52: #{audio_discriminator_forward.20} parent=50 // loop_pre_header
                  _
                $region53: #{audio_discriminator_forward.20} parent=50 // loop_header
                  %s237 = sphi 0, %s241
                  %p238 = scmp.ge.s32.totalorder %s237, 1
                  %s242 = sphi %s214, %s214
                  %s243 = sphi %s210, %s210
                $region54: #{audio_discriminator_forward.20} parent=50 // loop_header_branch
                  %240 = sbr.rel (%p238) target = $region58
                $region55: #{audio_discriminator_forward.20} parent=50 // loop_body
                  _
                $region56: #{audio_discriminator_forward.20} parent=50 // loop_footer
                  %s241 = sadd.s32 1, %s237
                $region57: #{audio_discriminator_forward.20} parent=50 // loop_footer_branch
                  %236 = sbr.rel target = $region53
                $region58: #{audio_discriminator_forward.20} parent=50 // loop_exit
                  _
                loop: start=0, step=1, limit=1
                $region59: #{audio_discriminator_forward.20} parent=50 // loop_pre_header
                  _
                $region60: #{audio_discriminator_forward.20} parent=50 // loop_header
                  %s246 = sphi 0, %s250
                  %p247 = scmp.ge.s32.totalorder %s246, 1
                  %s251 = sphi %s214, %s214
                  %s252 = sphi %s210, %s210
                $region61: #{audio_discriminator_forward.20} parent=50 // loop_header_branch
                  %249 = sbr.rel (%p247) target = $region65
                $region62: #{audio_discriminator_forward.20} parent=50 // loop_body
                  %v253 = vld [vmem:[%s251] sm:$0xf]
                  %254 = vst [vmem:[%s252] sm:$0xf] %v253
                  %v255 = vld [vmem:[%s251 + $0x8] sm:$0xf]
                  %256 = vst [vmem:[%s252 + $0x4] sm:$0xf] %v255
                $region63: #{audio_discriminator_forward.20} parent=50 // loop_footer
                  %s250 = sadd.s32 1, %s246
                $region64: #{audio_discriminator_forward.20} parent=50 // loop_footer_branch
                  %245 = sbr.rel target = $region60
                $region65: #{audio_discriminator_forward.20} parent=50 // loop_exit
                  _
              $region51: #{audio_discriminator_forward.20} parent=35 // pred_fallthru
                _
            $region36: #{audio_discriminator_forward.20} parent=31 // pred_fallthru
              _
            // Predicated region
            $region37: #{audio_discriminator_forward.20} parent=31 // pred_check
              _
            $region38: #{audio_discriminator_forward.20} parent=31 // pred_check_branch
              %220 = sbr.rel (0) target = $region40
            $region39: #{audio_discriminator_forward.20} parent=31 // pred_region
              loop: start=0, step=1, limit=1
              $region41: #{audio_discriminator_forward.20} parent=39 // loop_pre_header
                _
              $region42: #{audio_discriminator_forward.20} parent=39 // loop_header
                %s223 = sphi 0, %s227
                %p224 = scmp.ge.s32.totalorder %s223, 1
                %s228 = sphi %s214, %s214
                %s229 = sphi %s210, %s210
              $region43: #{audio_discriminator_forward.20} parent=39 // loop_header_branch
                %226 = sbr.rel (%p224) target = $region47
              $region44: #{audio_discriminator_forward.20} parent=39 // loop_body
                %v230 = vld [vmem:[%s228] sm:$0xf]
                %231 = vst [vmem:[%s229] sm:$0xf] %v230
                %v232 = vld [vmem:[%s228 + $0x8] sm:$0xf]
                %233 = vst [vmem:[%s229 + $0x4] sm:$0xf] %v232
              $region45: #{audio_discriminator_forward.20} parent=39 // loop_footer
                %s227 = sadd.s32 1, %s223
              $region46: #{audio_discriminator_forward.20} parent=39 // loop_footer_branch
                %222 = sbr.rel target = $region42
              $region47: #{audio_discriminator_forward.20} parent=39 // loop_exit
                _
            $region40: #{audio_discriminator_forward.20} parent=31 // pred_fallthru
              _
          $region32: #{audio_discriminator_forward.20} parent=27 // pred_fallthru
            _
          %257 = vnop
        $region28: #{audio_discriminator_forward.20} parent=23 // pred_fallthru
          _
        // Predicated region
        $region66: #{audio_discriminator_forward.20} parent=23 // pred_check
          %p258 = pneg %p133
        $region67: #{audio_discriminator_forward.20} parent=23 // pred_check_branch
          %260 = sbr.rel (%p258) target = $region69
        $region68: #{audio_discriminator_forward.20} parent=23 // pred_region
          %s261 = sand.u32 %s123, 1
          %s262 = sand.u32 %s123, 1
          %s263 = smul.addr %s262, 8
          %s264 = scalar_lea.vmem [#allocation4], %s263
          %s265 = sadd.s32 %s19, 1
          %s266 = smul.addr %s18, 4
          %s267 = sadd.s32 %s265, %s266
          %s268 = smul.addr %s267, 4
          %s269 = scalar_lea.vmem %s3, %s268
          // Predicated region
          $region70: #{audio_discriminator_forward.20} parent=68 // pred_check
            _
          $region71: #{audio_discriminator_forward.20} parent=68 // pred_check_branch
            %271 = sbr.rel (0) target = $region73
          $region72: #{audio_discriminator_forward.20} parent=68 // pred_region
            // Predicated region
            $region74: #{audio_discriminator_forward.20} parent=72 // pred_check
              _
            $region75: #{audio_discriminator_forward.20} parent=72 // pred_check_branch
              %273 = sbr.rel target = $region77
            $region76: #{audio_discriminator_forward.20} parent=72 // pred_region
              // Predicated region
              $region89: #{audio_discriminator_forward.20} parent=76 // pred_check
                _
              $region90: #{audio_discriminator_forward.20} parent=76 // pred_check_branch
                %290 = sbr.rel (0) target = $region92
              $region91: #{audio_discriminator_forward.20} parent=76 // pred_region
                loop: start=0, step=1, limit=1
                $region93: #{audio_discriminator_forward.20} parent=91 // loop_pre_header
                  _
                $region94: #{audio_discriminator_forward.20} parent=91 // loop_header
                  %s292 = sphi 0, %s296
                  %p293 = scmp.ge.s32.totalorder %s292, 1
                  %s297 = sphi %s269, %s269
                  %s298 = sphi %s264, %s264
                $region95: #{audio_discriminator_forward.20} parent=91 // loop_header_branch
                  %295 = sbr.rel (%p293) target = $region99
                $region96: #{audio_discriminator_forward.20} parent=91 // loop_body
                  _
                $region97: #{audio_discriminator_forward.20} parent=91 // loop_footer
                  %s296 = sadd.s32 1, %s292
                $region98: #{audio_discriminator_forward.20} parent=91 // loop_footer_branch
                  %291 = sbr.rel target = $region94
                $region99: #{audio_discriminator_forward.20} parent=91 // loop_exit
                  _
                loop: start=0, step=1, limit=1
                $region100: #{audio_discriminator_forward.20} parent=91 // loop_pre_header
                  _
                $region101: #{audio_discriminator_forward.20} parent=91 // loop_header
                  %s301 = sphi 0, %s305
                  %p302 = scmp.ge.s32.totalorder %s301, 1
                  %s306 = sphi %s269, %s269
                  %s307 = sphi %s264, %s264
                $region102: #{audio_discriminator_forward.20} parent=91 // loop_header_branch
                  %304 = sbr.rel (%p302) target = $region106
                $region103: #{audio_discriminator_forward.20} parent=91 // loop_body
                  %v308 = vld [vmem:[%s306] sm:$0xf]
                  %309 = vst [vmem:[%s307] sm:$0xf] %v308
                  %v310 = vld [vmem:[%s306 + $0x8] sm:$0xf]
                  %311 = vst [vmem:[%s307 + $0x4] sm:$0xf] %v310
                $region104: #{audio_discriminator_forward.20} parent=91 // loop_footer
                  %s305 = sadd.s32 1, %s301
                $region105: #{audio_discriminator_forward.20} parent=91 // loop_footer_branch
                  %300 = sbr.rel target = $region101
                $region106: #{audio_discriminator_forward.20} parent=91 // loop_exit
                  _
              $region92: #{audio_discriminator_forward.20} parent=76 // pred_fallthru
                _
            $region77: #{audio_discriminator_forward.20} parent=72 // pred_fallthru
              _
            // Predicated region
            $region78: #{audio_discriminator_forward.20} parent=72 // pred_check
              _
            $region79: #{audio_discriminator_forward.20} parent=72 // pred_check_branch
              %275 = sbr.rel (0) target = $region81
            $region80: #{audio_discriminator_forward.20} parent=72 // pred_region
              loop: start=0, step=1, limit=1
              $region82: #{audio_discriminator_forward.20} parent=80 // loop_pre_header
                _
              $region83: #{audio_discriminator_forward.20} parent=80 // loop_header
                %s278 = sphi 0, %s282
                %p279 = scmp.ge.s32.totalorder %s278, 1
                %s283 = sphi %s269, %s269
                %s284 = sphi %s264, %s264
              $region84: #{audio_discriminator_forward.20} parent=80 // loop_header_branch
                %281 = sbr.rel (%p279) target = $region88
              $region85: #{audio_discriminator_forward.20} parent=80 // loop_body
                %v285 = vld [vmem:[%s283] sm:$0xf]
                %286 = vst [vmem:[%s284] sm:$0xf] %v285
                %v287 = vld [vmem:[%s283 + $0x8] sm:$0xf]
                %288 = vst [vmem:[%s284 + $0x4] sm:$0xf] %v287
              $region86: #{audio_discriminator_forward.20} parent=80 // loop_footer
                %s282 = sadd.s32 1, %s278
              $region87: #{audio_discriminator_forward.20} parent=80 // loop_footer_branch
                %277 = sbr.rel target = $region83
              $region88: #{audio_discriminator_forward.20} parent=80 // loop_exit
                _
            $region81: #{audio_discriminator_forward.20} parent=72 // pred_fallthru
              _
          $region73: #{audio_discriminator_forward.20} parent=68 // pred_fallthru
            _
          %312 = vnop
        $region69: #{audio_discriminator_forward.20} parent=23 // pred_fallthru
          _
      $region24: #{audio_discriminator_forward.20} parent=5 // pred_fallthru
        _
      %p313 = scmp.le.s32.totalorder 1, %s10
      %p314 = scmp.lt.s32.totalorder %s10, 3
      %p315 = pnand %p313, %p314
      %p316 = pneg %p315
      // Predicated region
      $region107: #{audio_discriminator_forward.20} parent=5 // pred_check
        _
      $region108: #{audio_discriminator_forward.20} parent=5 // pred_check_branch
        %318 = sbr.rel (%p315) target = $region110
      $region109: #{audio_discriminator_forward.20} parent=5 // pred_region
        %s319 = ssub.s32 %s10, 1
        %s320 = sand.u32 %s96, 1
        %s321 = sand.u32 %s96, 1
        %s322 = smul.addr %s321, 8
        %s323 = scalar_lea.vmem [#allocation3], %s322
        // Predicated region
        $region111: #{audio_discriminator_forward.20} parent=109 // pred_check
          %p324 = pneg %p109
        $region112: #{audio_discriminator_forward.20} parent=109 // pred_check_branch
          %326 = sbr.rel (%p324) target = $region114
        $region113: #{audio_discriminator_forward.20} parent=109 // pred_region
          _
        $region114: #{audio_discriminator_forward.20} parent=109 // pred_fallthru
          _
        %s327 = sand.u32 %s126, 1
        %s328 = sand.u32 %s126, 1
        %s329 = smul.addr %s328, 8
        %s330 = scalar_lea.vmem [#allocation4], %s329
        // Predicated region
        $region115: #{audio_discriminator_forward.20} parent=109 // pred_check
          %p331 = pneg %p139
        $region116: #{audio_discriminator_forward.20} parent=109 // pred_check_branch
          %333 = sbr.rel (%p331) target = $region118
        $region117: #{audio_discriminator_forward.20} parent=109 // pred_region
          _
        $region118: #{audio_discriminator_forward.20} parent=109 // pred_fallthru
          _
        %p334 = scmp.lt.s32.totalorder %s20, 0
        %s335 = scalar_select %p334, %s20, 0
        %s336 = smul.addr %s335, 20
        %s337 = smul.addr %s336, 4
        %s338 = scalar_lea.vmem %s0, %s337
        %p339 = pneg %p55
        %p340 = pneg %p52
        %p341 = scmp.lt.s32.totalorder %s20, 0
        %s342 = scalar_select %p341, %s20, 0
        %s343 = smul.addr %s342, 4
        %s344 = smul.addr %s343, 8
        %s345 = scalar_lea.vmem %s1, %s344
        %p346 = pneg %p81
        %p347 = pneg %p78
        %s348 = sand.u32 %s96, 1
        %s349 = sand.u32 %s96, 1
        %s350 = smul.addr %s349, 8
        %s351 = scalar_lea.vmem [#allocation3], %s350
        %p352 = pneg %p109
        %p353 = pneg %p106
        %s354 = sand.u32 %s126, 1
        %s355 = sand.u32 %s126, 1
        %s356 = smul.addr %s355, 8
        %s357 = scalar_lea.vmem [#allocation4], %s356
        %p358 = pneg %p139
        %p359 = pneg %p136
        %p360 = pneg %p169
        %p361 = pneg %p166
        %s362 = smul.u32 4, %s20
        %p363 = scmp.lt.s32.totalorder %s21, 1
        %s364 = scalar_select %p363, %s21, 1
        %p365 = scmp.lt.s32.totalorder %s362, 3
        %s366 = scalar_select %p365, %s362, 3
        %p367 = scmp.lt.s32.totalorder %s22, 0
        %s368 = scalar_select %p367, %s22, 0
        %s369 = sadd.s32 %s368, %s366
        %s370 = smul.addr %s364, 4
        %s371 = sadd.s32 %s369, %s370
        %s372 = smul.addr %s371, 4
        %s373 = scalar_lea.vmem %s4, %s372
        %p374 = scmp.lt.s32.totalorder %s20, 0
        %s375 = scalar_select %p374, %s20, 0
        %s376 = smul.addr %s375, 20
        %s377 = smul.addr %s376, 4
        %s378 = scalar_lea.vmem %s0, %s377
        %p379 = scmp.lt.s32.totalorder %s20, 0
        %s380 = scalar_select %p379, %s20, 0
        %s381 = smul.addr %s380, 4
        %s382 = smul.addr %s381, 8
        %s383 = scalar_lea.vmem %s1, %s382
        %s384 = sadd.s32 %s22, 1
        %s385 = smul.u32 4, %s20
        %p386 = scmp.lt.s32.totalorder %s21, 1
        %s387 = scalar_select %p386, %s21, 1
        %p388 = scmp.lt.s32.totalorder %s385, 3
        %s389 = scalar_select %p388, %s385, 3
        %p390 = scmp.lt.s32.totalorder %s22, 0
        %s391 = scalar_select %p390, %s22, 0
        %s392 = sadd.s32 %s391, %s389
        %s393 = smul.addr %s387, 4
        %s394 = sadd.s32 %s392, %s393
        %s395 = smul.addr %s394, 4
        %s396 = scalar_lea.vmem %s4, %s395
        %s397 = smul.u32 4, %s20
        %v399 = vld [vmem:[%s323] sm:$0xf]
        %v400 = vld [vmem:[%s323 + $0x4] sm:$0xf]
        %v403 = vunpack.c.l.b16 %v399
        %v404 = vunpack.c.l.b16 %v400
        %v405 = vpack.c.b16 %v404, %v403
        %407 = vst [vmem:[#allocation2] sm:$0xff] %v405
        %v408 = vld [vmem:[%s330] sm:$0xf]
        %v409 = vld [vmem:[%s330 + $0x4] sm:$0xf]
        %v412 = vunpack.c.l.b16 %v408
        %v413 = vunpack.c.l.b16 %v409
        %v414 = vpack.c.b16 %v413, %v412
        %416 = vst [vmem:[#allocation2 + $0x8] sm:$0xff] %v414
        %v417 = vld [vmem:[%s378] sm:$0xf]
        %v418 = vld [vmem:[%s378 + $0x4] sm:$0xf]
        %v419 = vld [vmem:[%s378 + $0x8] sm:$0xf]
        %v420 = vld [vmem:[%s378 + $0xc] sm:$0xf]
        %v421 = vld [vmem:[#allocation2] sm:$0xff]
        %s422 = scalar_lea.vmem %s378, 16
        %v423 = vld [vmem:[%s422] sm:$0xf]
        %v424 = vld [vmem:[%s422 + $0x4] sm:$0xf]
        %v425 = vld [vmem:[%s422 + $0x8] sm:$0xf]
        %v426 = vld [vmem:[%s422 + $0xc] sm:$0xf]
        %v427 = vld [vmem:[#allocation2] sm:$0xff]
        %v428 = vld [vmem:[#allocation2 + $0x8] sm:$0xff]
        %v433 = vunpack.c.l.b16 %v423
        %v434 = vunpack.c.l.b16 %v424
        %v435 = vunpack.c.l.b16 %v425
        %v436 = vunpack.c.l.b16 %v426
        %v437 = vpack.c.b16 %v434, %v433
        %v438 = vpack.c.b16 %v436, %v435
        %441 = vrot.lane.b32.xlu0 %v427, 127
        %v442 = vpop.permute.xlu0 %441
        %443 = vrot.lane.b32.xlu0 %v428, 127
        %v444 = vpop.permute.xlu0 %443
        %vm445 = vcmask 1039360
        %v446 = vsel %vm445, %v442, %v444
        %vm448 = vcmask 130048
        %v450 = vsel %vm448, %v437, 0
        %v453 = vsel %vm448, %v438, 0
        %455 = vmatprep.subr.bf16.mxu0 0
        %456 = vmatpush1.bf16.msra.mxu0 %v446
        %457 = vmatprep.subr.bf16.mxu0 0
        %458 = vmatpush1.bf16.msra.mxu0 0
        %459 = vmatprep.subr.bf16.mxu0 0
        %460 = vmatpush1.bf16.msra.mxu0 0
        %461 = vmatprep.subr.bf16.mxu0 0
        %462 = vmatpush1.bf16.msra.mxu0 0
        %463 = vmatprep.subr.bf16.mxu0 0
        %464 = vmatpush1.bf16.msra.mxu0 0
        %465 = vmatprep.subr.bf16.mxu0 0
        %466 = vmatpush1.bf16.msra.mxu0 0
        %467 = vmatprep.subr.bf16.mxu0 0
        %468 = vmatpush1.bf16.msra.mxu0 0
        %469 = vmatprep.subr.bf16.mxu0 0
        %470 = vmatpush1.bf16.msra.mxu0 0
        %471 = vmatprep.subr.bf16.mxu0 0
        %472 = vmatpush1.bf16.msra.mxu0 0
        %473 = vmatprep.subr.bf16.mxu0 0
        %474 = vmatpush1.bf16.msra.mxu0 0
        %475 = vmatprep.subr.bf16.mxu0 0
        %476 = vmatpush1.bf16.msra.mxu0 0
        %477 = vmatprep.subr.bf16.mxu0 0
        %478 = vmatpush1.bf16.msra.mxu0 0
        %479 = vmatprep.subr.bf16.mxu0 0
        %480 = vmatpush1.bf16.msra.mxu0 0
        %481 = vmatprep.subr.bf16.mxu0 0
        %482 = vmatpush1.bf16.msra.mxu0 0
        %483 = vmatprep.subr.bf16.mxu0 0
        %484 = vmatpush1.bf16.msra.mxu0 0
        %485 = vmatprep.subr.bf16.mxu0 0
        %486 = vmatpush1.bf16.msra.mxu0 0
        %487 = vmatprep.mubr.bf16.mxu0 0
        %488 = vmatmul.mubr.bf16.gmra.mrb[0].mxu0 %v450
        %v489 = vpop.f32.mrb[0].mxu0
        %v490 = vadd.f32 0.0, %v489
        %v491 = vpop.f32.mrb[0].mxu0
        %v492 = vpop.f32.mrb[0].mxu0
        %v493 = vadd.f32 0.0, %v492
        %v494 = vpop.f32.mrb[0].mxu0
        %495 = vmatprep.mubr.bf16.mxu0 0
        %496 = vmatmul.mubr.bf16.gmra.mrb[0].mxu0 %v453
        %v497 = vpop.f32.mrb[0].mxu0
        %v498 = vadd.f32 0.0, %v497
        %v499 = vpop.f32.mrb[0].mxu0
        %v500 = vpop.f32.mrb[0].mxu0
        %v501 = vadd.f32 0.0, %v500
        %v502 = vpop.f32.mrb[0].mxu0
        %503 = vdwg.mxu0
        %v508 = vunpack.c.l.b16 %v417
        %v509 = vunpack.c.l.b16 %v418
        %v510 = vunpack.c.l.b16 %v419
        %v511 = vunpack.c.l.b16 %v420
        %v512 = vpack.c.b16 %v509, %v508
        %v513 = vpack.c.b16 %v511, %v510
        %v515 = vsel %vm448, %v512, 0
        %v518 = vsel %vm448, %v513, 0
        %520 = vmatprep.subr.bf16.mxu0 0
        %521 = vmatpush1.bf16.msra.mxu0 %v421
        %522 = vmatprep.subr.bf16.mxu0 0
        %523 = vmatpush1.bf16.msra.mxu0 0
        %524 = vmatprep.subr.bf16.mxu0 0
        %525 = vmatpush1.bf16.msra.mxu0 0
        %526 = vmatprep.subr.bf16.mxu0 0
        %527 = vmatpush1.bf16.msra.mxu0 0
        %528 = vmatprep.subr.bf16.mxu0 0
        %529 = vmatpush1.bf16.msra.mxu0 0
        %530 = vmatprep.subr.bf16.mxu0 0
        %531 = vmatpush1.bf16.msra.mxu0 0
        %532 = vmatprep.subr.bf16.mxu0 0
        %533 = vmatpush1.bf16.msra.mxu0 0
        %534 = vmatprep.subr.bf16.mxu0 0
        %535 = vmatpush1.bf16.msra.mxu0 0
        %536 = vmatprep.subr.bf16.mxu0 0
        %537 = vmatpush1.bf16.msra.mxu0 0
        %538 = vmatprep.subr.bf16.mxu0 0
        %539 = vmatpush1.bf16.msra.mxu0 0
        %540 = vmatprep.subr.bf16.mxu0 0
        %541 = vmatpush1.bf16.msra.mxu0 0
        %542 = vmatprep.subr.bf16.mxu0 0
        %543 = vmatpush1.bf16.msra.mxu0 0
        %544 = vmatprep.subr.bf16.mxu0 0
        %545 = vmatpush1.bf16.msra.mxu0 0
        %546 = vmatprep.subr.bf16.mxu0 0
        %547 = vmatpush1.bf16.msra.mxu0 0
        %548 = vmatprep.subr.bf16.mxu0 0
        %549 = vmatpush1.bf16.msra.mxu0 0
        %550 = vmatprep.subr.bf16.mxu0 0
        %551 = vmatpush1.bf16.msra.mxu0 0
        %552 = vmatprep.mubr.bf16.mxu0 0
        %553 = vmatmul.mubr.bf16.gmra.mrb[0].mxu0 %v515
        %v554 = vpop.f32.mrb[0].mxu0
        %v555 = vadd.f32 %v490, %v554
        %v556 = vpop.f32.mrb[0].mxu0
        %v557 = vpop.f32.mrb[0].mxu0
        %v558 = vadd.f32 %v493, %v557
        %v559 = vpop.f32.mrb[0].mxu0
        %560 = vmatprep.mubr.bf16.mxu0 0
        %561 = vmatmul.mubr.bf16.gmra.mrb[0].mxu0 %v518
        %v562 = vpop.f32.mrb[0].mxu0
        %v563 = vadd.f32 %v498, %v562
        %v564 = vpop.f32.mrb[0].mxu0
        %v565 = vpop.f32.mrb[0].mxu0
        %v566 = vadd.f32 %v501, %v565
        %v567 = vpop.f32.mrb[0].mxu0
        %568 = vdwg.mxu0
        %s569 = scalar_lea.vmem %s378, 32
        %v570 = vld [vmem:[%s569] sm:$0xf]
        %v571 = vld [vmem:[%s569 + $0x4] sm:$0xf]
        %v572 = vld [vmem:[%s569 + $0x8] sm:$0xf]
        %v573 = vld [vmem:[%s569 + $0xc] sm:$0xf]
        %v578 = vunpack.c.l.b16 %v570
        %v579 = vunpack.c.l.b16 %v571
        %v580 = vunpack.c.l.b16 %v572
        %v581 = vunpack.c.l.b16 %v573
        %v582 = vpack.c.b16 %v579, %v578
        %v583 = vpack.c.b16 %v581, %v580
        %584 = vrot.lane.b32.xlu0 %v427, 126
        %v585 = vpop.permute.xlu0 %584
        %586 = vrot.lane.b32.xlu0 %v428, 126
        %v587 = vpop.permute.xlu0 %586
        %vm588 = vcmask 1031168
        %v589 = vsel %vm588, %v585, %v587
        %v592 = vsel %vm448, %v582, 0
        %v595 = vsel %vm448, %v583, 0
        %597 = vmatprep.subr.bf16.mxu0 0
        %598 = vmatpush1.bf16.msra.mxu0 %v589
        %599 = vmatprep.subr.bf16.mxu0 0
        %600 = vmatpush1.bf16.msra.mxu0 0
        %601 = vmatprep.subr.bf16.mxu0 0
        %602 = vmatpush1.bf16.msra.mxu0 0
        %603 = vmatprep.subr.bf16.mxu0 0
        %604 = vmatpush1.bf16.msra.mxu0 0
        %605 = vmatprep.subr.bf16.mxu0 0
        %606 = vmatpush1.bf16.msra.mxu0 0
        %607 = vmatprep.subr.bf16.mxu0 0
        %608 = vmatpush1.bf16.msra.mxu0 0
        %609 = vmatprep.subr.bf16.mxu0 0
        %610 = vmatpush1.bf16.msra.mxu0 0
        %611 = vmatprep.subr.bf16.mxu0 0
        %612 = vmatpush1.bf16.msra.mxu0 0
        %613 = vmatprep.subr.bf16.mxu0 0
        %614 = vmatpush1.bf16.msra.mxu0 0
        %615 = vmatprep.subr.bf16.mxu0 0
        %616 = vmatpush1.bf16.msra.mxu0 0
        %617 = vmatprep.subr.bf16.mxu0 0
        %618 = vmatpush1.bf16.msra.mxu0 0
        %619 = vmatprep.subr.bf16.mxu0 0
        %620 = vmatpush1.bf16.msra.mxu0 0
        %621 = vmatprep.subr.bf16.mxu0 0
        %622 = vmatpush1.bf16.msra.mxu0 0
        %623 = vmatprep.subr.bf16.mxu0 0
        %624 = vmatpush1.bf16.msra.mxu0 0
        %625 = vmatprep.subr.bf16.mxu0 0
        %626 = vmatpush1.bf16.msra.mxu0 0
        %627 = vmatprep.subr.bf16.mxu0 0
        %628 = vmatpush1.bf16.msra.mxu0 0
        %629 = vmatprep.mubr.bf16.mxu0 0
        %630 = vmatmul.mubr.bf16.gmra.mrb[0].mxu0 %v592
        %v631 = vpop.f32.mrb[0].mxu0
        %v632 = vadd.f32 0.0, %v631
        %v633 = vpop.f32.mrb[0].mxu0
        %v634 = vpop.f32.mrb[0].mxu0
        %v635 = vadd.f32 0.0, %v634
        %v636 = vpop.f32.mrb[0].mxu0
        %637 = vmatprep.mubr.bf16.mxu0 0
        %638 = vmatmul.mubr.bf16.gmra.mrb[0].mxu0 %v595
        %v639 = vpop.f32.mrb[0].mxu0
        %v640 = vadd.f32 0.0, %v639
        %v641 = vpop.f32.mrb[0].mxu0
        %v642 = vpop.f32.mrb[0].mxu0
        %v643 = vadd.f32 0.0, %v642
        %v644 = vpop.f32.mrb[0].mxu0
        %645 = vdwg.mxu0
        %v646 = vadd.f32 %v555, %v632
        %v647 = vadd.f32 %v558, %v635
        %v648 = vadd.f32 %v563, %v640
        %v649 = vadd.f32 %v566, %v643
        %s650 = scalar_lea.vmem %s378, 48
        %v651 = vld [vmem:[%s650] sm:$0xf]
        %v652 = vld [vmem:[%s650 + $0x4] sm:$0xf]
        %v653 = vld [vmem:[%s650 + $0x8] sm:$0xf]
        %v654 = vld [vmem:[%s650 + $0xc] sm:$0xf]
        %v659 = vunpack.c.l.b16 %v651
        %v660 = vunpack.c.l.b16 %v652
        %v661 = vunpack.c.l.b16 %v653
        %v662 = vunpack.c.l.b16 %v654
        %v663 = vpack.c.b16 %v660, %v659
        %v664 = vpack.c.b16 %v662, %v661
        %665 = vrot.lane.b32.xlu0 %v427, 125
        %v666 = vpop.permute.xlu0 %665
        %667 = vrot.lane.b32.xlu0 %v428, 125
        %v668 = vpop.permute.xlu0 %667
        %vm669 = vcmask 1022976
        %v670 = vsel %vm669, %v666, %v668
        %v673 = vsel %vm448, %v663, 0
        %v676 = vsel %vm448, %v664, 0
        %678 = vmatprep.subr.bf16.mxu0 0
        %679 = vmatpush1.bf16.msra.mxu0 %v670
        %680 = vmatprep.subr.bf16.mxu0 0
        %681 = vmatpush1.bf16.msra.mxu0 0
        %682 = vmatprep.subr.bf16.mxu0 0
        %683 = vmatpush1.bf16.msra.mxu0 0
        %684 = vmatprep.subr.bf16.mxu0 0
        %685 = vmatpush1.bf16.msra.mxu0 0
        %686 = vmatprep.subr.bf16.mxu0 0
        %687 = vmatpush1.bf16.msra.mxu0 0
        %688 = vmatprep.subr.bf16.mxu0 0
        %689 = vmatpush1.bf16.msra.mxu0 0
        %690 = vmatprep.subr.bf16.mxu0 0
        %691 = vmatpush1.bf16.msra.mxu0 0
        %692 = vmatprep.subr.bf16.mxu0 0
        %693 = vmatpush1.bf16.msra.mxu0 0
        %694 = vmatprep.subr.bf16.mxu0 0
        %695 = vmatpush1.bf16.msra.mxu0 0
        %696 = vmatprep.subr.bf16.mxu0 0
        %697 = vmatpush1.bf16.msra.mxu0 0
        %698 = vmatprep.subr.bf16.mxu0 0
        %699 = vmatpush1.bf16.msra.mxu0 0
        %700 = vmatprep.subr.bf16.mxu0 0
        %701 = vmatpush1.bf16.msra.mxu0 0
        %702 = vmatprep.subr.bf16.mxu0 0
        %703 = vmatpush1.bf16.msra.mxu0 0
        %704 = vmatprep.subr.bf16.mxu0 0
        %705 = vmatpush1.bf16.msra.mxu0 0
        %706 = vmatprep.subr.bf16.mxu0 0
        %707 = vmatpush1.bf16.msra.mxu0 0
        %708 = vmatprep.subr.bf16.mxu0 0
        %709 = vmatpush1.bf16.msra.mxu0 0
        %710 = vmatprep.mubr.bf16.mxu0 0
        %711 = vmatmul.mubr.bf16.gmra.mrb[0].mxu0 %v673
        %v712 = vpop.f32.mrb[0].mxu0
        %v713 = vadd.f32 0.0, %v712
        %v714 = vpop.f32.mrb[0].mxu0
        %v715 = vpop.f32.mrb[0].mxu0
        %v716 = vadd.f32 0.0, %v715
        %v717 = vpop.f32.mrb[0].mxu0
        %718 = vmatprep.mubr.bf16.mxu0 0
        %719 = vmatmul.mubr.bf16.gmra.mrb[0].mxu0 %v676
        %v720 = vpop.f32.mrb[0].mxu0
        %v721 = vadd.f32 0.0, %v720
        %v722 = vpop.f32.mrb[0].mxu0
        %v723 = vpop.f32.mrb[0].mxu0
        %v724 = vadd.f32 0.0, %v723
        %v725 = vpop.f32.mrb[0].mxu0
        %726 = vdwg.mxu0
        %v727 = vadd.f32 %v646, %v713
        %v728 = vadd.f32 %v647, %v716
        %v729 = vadd.f32 %v648, %v721
        %v730 = vadd.f32 %v649, %v724
        %s731 = scalar_lea.vmem %s378, 64
        %v732 = vld [vmem:[%s731] sm:$0xf]
        %v733 = vld [vmem:[%s731 + $0x4] sm:$0xf]
        %v734 = vld [vmem:[%s731 + $0x8] sm:$0xf]
        %v735 = vld [vmem:[%s731 + $0xc] sm:$0xf]
        %v740 = vunpack.c.l.b16 %v732
        %v741 = vunpack.c.l.b16 %v733
        %v742 = vunpack.c.l.b16 %v734
        %v743 = vunpack.c.l.b16 %v735
        %v744 = vpack.c.b16 %v741, %v740
        %v745 = vpack.c.b16 %v743, %v742
        %746 = vrot.lane.b32.xlu0 %v427, 124
        %v747 = vpop.permute.xlu0 %746
        %748 = vrot.lane.b32.xlu0 %v428, 124
        %v749 = vpop.permute.xlu0 %748
        %vm750 = vcmask 1014784
        %v751 = vsel %vm750, %v747, %v749
        %v754 = vsel %vm448, %v744, 0
        %v757 = vsel %vm448, %v745, 0
        %759 = vmatprep.subr.bf16.mxu0 0
        %760 = vmatpush1.bf16.msra.mxu0 %v751
        %761 = vmatprep.subr.bf16.mxu0 0
        %762 = vmatpush1.bf16.msra.mxu0 0
        %763 = vmatprep.subr.bf16.mxu0 0
        %764 = vmatpush1.bf16.msra.mxu0 0
        %765 = vmatprep.subr.bf16.mxu0 0
        %766 = vmatpush1.bf16.msra.mxu0 0
        %767 = vmatprep.subr.bf16.mxu0 0
        %768 = vmatpush1.bf16.msra.mxu0 0
        %769 = vmatprep.subr.bf16.mxu0 0
        %770 = vmatpush1.bf16.msra.mxu0 0
        %771 = vmatprep.subr.bf16.mxu0 0
        %772 = vmatpush1.bf16.msra.mxu0 0
        %773 = vmatprep.subr.bf16.mxu0 0
        %774 = vmatpush1.bf16.msra.mxu0 0
        %775 = vmatprep.subr.bf16.mxu0 0
        %776 = vmatpush1.bf16.msra.mxu0 0
        %777 = vmatprep.subr.bf16.mxu0 0
        %778 = vmatpush1.bf16.msra.mxu0 0
        %779 = vmatprep.subr.bf16.mxu0 0
        %780 = vmatpush1.bf16.msra.mxu0 0
        %781 = vmatprep.subr.bf16.mxu0 0
        %782 = vmatpush1.bf16.msra.mxu0 0
        %783 = vmatprep.subr.bf16.mxu0 0
        %784 = vmatpush1.bf16.msra.mxu0 0
        %785 = vmatprep.subr.bf16.mxu0 0
        %786 = vmatpush1.bf16.msra.mxu0 0
        %787 = vmatprep.subr.bf16.mxu0 0
        %788 = vmatpush1.bf16.msra.mxu0 0
        %789 = vmatprep.subr.bf16.mxu0 0
        %790 = vmatpush1.bf16.msra.mxu0 0
        %791 = vmatprep.mubr.bf16.mxu0 0
        %792 = vmatmul.mubr.bf16.gmra.mrb[0].mxu0 %v754
        %v793 = vpop.f32.mrb[0].mxu0
        %v794 = vadd.f32 0.0, %v793
        %v795 = vpop.f32.mrb[0].mxu0
        %v796 = vpop.f32.mrb[0].mxu0
        %v797 = vadd.f32 0.0, %v796
        %v798 = vpop.f32.mrb[0].mxu0
        %799 = vmatprep.mubr.bf16.mxu0 0
        %800 = vmatmul.mubr.bf16.gmra.mrb[0].mxu0 %v757
        %v801 = vpop.f32.mrb[0].mxu0
        %v802 = vadd.f32 0.0, %v801
        %v803 = vpop.f32.mrb[0].mxu0
        %v804 = vpop.f32.mrb[0].mxu0
        %v805 = vadd.f32 0.0, %v804
        %v806 = vpop.f32.mrb[0].mxu0
        %807 = vdwg.mxu0
        %v808 = vadd.f32 %v727, %v794
        %v809 = vadd.f32 %v728, %v797
        %v810 = vadd.f32 %v729, %v802
        %v811 = vadd.f32 %v730, %v805
        %v812 = vld [vmem:[%s383] sm:$0xff]
        %v813 = vld [vmem:[%s383 + $0x8] sm:$0xff]
        %v814 = vld [vmem:[%s383 + $0x10] sm:$0xff]
        %v815 = vld [vmem:[%s383 + $0x18] sm:$0xff]
        %817 = vset.pattern.permute.xlu0 0
        %818 = vperm.xlu0 %817, %v812
        %v819 = vpop.permute.xlu0 %818
        %822 = vset.pattern.permute.xlu0 0
        %823 = vperm.xlu0 %822, %v813
        %v824 = vpop.permute.xlu0 %823
        %827 = vset.pattern.permute.xlu0 0
        %828 = vperm.xlu0 %827, %v814
        %v829 = vpop.permute.xlu0 %828
        %832 = vset.pattern.permute.xlu0 0
        %833 = vperm.xlu0 %832, %v815
        %v834 = vpop.permute.xlu0 %833
        %v836 = vadd.f32 %v808, %v819
        %v837 = vadd.f32 %v809, %v824
        %v838 = vadd.f32 %v810, %v829
        %v839 = vadd.f32 %v811, %v834
        %vm840 = vcmp.ge.f32.partialorder %v836, 0.0
        %vm841 = vcmp.ge.f32.partialorder %v837, 0.0
        %vm842 = vcmp.ge.f32.partialorder %v838, 0.0
        %vm843 = vcmp.ge.f32.partialorder %v839, 0.0
        %v844 = vmul.f32 %v836, 0.2
        %v845 = vmul.f32 %v837, 0.2
        %v846 = vmul.f32 %v838, 0.2
        %v847 = vmul.f32 %v839, 0.2
        %v848 = vsel %vm840, %v836, %v844
        %v849 = vsel %vm841, %v837, %v845
        %v850 = vsel %vm842, %v838, %v846
        %v851 = vsel %vm843, %v839, %v847
        %v852 = vpack.c.bf16 %v849, %v848
        %v853 = vpack.c.bf16 %v851, %v850
        %v856 = vunpack.c.l.b16 %v852
        %v857 = vunpack.c.h.b16 %v852
        %v858 = vunpack.c.l.b16 %v853
        %v859 = vunpack.c.h.b16 %v853
        %v860 = vpack.c.b16 %v856, %v856
        %v861 = vpack.c.b16 %v857, %v857
        %v862 = vpack.c.b16 %v858, %v858
        %v863 = vpack.c.b16 %v859, %v859
        %868 = vst [vmem:[%s396] sm:$0xf] %v860
        %869 = vst [vmem:[%s396 + $0x4] sm:$0xf] %v861
        %870 = vst [vmem:[%s396 + $0x8] sm:$0xf] %v862
        %871 = vst [vmem:[%s396 + $0xc] sm:$0xf] %v863
        %s872 = smul.u32 4, %s20
        %p873 = scmp.lt.s32.totalorder %s21, 1
        %s874 = scalar_select %p873, %s21, 1
        %p875 = scmp.lt.s32.totalorder %s872, 3
        %s876 = scalar_select %p875, %s872, 3
        %p877 = scmp.lt.s32.totalorder %s22, 0
        %s878 = scalar_select %p877, %s22, 0
        %s879 = sadd.s32 %s878, %s876
        %s880 = smul.addr %s874, 4
        %s881 = sadd.s32 %s879, %s880
        %s882 = smul.addr %s881, 4
        %s883 = scalar_lea.vmem %s4, %s882
        // Predicated region
        $region119: #{audio_discriminator_forward.20} parent=109 // pred_check
          %p884 = pneg %p166
        $region120: #{audio_discriminator_forward.20} parent=109 // pred_check_branch
          %886 = sbr.rel (%p884) target = $region122
        $region121: #{audio_discriminator_forward.20} parent=109 // pred_region
          %s887 = smul.u32 4, %s20
        $region122: #{audio_discriminator_forward.20} parent=109 // pred_fallthru
          _
      $region110: #{audio_discriminator_forward.20} parent=5 // pred_fallthru
        _
      %p888 = scmp.le.s32.totalorder 2, %s10
      // Predicated region
      $region123: #{audio_discriminator_forward.20} parent=5 // pred_check
        %p889 = pneg %p888
      $region124: #{audio_discriminator_forward.20} parent=5 // pred_check_branch
        %891 = sbr.rel (%p889) target = $region126
      $region125: #{audio_discriminator_forward.20} parent=5 // pred_region
        %s892 = ssub.s32 %s10, 2
        // Predicated region
        $region127: #{audio_discriminator_forward.20} parent=125 // pred_check
          %p893 = pneg %p172
        $region128: #{audio_discriminator_forward.20} parent=125 // pred_check_branch
          %895 = sbr.rel (%p893) target = $region130
        $region129: #{audio_discriminator_forward.20} parent=125 // pred_region
          %s896 = smul.u32 4, %s23
          %p897 = scmp.lt.s32.totalorder %s24, 1
          %s898 = scalar_select %p897, %s24, 1
          %p899 = scmp.lt.s32.totalorder %s896, 3
          %s900 = scalar_select %p899, %s896, 3
          %p901 = scmp.lt.s32.totalorder %s25, 0
          %s902 = scalar_select %p901, %s25, 0
          %s903 = sadd.s32 %s902, %s900
          %s904 = smul.addr %s898, 4
          %s905 = sadd.s32 %s903, %s904
          %s906 = smul.addr %s905, 4
          %s907 = scalar_lea.vmem %s4, %s906
        $region130: #{audio_discriminator_forward.20} parent=125 // pred_fallthru
          _
      $region126: #{audio_discriminator_forward.20} parent=5 // pred_fallthru
        _
    $region6: #{audio_discriminator_forward.20} parent=1 // loop_footer
      %s14 = sadd.s32 1, %s10
    $region7: #{audio_discriminator_forward.20} parent=1 // loop_footer_branch
      %9 = sbr.rel target = $region3
    $region8: #{audio_discriminator_forward.20} parent=1 // loop_exit
      _

</llo_original>
